<compile_context>
chip_gen: v7x
topology: tpu7x:2x2x1
jax: 0.10.0
libtpu: 0.0.40
codegen_flags: <defaults>
</compile_context>

<pallas_src>
import jax
import jax.numpy as jnp
from jax.experimental import pallas as pl
from jax.experimental.pallas import tpu as pltpu

HDIM = 400
NEG_SLOPE = 0.01  # torch.nn.functional.leaky_relu default


def _round_up(x, m):
    return ((x + m - 1) // m) * m


H_PAD = _round_up(HDIM, 128)  # 512


def qnet_kernel(s_ref, a_ref, t_ref,
                w1s_ref, w1a_ref, w1t_ref, b1_ref,
                w2_ref, b2_ref, w3_ref, b3_ref, o_ref):
    """One batch tile of the 3-layer MLP. Weights are VMEM-resident (constant
    index_map); matmul inputs bf16, accumulation f32, activations f32."""
    s = s_ref[...]
    a = a_ref[...]
    t = t_ref[...]

    # Layer 1: x @ W1 + b1, with the (target - state) diff folded into W1s.
    h = jnp.dot(s.astype(jnp.bfloat16), w1s_ref[...],
                preferred_element_type=jnp.float32)
    h += jnp.dot(a.astype(jnp.bfloat16), w1a_ref[...],
                 preferred_element_type=jnp.float32)
    h += jnp.dot(t.astype(jnp.bfloat16), w1t_ref[...],
                 preferred_element_type=jnp.float32)
    h += b1_ref[...]
    h = jnp.maximum(h, NEG_SLOPE * h)  # leaky_relu

    # Layer 2.
    h = jnp.dot(h.astype(jnp.bfloat16), w2_ref[...],
                preferred_element_type=jnp.float32) + b2_ref[...]
    h = jnp.maximum(h, NEG_SLOPE * h)  # leaky_relu

    # Layer 3: (h @ w3 + b3) / 10 as VPU multiply + XLU lane reduction.
    # w3_ref is a (1, H_PAD) row and b3_ref[0] a scalar, both prescaled by 0.1.
    o_ref[...] = jnp.sum(h * w3_ref[...], axis=-1, keepdims=True) + b3_ref[0]


def prepare_params(params, state_dim, action_dim):
    """One-time prep: split W1 (folding the state-difference into the state
    block), pad the hidden dim to a lane multiple, cast matmul weights to bf16,
    and fold the final '/10' into w3/b3."""
    w1, b1, w2, b2, w3, b3 = params
    assert w1.shape == (2 * state_dim + action_dim, HDIM)

    w1_s = w1[:state_dim]
    w1_a = w1[state_dim:state_dim + action_dim]
    w1_d = w1[state_dim + action_dim:]
    w1_s_eff = w1_s - w1_d  # fold "target - state" into the state weights

    def pad_cols_bf16(w):
        out = jnp.zeros((w.shape[0], H_PAD), jnp.bfloat16)
        return out.at[:, :HDIM].set(w.astype(jnp.bfloat16))

    def pad_row_f32(v):
        return jnp.zeros((1, H_PAD), jnp.float32).at[:, :HDIM].set(
            v.reshape(1, -1).astype(jnp.float32))

    w1s_p = pad_cols_bf16(w1_s_eff)
    w1a_p = pad_cols_bf16(w1_a)
    w1t_p = pad_cols_bf16(w1_d)
    b1_p = pad_row_f32(b1)
    w2_p = jnp.zeros((H_PAD, H_PAD), jnp.bfloat16).at[:HDIM, :HDIM].set(
        w2.astype(jnp.bfloat16))
    b2_p = pad_row_f32(b2)
    w3_row = pad_row_f32(w3[:, 0] * 0.1)    # prescaled by 0.1 (the "/ 10")
    b3_s = (b3 * 0.1).astype(jnp.float32)   # (1,), prescaled by 0.1
    return (w1s_p, w1a_p, w1t_p, b1_p, w2_p, b2_p, w3_row, b3_s)


@jax.jit
def qnetwork_forward(states, actions, target_states, prepped):
    w1s, w1a, w1t, b1, w2, b2, w3row, b3 = prepped
    B, state_dim = states.shape
    action_dim = actions.shape[1]

    # Batch tiling: 128-row tiles give >=2 grid steps (megacore) at moderate
    # batches; 256-row tiles fill the MXU on huge batches; small batches get
    # one 8-row-aligned tile.
    if B >= 1024:
        tile_b = 256
    elif B >= 128:
        tile_b = 128
    else:
        tile_b = _round_up(max(B, 8), 8)
    Bp = _round_up(B, tile_b)
    grid = (Bp // tile_b,)

    def pad_batch(x):
        x = x.astype(jnp.float32)
        if Bp == B:
            return x
        return jnp.zeros((Bp, x.shape[1]), jnp.float32).at[:B].set(x)

    sp = pad_batch(states)
    ap = pad_batch(actions)
    tp = pad_batch(target_states)

    def batch_spec(d):
        return pl.BlockSpec((tile_b, d), lambda i: (i, 0))

    def const_spec(r, c):
        return pl.BlockSpec((r, c), lambda i: (0, 0))

    out = pl.pallas_call(
        qnet_kernel,
        out_shape=jax.ShapeDtypeStruct((Bp, 1), jnp.float32),
        grid=grid,
        in_specs=[
            batch_spec(state_dim),           # states
            batch_spec(action_dim),          # actions
            batch_spec(state_dim),           # target_states
            const_spec(state_dim, H_PAD),    # W1s - W1d              (bf16)
            const_spec(action_dim, H_PAD),   # W1a                    (bf16)
            const_spec(state_dim, H_PAD),    # W1d                    (bf16)
            const_spec(1, H_PAD),            # b1                     (f32)
            const_spec(H_PAD, H_PAD),        # W2                     (bf16)
            const_spec(1, H_PAD),            # b2                     (f32)
            const_spec(1, H_PAD),            # w3 row, prescaled      (f32)
            pl.BlockSpec(memory_space=pltpu.MemorySpace.SMEM),  # b3 scalar
        ],
        out_specs=pl.BlockSpec((tile_b, 1), lambda i: (i, 0)),
        compiler_params=pltpu.CompilerParams(
            dimension_semantics=("parallel",),
        ),
    )(sp, ap, tp, w1s, w1a, w1t, b1, w2, b2, w3row, b3)

    return out[:B]


def init_params(key, state_dim, action_dim):
    """Deterministic synthetic parameters, mirroring the PyTorch shapes/init."""
    in_dim = 2 * state_dim + action_dim
    k1, k2, k3, k4, k5 = jax.random.split(key, 5)

    def linear_init(kw, kb, fan_in, fan_out):
        bound = 1.0 / jnp.sqrt(fan_in)
        w = jax.random.uniform(kw, (fan_in, fan_out), jnp.float32, -bound, bound)
        b = jax.random.uniform(kb, (fan_out,), jnp.float32, -bound, bound)
        return w, b

    w1, b1 = linear_init(k1, k2, in_dim, HDIM)
    w2, b2 = linear_init(k3, k4, HDIM, HDIM)
    # _v_out: weight ~ N(0, 0.01), bias = -1
    w3 = 0.01 * jax.random.normal(k5, (HDIM, 1), jnp.float32)
    b3 = jnp.full((1,), -1.0, jnp.float32)
    return (w1, b1, w2, b2, w3, b3)


def reference_forward(states, actions, target_states, params):
    """Pure-JAX f32 reference matching the PyTorch module."""
    w1, b1, w2, b2, w3, b3 = params
    x = jnp.concatenate([states, actions, target_states - states], axis=1)
    h = x @ w1 + b1
    h = jnp.where(h > 0, h, NEG_SLOPE * h)
    h = h @ w2 + b2
    h = jnp.where(h > 0, h, NEG_SLOPE * h)
    return (h @ w3 + b3) / 10.0


def reference_forward_matched(states, actions, target_states, prepped):
    """Pure-JAX reference using the same bf16/prescaled params as the kernel."""
    w1s, w1a, w1t, b1, w2, b2, w3row, b3 = prepped
    s = states.astype(jnp.float32)
    a = actions.astype(jnp.float32)
    t = target_states.astype(jnp.float32)
    h = (jnp.dot(s.astype(jnp.bfloat16), w1s, preferred_element_type=jnp.float32)
         + jnp.dot(a.astype(jnp.bfloat16), w1a, preferred_element_type=jnp.float32)
         + jnp.dot(t.astype(jnp.bfloat16), w1t, preferred_element_type=jnp.float32)
         + b1)
    h = jnp.maximum(h, NEG_SLOPE * h)
    h = jnp.dot(h.astype(jnp.bfloat16), w2, preferred_element_type=jnp.float32) + b2
    h = jnp.maximum(h, NEG_SLOPE * h)
    return jnp.sum(h * w3row, axis=-1, keepdims=True) + b3[0]


if __name__ == "__main__":
    # HalfCheetah-ish dims; small batch that still exercises multi-tile grid
    # (tile_b=128 -> 2 grid steps) and the batch-pad path (200 -> 256).
    state_dim, action_dim, batch = 17, 6, 200

    key = jax.random.PRNGKey(0)
    kp, ks, ka, kt = jax.random.split(key, 4)

    params = init_params(kp, state_dim, action_dim)
    prepped = prepare_params(params, state_dim, action_dim)  # one-time prep

    states = jax.random.normal(ks, (batch, state_dim), jnp.float32)
    actions = jax.random.normal(ka, (batch, action_dim), jnp.float32)
    target_states = jax.random.normal(kt, (batch, state_dim), jnp.float32)

    out = qnetwork_forward(states, actions, target_states, prepped)
    out = jax.block_until_ready(out)
    assert out.shape == (batch, 1)

    # Tight check vs a pure-JAX reference using identical (bf16) params.
    ref_m = reference_forward_matched(states, actions, target_states, prepped)
    assert jnp.allclose(out, ref_m, atol=5e-4, rtol=5e-4), "mismatch vs matched ref"

    # Semantic check vs the full-f32 PyTorch-equivalent reference (bf16 weights
    # only introduce ~1e-3-level differences after the final /10).
    ref = reference_forward(states, actions, target_states, params)
    assert jnp.allclose(out, ref, atol=5e-3, rtol=5e-3), "mismatch vs f32 reference"

    print("KERNEL_OK")
</pallas_src>

<mosaic_0001>
module attributes {stable_mosaic.version = 11 : i64} {
  func.func @qnet_kernel(%arg0: i32, %arg1: memref<128x17xf32, #tpu.memory_space<vmem>>, %arg2: memref<128x6xf32, #tpu.memory_space<vmem>>, %arg3: memref<128x17xf32, #tpu.memory_space<vmem>>, %arg4: memref<17x512xbf16, #tpu.memory_space<vmem>>, %arg5: memref<6x512xbf16, #tpu.memory_space<vmem>>, %arg6: memref<17x512xbf16, #tpu.memory_space<vmem>>, %arg7: memref<1x512xf32, #tpu.memory_space<vmem>>, %arg8: memref<512x512xbf16, #tpu.memory_space<vmem>>, %arg9: memref<1x512xf32, #tpu.memory_space<vmem>>, %arg10: memref<1x512xf32, #tpu.memory_space<vmem>>, %arg11: memref<1xf32, #tpu.memory_space<smem>>, %arg12: memref<128x1xf32, #tpu.memory_space<vmem>>) attributes {dimension_semantics = [#tpu.dimension_semantics<parallel>], iteration_bounds = array<i64: 2>, scalar_prefetch = 0 : i64, scratch_operands = 0 : i64, tpu.core_type = #tpu.core_type<tc>, window_params = [{transform_indices = @transform_0, window_bounds = array<i64: 128, 17>}, {transform_indices = @transform_1, window_bounds = array<i64: 128, 6>}, {transform_indices = @transform_2, window_bounds = array<i64: 128, 17>}, {pipeline_mode = #tpu.pipeline_mode<synchronous>, transform_indices = @transform_3, window_bounds = array<i64: 17, 512>}, {pipeline_mode = #tpu.pipeline_mode<synchronous>, transform_indices = @transform_4, window_bounds = array<i64: 6, 512>}, {pipeline_mode = #tpu.pipeline_mode<synchronous>, transform_indices = @transform_5, window_bounds = array<i64: 17, 512>}, {pipeline_mode = #tpu.pipeline_mode<synchronous>, transform_indices = @transform_6, window_bounds = array<i64: 1, 512>}, {pipeline_mode = #tpu.pipeline_mode<synchronous>, transform_indices = @transform_7, window_bounds = array<i64: 512, 512>}, {pipeline_mode = #tpu.pipeline_mode<synchronous>, transform_indices = @transform_8, window_bounds = array<i64: 1, 512>}, {pipeline_mode = #tpu.pipeline_mode<synchronous>, transform_indices = @transform_9, window_bounds = array<i64: 1, 512>}, {transform_indices = @transform_10, window_bounds = array<i64: 1>}, {transform_indices = @transform_11, window_bounds = array<i64: 128, 1>}]} {
    %c0 = arith.constant 0 : index
    %c0_0 = arith.constant 0 : index
    %0 = vector.load %arg1[%c0, %c0_0] : memref<128x17xf32, #tpu.memory_space<vmem>>, vector<128x17xf32>
    %c0_1 = arith.constant 0 : index
    %c0_2 = arith.constant 0 : index
    %1 = vector.load %arg2[%c0_1, %c0_2] : memref<128x6xf32, #tpu.memory_space<vmem>>, vector<128x6xf32>
    %c0_3 = arith.constant 0 : index
    %c0_4 = arith.constant 0 : index
    %2 = vector.load %arg3[%c0_3, %c0_4] : memref<128x17xf32, #tpu.memory_space<vmem>>, vector<128x17xf32>
    %3 = arith.truncf %0 : vector<128x17xf32> to vector<128x17xbf16>
    %c0_5 = arith.constant 0 : index
    %c0_6 = arith.constant 0 : index
    %4 = vector.load %arg4[%c0_5, %c0_6] : memref<17x512xbf16, #tpu.memory_space<vmem>>, vector<17x512xbf16>
    %cst = arith.constant dense<0.000000e+00> : vector<128x512xf32>
    %5 = tpu.matmul %3, %4, %cst {dimension_numbers = #tpu.dot_dimension_numbers<[1], [0], [0], [1], [0, 0, 1, 1], [], []>} : vector<128x17xbf16>, vector<17x512xbf16>, vector<128x512xf32> -> vector<128x512xf32>
    %6 = arith.truncf %1 : vector<128x6xf32> to vector<128x6xbf16>
    %c0_7 = arith.constant 0 : index
    %c0_8 = arith.constant 0 : index
    %7 = vector.load %arg5[%c0_7, %c0_8] : memref<6x512xbf16, #tpu.memory_space<vmem>>, vector<6x512xbf16>
    %cst_9 = arith.constant dense<0.000000e+00> : vector<128x512xf32>
    %8 = tpu.matmul %6, %7, %cst_9 {dimension_numbers = #tpu.dot_dimension_numbers<[1], [0], [0], [1], [0, 0, 1, 1], [], []>} : vector<128x6xbf16>, vector<6x512xbf16>, vector<128x512xf32> -> vector<128x512xf32>
    %9 = arith.addf %5, %8 : vector<128x512xf32>
    %10 = arith.truncf %2 : vector<128x17xf32> to vector<128x17xbf16>
    %c0_10 = arith.constant 0 : index
    %c0_11 = arith.constant 0 : index
    %11 = vector.load %arg6[%c0_10, %c0_11] : memref<17x512xbf16, #tpu.memory_space<vmem>>, vector<17x512xbf16>
    %cst_12 = arith.constant dense<0.000000e+00> : vector<128x512xf32>
    %12 = tpu.matmul %10, %11, %cst_12 {dimension_numbers = #tpu.dot_dimension_numbers<[1], [0], [0], [1], [0, 0, 1, 1], [], []>} : vector<128x17xbf16>, vector<17x512xbf16>, vector<128x512xf32> -> vector<128x512xf32>
    %13 = arith.addf %9, %12 : vector<128x512xf32>
    %c0_13 = arith.constant 0 : index
    %c0_14 = arith.constant 0 : index
    %14 = vector.load %arg7[%c0_13, %c0_14] : memref<1x512xf32, #tpu.memory_space<vmem>>, vector<1x512xf32>
    %15 = vector.broadcast %14 : vector<1x512xf32> to vector<128x512xf32>
    %16 = arith.addf %13, %15 : vector<128x512xf32>
    %cst_15 = arith.constant 0.00999999977 : f32
    %17 = vector.broadcast %cst_15 : f32 to vector<128x512xf32>
    %18 = arith.mulf %17, %16 : vector<128x512xf32>
    %19 = arith.maximumf %16, %18 : vector<128x512xf32>
    %20 = arith.truncf %19 : vector<128x512xf32> to vector<128x512xbf16>
    %c0_16 = arith.constant 0 : index
    %c0_17 = arith.constant 0 : index
    %21 = vector.load %arg8[%c0_16, %c0_17] : memref<512x512xbf16, #tpu.memory_space<vmem>>, vector<512x512xbf16>
    %cst_18 = arith.constant dense<0.000000e+00> : vector<128x512xf32>
    %22 = tpu.matmul %20, %21, %cst_18 {dimension_numbers = #tpu.dot_dimension_numbers<[1], [0], [0], [1], [0, 0, 1, 1], [], []>} : vector<128x512xbf16>, vector<512x512xbf16>, vector<128x512xf32> -> vector<128x512xf32>
    %c0_19 = arith.constant 0 : index
    %c0_20 = arith.constant 0 : index
    %23 = vector.load %arg9[%c0_19, %c0_20] : memref<1x512xf32, #tpu.memory_space<vmem>>, vector<1x512xf32>
    %24 = vector.broadcast %23 : vector<1x512xf32> to vector<128x512xf32>
    %25 = arith.addf %22, %24 : vector<128x512xf32>
    %cst_21 = arith.constant 0.00999999977 : f32
    %26 = vector.broadcast %cst_21 : f32 to vector<128x512xf32>
    %27 = arith.mulf %26, %25 : vector<128x512xf32>
    %28 = arith.maximumf %25, %27 : vector<128x512xf32>
    %c0_22 = arith.constant 0 : index
    %c0_23 = arith.constant 0 : index
    %29 = vector.load %arg10[%c0_22, %c0_23] : memref<1x512xf32, #tpu.memory_space<vmem>>, vector<1x512xf32>
    %30 = vector.broadcast %29 : vector<1x512xf32> to vector<128x512xf32>
    %31 = arith.mulf %28, %30 : vector<128x512xf32>
    %cst_24 = arith.constant dense<0.000000e+00> : vector<128xf32>
    %32 = vector.multi_reduction <add>, %31, %cst_24 [1] : vector<128x512xf32> to vector<128xf32>
    %33 = vector.shape_cast %32 : vector<128xf32> to vector<128x1xf32>
    %c0_25 = arith.constant 0 : index
    %34 = memref.load %arg11[%c0_25] : memref<1xf32, #tpu.memory_space<smem>>
    %35 = vector.broadcast %34 : f32 to vector<128x1xf32>
    %36 = arith.addf %33, %35 : vector<128x1xf32>
    %c0_26 = arith.constant 0 : index
    %c0_27 = arith.constant 0 : index
    %37 = vector.load %arg12[%c0_26, %c0_27] : memref<128x1xf32, #tpu.memory_space<vmem>>, vector<128x1xf32>
    tpu.vector_store %arg12[%c0_26, %c0_27], %36 {strides = array<i32>} : memref<128x1xf32, #tpu.memory_space<vmem>>, vector<128x1xf32>,
    return
  }
  func.func @transform_0(%arg0: i32) -> (i32, i32) {
    %c0_i32 = arith.constant 0 : i32
    %c0_i32_0 = arith.constant 0 : i32
    return %arg0, %c0_i32 : i32, i32
  }
  func.func @transform_1(%arg0: i32) -> (i32, i32) {
    %c0_i32 = arith.constant 0 : i32
    %c0_i32_0 = arith.constant 0 : i32
    return %arg0, %c0_i32 : i32, i32
  }
  func.func @transform_2(%arg0: i32) -> (i32, i32) {
    %c0_i32 = arith.constant 0 : i32
    %c0_i32_0 = arith.constant 0 : i32
    return %arg0, %c0_i32 : i32, i32
  }
  func.func @transform_3(%arg0: i32) -> (i32, i32) {
    %c0_i32 = arith.constant 0 : i32
    %c0_i32_0 = arith.constant 0 : i32
    %c0_i32_1 = arith.constant 0 : i32
    return %c0_i32, %c0_i32_0 : i32, i32
  }
  func.func @transform_4(%arg0: i32) -> (i32, i32) {
    %c0_i32 = arith.constant 0 : i32
    %c0_i32_0 = arith.constant 0 : i32
    %c0_i32_1 = arith.constant 0 : i32
    return %c0_i32, %c0_i32_0 : i32, i32
  }
  func.func @transform_5(%arg0: i32) -> (i32, i32) {
    %c0_i32 = arith.constant 0 : i32
    %c0_i32_0 = arith.constant 0 : i32
    %c0_i32_1 = arith.constant 0 : i32
    return %c0_i32, %c0_i32_0 : i32, i32
  }
  func.func @transform_6(%arg0: i32) -> (i32, i32) {
    %c0_i32 = arith.constant 0 : i32
    %c0_i32_0 = arith.constant 0 : i32
    %c0_i32_1 = arith.constant 0 : i32
    return %c0_i32, %c0_i32_0 : i32, i32
  }
  func.func @transform_7(%arg0: i32) -> (i32, i32) {
    %c0_i32 = arith.constant 0 : i32
    %c0_i32_0 = arith.constant 0 : i32
    %c0_i32_1 = arith.constant 0 : i32
    return %c0_i32, %c0_i32_0 : i32, i32
  }
  func.func @transform_8(%arg0: i32) -> (i32, i32) {
    %c0_i32 = arith.constant 0 : i32
    %c0_i32_0 = arith.constant 0 : i32
    %c0_i32_1 = arith.constant 0 : i32
    return %c0_i32, %c0_i32_0 : i32, i32
  }
  func.func @transform_9(%arg0: i32) -> (i32, i32) {
    %c0_i32 = arith.constant 0 : i32
    %c0_i32_0 = arith.constant 0 : i32
    %c0_i32_1 = arith.constant 0 : i32
    return %c0_i32, %c0_i32_0 : i32, i32
  }
  func.func @transform_10(%arg0: i32) -> i32 {
    %c0_i32 = arith.constant 0 : i32
    %c0_i32_0 = arith.constant 0 : i32
    return %c0_i32 : i32
  }
  func.func @transform_11(%arg0: i32) -> (i32, i32) {
    %c0_i32 = arith.constant 0 : i32
    %c0_i32_0 = arith.constant 0 : i32
    return %arg0, %c0_i32 : i32, i32
  }
}

</mosaic_0001>

<llo_original>
// kernel: qnetwork_forward.1
$region0: #{qnetwork_forward.1}
  #allocation0 [shape = 'u32[]', space=smem, size = 0x4, offset = 0x4, fixed_abs, tag = 'smem constant byte address 0x4 - core index']
  #allocation1 [shape = 'u32[144,128]{1,0:T(1,128)}', space=vmem, size = 0x12000, scoped, tag = 'internal scratch']
  #allocation2 [shape = 'f32[1]{0:T(128)S(6)}', space=smem, size = 0x200, scoped, tag = 'scoped memory for qnetwork_forward.1']
  %s0 = inlined_call_operand.vmem [shape: f32[256,17], index: 0, kind: input, shape index: {}]
  %s1 = inlined_call_operand.vmem [shape: f32[256,6], index: 1, kind: input, shape index: {}]
  %s2 = inlined_call_operand.vmem [shape: f32[256,17], index: 2, kind: input, shape index: {}]
  %s3 = inlined_call_operand.vmem [shape: bf16[17,512], index: 3, kind: input, shape index: {}]
  %s4 = inlined_call_operand.vmem [shape: bf16[6,512], index: 4, kind: input, shape index: {}]
  %s5 = inlined_call_operand.vmem [shape: bf16[17,512], index: 5, kind: input, shape index: {}]
  %s6 = inlined_call_operand.vmem [shape: f32[1,512], index: 6, kind: input, shape index: {}]
  %s7 = inlined_call_operand.vmem [shape: bf16[512,512], index: 7, kind: input, shape index: {}]
  %s8 = inlined_call_operand.vmem [shape: f32[1,512], index: 8, kind: input, shape index: {}]
  %s9 = inlined_call_operand.vmem [shape: f32[1,512], index: 9, kind: input, shape index: {}]
  %s10 = inlined_call_operand.<no memory space> [shape: f32[1], index: 10, kind: input, shape index: {}]
  %s11 = inlined_call_operand.vmem [shape: f32[256,1], index: 11, kind: output, shape index: {}]
  %s12 = sld [smem:[#allocation0]]
  $region77: #{qnetwork_forward.1} parent=0
    _
  %s14 = ssub.s32 1, %s12
  %s15 = scalar_select 0, %s14, %s12
  %16 = sst [smem:[#allocation2]] %s10
  loop: start=0, step=1, limit=4
  $region2: #{qnetwork_forward.1} parent=0 // loop_pre_header
    _
  $region3: #{qnetwork_forward.1} parent=0 // loop_header
    %s18 = sphi 0, %s22
    %p19 = scmp.ge.s32.totalorder %s18, 4
    %s28 = sphi 0, %s30
    %s31 = sphi 0, %s28
    %s32 = sphi 0, %s31
    %s48 = sphi 0, %s32
    %s54 = sphi 0, %s56
    %s57 = sphi 0, %s54
    %s58 = sphi 0, %s57
    %s74 = sphi 0, %s58
    %s80 = sphi 0, %s82
    %s83 = sphi 0, %s80
    %s84 = sphi 0, %s83
    %s100 = sphi 0, %s84
    %s104 = sphi 0, %s104
    %s106 = sphi 0, %s104
    %s107 = sphi 0, %s106
    %s121 = sphi 0, %s107
    %s125 = sphi 0, %s125
    %s127 = sphi 0, %s125
    %s128 = sphi 0, %s127
    %s142 = sphi 0, %s128
    %s146 = sphi 0, %s146
    %s148 = sphi 0, %s146
    %s149 = sphi 0, %s148
    %s163 = sphi 0, %s149
    %s167 = sphi 0, %s167
    %s169 = sphi 0, %s167
    %s170 = sphi 0, %s169
    %s184 = sphi 0, %s170
    %s188 = sphi 0, %s188
    %s190 = sphi 0, %s188
    %s191 = sphi 0, %s190
    %s205 = sphi 0, %s191
    %s209 = sphi 0, %s209
    %s211 = sphi 0, %s209
    %s212 = sphi 0, %s211
    %s226 = sphi 0, %s212
    %s230 = sphi 0, %s230
    %s232 = sphi 0, %s230
    %s233 = sphi 0, %s232
    %s247 = sphi 0, %s233
    %s251 = sphi 0, %s251
    %s253 = sphi 0, %s251
    %s254 = sphi 0, %s253
    %s268 = sphi 0, %s254
    %s274 = sphi 0, %s276
    %s277 = sphi 0, %s274
    %s278 = sphi 0, %s277
    %s294 = sphi 0, %s278
  $region4: #{qnetwork_forward.1} parent=0 // loop_header_branch
    %21 = sbr.rel (%p19) target = $region8
  $region5: #{qnetwork_forward.1} parent=0 // loop_body
    %s23 = ssub.s32 %s18, 1
    %s24 = ssub.s32 %s18, 2
    %s25 = sadd.s32 %s18, 1
    %s26 = ssub.s32 %s18, %s25
    %p27 = scmp.eq.s32.totalorder %s26, 0
    %s29 = sadd.s32 %s28, 1
    %s30 = scalar_select %p27, %s28, %s29
    %p33 = pneg %p27
    %p34 = scmp.eq.s32.totalorder %s18, 1
    %p35 = por %p33, %p34
    %p36 = scmp.ne.s32.totalorder %s28, %s31
    %p37 = scmp.eq.s32.totalorder %s18, 0
    %p38 = por %p36, %p37
    %p39 = scmp.ne.s32.totalorder %s28, %s31
    %p40 = scmp.eq.s32.totalorder %s23, 1
    %p41 = por %p39, %p40
    %p42 = scmp.ne.s32.totalorder %s31, %s32
    %p43 = scmp.eq.s32.totalorder %s23, 0
    %p44 = por %p42, %p43
    %p45 = scmp.ne.s32.totalorder %s31, %s32
    %p46 = scmp.eq.s32.totalorder %s24, 1
    %p47 = por %p45, %p46
    %p49 = scmp.ne.s32.totalorder %s32, %s48
    %p50 = scmp.eq.s32.totalorder %s24, 0
    %p51 = por %p49, %p50
    %s52 = ssub.s32 %s18, %s25
    %p53 = scmp.eq.s32.totalorder %s52, 0
    %s55 = sadd.s32 %s54, 1
    %s56 = scalar_select %p53, %s54, %s55
    %p59 = pneg %p53
    %p60 = scmp.eq.s32.totalorder %s18, 1
    %p61 = por %p59, %p60
    %p62 = scmp.ne.s32.totalorder %s54, %s57
    %p63 = scmp.eq.s32.totalorder %s18, 0
    %p64 = por %p62, %p63
    %p65 = scmp.ne.s32.totalorder %s54, %s57
    %p66 = scmp.eq.s32.totalorder %s23, 1
    %p67 = por %p65, %p66
    %p68 = scmp.ne.s32.totalorder %s57, %s58
    %p69 = scmp.eq.s32.totalorder %s23, 0
    %p70 = por %p68, %p69
    %p71 = scmp.ne.s32.totalorder %s57, %s58
    %p72 = scmp.eq.s32.totalorder %s24, 1
    %p73 = por %p71, %p72
    %p75 = scmp.ne.s32.totalorder %s58, %s74
    %p76 = scmp.eq.s32.totalorder %s24, 0
    %p77 = por %p75, %p76
    %s78 = ssub.s32 %s18, %s25
    %p79 = scmp.eq.s32.totalorder %s78, 0
    %s81 = sadd.s32 %s80, 1
    %s82 = scalar_select %p79, %s80, %s81
    %p85 = pneg %p79
    %p86 = scmp.eq.s32.totalorder %s18, 1
    %p87 = por %p85, %p86
    %p88 = scmp.ne.s32.totalorder %s80, %s83
    %p89 = scmp.eq.s32.totalorder %s18, 0
    %p90 = por %p88, %p89
    %p91 = scmp.ne.s32.totalorder %s80, %s83
    %p92 = scmp.eq.s32.totalorder %s23, 1
    %p93 = por %p91, %p92
    %p94 = scmp.ne.s32.totalorder %s83, %s84
    %p95 = scmp.eq.s32.totalorder %s23, 0
    %p96 = por %p94, %p95
    %p97 = scmp.ne.s32.totalorder %s83, %s84
    %p98 = scmp.eq.s32.totalorder %s24, 1
    %p99 = por %p97, %p98
    %p101 = scmp.ne.s32.totalorder %s84, %s100
    %p102 = scmp.eq.s32.totalorder %s24, 0
    %p103 = por %p101, %p102
    %s105 = sadd.s32 %s104, 1
    %p108 = scmp.eq.s32.totalorder %s18, 1
    %p109 = scmp.ne.s32.totalorder %s104, %s106
    %p110 = scmp.eq.s32.totalorder %s18, 0
    %p111 = por %p109, %p110
    %p112 = scmp.ne.s32.totalorder %s104, %s106
    %p113 = scmp.eq.s32.totalorder %s23, 1
    %p114 = por %p112, %p113
    %p115 = scmp.ne.s32.totalorder %s106, %s107
    %p116 = scmp.eq.s32.totalorder %s23, 0
    %p117 = por %p115, %p116
    %p118 = scmp.ne.s32.totalorder %s106, %s107
    %p119 = scmp.eq.s32.totalorder %s24, 1
    %p120 = por %p118, %p119
    %p122 = scmp.ne.s32.totalorder %s107, %s121
    %p123 = scmp.eq.s32.totalorder %s24, 0
    %p124 = por %p122, %p123
    %s126 = sadd.s32 %s125, 1
    %p129 = scmp.eq.s32.totalorder %s18, 1
    %p130 = scmp.ne.s32.totalorder %s125, %s127
    %p131 = scmp.eq.s32.totalorder %s18, 0
    %p132 = por %p130, %p131
    %p133 = scmp.ne.s32.totalorder %s125, %s127
    %p134 = scmp.eq.s32.totalorder %s23, 1
    %p135 = por %p133, %p134
    %p136 = scmp.ne.s32.totalorder %s127, %s128
    %p137 = scmp.eq.s32.totalorder %s23, 0
    %p138 = por %p136, %p137
    %p139 = scmp.ne.s32.totalorder %s127, %s128
    %p140 = scmp.eq.s32.totalorder %s24, 1
    %p141 = por %p139, %p140
    %p143 = scmp.ne.s32.totalorder %s128, %s142
    %p144 = scmp.eq.s32.totalorder %s24, 0
    %p145 = por %p143, %p144
    %s147 = sadd.s32 %s146, 1
    %p150 = scmp.eq.s32.totalorder %s18, 1
    %p151 = scmp.ne.s32.totalorder %s146, %s148
    %p152 = scmp.eq.s32.totalorder %s18, 0
    %p153 = por %p151, %p152
    %p154 = scmp.ne.s32.totalorder %s146, %s148
    %p155 = scmp.eq.s32.totalorder %s23, 1
    %p156 = por %p154, %p155
    %p157 = scmp.ne.s32.totalorder %s148, %s149
    %p158 = scmp.eq.s32.totalorder %s23, 0
    %p159 = por %p157, %p158
    %p160 = scmp.ne.s32.totalorder %s148, %s149
    %p161 = scmp.eq.s32.totalorder %s24, 1
    %p162 = por %p160, %p161
    %p164 = scmp.ne.s32.totalorder %s149, %s163
    %p165 = scmp.eq.s32.totalorder %s24, 0
    %p166 = por %p164, %p165
    %s168 = sadd.s32 %s167, 1
    %p171 = scmp.eq.s32.totalorder %s18, 1
    %p172 = scmp.ne.s32.totalorder %s167, %s169
    %p173 = scmp.eq.s32.totalorder %s18, 0
    %p174 = por %p172, %p173
    %p175 = scmp.ne.s32.totalorder %s167, %s169
    %p176 = scmp.eq.s32.totalorder %s23, 1
    %p177 = por %p175, %p176
    %p178 = scmp.ne.s32.totalorder %s169, %s170
    %p179 = scmp.eq.s32.totalorder %s23, 0
    %p180 = por %p178, %p179
    %p181 = scmp.ne.s32.totalorder %s169, %s170
    %p182 = scmp.eq.s32.totalorder %s24, 1
    %p183 = por %p181, %p182
    %p185 = scmp.ne.s32.totalorder %s170, %s184
    %p186 = scmp.eq.s32.totalorder %s24, 0
    %p187 = por %p185, %p186
    %s189 = sadd.s32 %s188, 1
    %p192 = scmp.eq.s32.totalorder %s18, 1
    %p193 = scmp.ne.s32.totalorder %s188, %s190
    %p194 = scmp.eq.s32.totalorder %s18, 0
    %p195 = por %p193, %p194
    %p196 = scmp.ne.s32.totalorder %s188, %s190
    %p197 = scmp.eq.s32.totalorder %s23, 1
    %p198 = por %p196, %p197
    %p199 = scmp.ne.s32.totalorder %s190, %s191
    %p200 = scmp.eq.s32.totalorder %s23, 0
    %p201 = por %p199, %p200
    %p202 = scmp.ne.s32.totalorder %s190, %s191
    %p203 = scmp.eq.s32.totalorder %s24, 1
    %p204 = por %p202, %p203
    %p206 = scmp.ne.s32.totalorder %s191, %s205
    %p207 = scmp.eq.s32.totalorder %s24, 0
    %p208 = por %p206, %p207
    %s210 = sadd.s32 %s209, 1
    %p213 = scmp.eq.s32.totalorder %s18, 1
    %p214 = scmp.ne.s32.totalorder %s209, %s211
    %p215 = scmp.eq.s32.totalorder %s18, 0
    %p216 = por %p214, %p215
    %p217 = scmp.ne.s32.totalorder %s209, %s211
    %p218 = scmp.eq.s32.totalorder %s23, 1
    %p219 = por %p217, %p218
    %p220 = scmp.ne.s32.totalorder %s211, %s212
    %p221 = scmp.eq.s32.totalorder %s23, 0
    %p222 = por %p220, %p221
    %p223 = scmp.ne.s32.totalorder %s211, %s212
    %p224 = scmp.eq.s32.totalorder %s24, 1
    %p225 = por %p223, %p224
    %p227 = scmp.ne.s32.totalorder %s212, %s226
    %p228 = scmp.eq.s32.totalorder %s24, 0
    %p229 = por %p227, %p228
    %s231 = sadd.s32 %s230, 1
    %p234 = scmp.eq.s32.totalorder %s18, 1
    %p235 = scmp.ne.s32.totalorder %s230, %s232
    %p236 = scmp.eq.s32.totalorder %s18, 0
    %p237 = por %p235, %p236
    %p238 = scmp.ne.s32.totalorder %s230, %s232
    %p239 = scmp.eq.s32.totalorder %s23, 1
    %p240 = por %p238, %p239
    %p241 = scmp.ne.s32.totalorder %s232, %s233
    %p242 = scmp.eq.s32.totalorder %s23, 0
    %p243 = por %p241, %p242
    %p244 = scmp.ne.s32.totalorder %s232, %s233
    %p245 = scmp.eq.s32.totalorder %s24, 1
    %p246 = por %p244, %p245
    %p248 = scmp.ne.s32.totalorder %s233, %s247
    %p249 = scmp.eq.s32.totalorder %s24, 0
    %p250 = por %p248, %p249
    %s252 = sadd.s32 %s251, 1
    %p255 = scmp.eq.s32.totalorder %s18, 1
    %p256 = scmp.ne.s32.totalorder %s251, %s253
    %p257 = scmp.eq.s32.totalorder %s18, 0
    %p258 = por %p256, %p257
    %p259 = scmp.ne.s32.totalorder %s251, %s253
    %p260 = scmp.eq.s32.totalorder %s23, 1
    %p261 = por %p259, %p260
    %p262 = scmp.ne.s32.totalorder %s253, %s254
    %p263 = scmp.eq.s32.totalorder %s23, 0
    %p264 = por %p262, %p263
    %p265 = scmp.ne.s32.totalorder %s253, %s254
    %p266 = scmp.eq.s32.totalorder %s24, 1
    %p267 = por %p265, %p266
    %p269 = scmp.ne.s32.totalorder %s254, %s268
    %p270 = scmp.eq.s32.totalorder %s24, 0
    %p271 = por %p269, %p270
    %s272 = ssub.s32 %s18, %s25
    %p273 = scmp.eq.s32.totalorder %s272, 0
    %s275 = sadd.s32 %s274, 1
    %s276 = scalar_select %p273, %s274, %s275
    %p279 = pneg %p273
    %p280 = scmp.eq.s32.totalorder %s18, 1
    %p281 = por %p279, %p280
    %p282 = scmp.ne.s32.totalorder %s274, %s277
    %p283 = scmp.eq.s32.totalorder %s18, 0
    %p284 = por %p282, %p283
    %p285 = scmp.ne.s32.totalorder %s274, %s277
    %p286 = scmp.eq.s32.totalorder %s23, 1
    %p287 = por %p285, %p286
    %p288 = scmp.ne.s32.totalorder %s277, %s278
    %p289 = scmp.eq.s32.totalorder %s23, 0
    %p290 = por %p288, %p289
    %p291 = scmp.ne.s32.totalorder %s277, %s278
    %p292 = scmp.eq.s32.totalorder %s24, 1
    %p293 = por %p291, %p292
    %p295 = scmp.ne.s32.totalorder %s278, %s294
    %p296 = scmp.eq.s32.totalorder %s24, 0
    %p297 = por %p295, %p296
    %p298 = scmp.le.s32.totalorder 1, %s18
    %p299 = scmp.lt.s32.totalorder %s18, 3
    %p300 = pnand %p298, %p299
    %p301 = pneg %p300
    // Predicated region
    $region9: #{qnetwork_forward.1} parent=5 // pred_check
      _
    $region10: #{qnetwork_forward.1} parent=5 // pred_check_branch
      %303 = sbr.rel (%p300) target = $region12
    $region11: #{qnetwork_forward.1} parent=5 // pred_region
      %s304 = ssub.s32 %s18, 1
      // Predicated region
      $region13: #{qnetwork_forward.1} parent=11 // pred_check
        %p305 = pneg %p117
      $region14: #{qnetwork_forward.1} parent=11 // pred_check_branch
        %307 = sbr.rel (%p305) target = $region16
      $region15: #{qnetwork_forward.1} parent=11 // pred_region
        _
      $region16: #{qnetwork_forward.1} parent=11 // pred_fallthru
        _
      // Predicated region
      $region17: #{qnetwork_forward.1} parent=11 // pred_check
        %p308 = pneg %p138
      $region18: #{qnetwork_forward.1} parent=11 // pred_check_branch
        %310 = sbr.rel (%p308) target = $region20
      $region19: #{qnetwork_forward.1} parent=11 // pred_region
        _
      $region20: #{qnetwork_forward.1} parent=11 // pred_fallthru
        _
      // Predicated region
      $region21: #{qnetwork_forward.1} parent=11 // pred_check
        %p311 = pneg %p159
      $region22: #{qnetwork_forward.1} parent=11 // pred_check_branch
        %313 = sbr.rel (%p311) target = $region24
      $region23: #{qnetwork_forward.1} parent=11 // pred_region
        _
      $region24: #{qnetwork_forward.1} parent=11 // pred_fallthru
        _
      // Predicated region
      $region25: #{qnetwork_forward.1} parent=11 // pred_check
        %p314 = pneg %p180
      $region26: #{qnetwork_forward.1} parent=11 // pred_check_branch
        %316 = sbr.rel (%p314) target = $region28
      $region27: #{qnetwork_forward.1} parent=11 // pred_region
        _
      $region28: #{qnetwork_forward.1} parent=11 // pred_fallthru
        _
      // Predicated region
      $region29: #{qnetwork_forward.1} parent=11 // pred_check
        %p317 = pneg %p201
      $region30: #{qnetwork_forward.1} parent=11 // pred_check_branch
        %319 = sbr.rel (%p317) target = $region32
      $region31: #{qnetwork_forward.1} parent=11 // pred_region
        _
      $region32: #{qnetwork_forward.1} parent=11 // pred_fallthru
        _
      // Predicated region
      $region33: #{qnetwork_forward.1} parent=11 // pred_check
        %p320 = pneg %p222
      $region34: #{qnetwork_forward.1} parent=11 // pred_check_branch
        %322 = sbr.rel (%p320) target = $region36
      $region35: #{qnetwork_forward.1} parent=11 // pred_region
        _
      $region36: #{qnetwork_forward.1} parent=11 // pred_fallthru
        _
      // Predicated region
      $region37: #{qnetwork_forward.1} parent=11 // pred_check
        %p323 = pneg %p243
      $region38: #{qnetwork_forward.1} parent=11 // pred_check_branch
        %325 = sbr.rel (%p323) target = $region40
      $region39: #{qnetwork_forward.1} parent=11 // pred_region
        _
      $region40: #{qnetwork_forward.1} parent=11 // pred_fallthru
        _
      // Predicated region
      $region41: #{qnetwork_forward.1} parent=11 // pred_check
        %p326 = pneg %p264
      $region42: #{qnetwork_forward.1} parent=11 // pred_check_branch
        %328 = sbr.rel (%p326) target = $region44
      $region43: #{qnetwork_forward.1} parent=11 // pred_region
        _
      $region44: #{qnetwork_forward.1} parent=11 // pred_fallthru
        _
    $region12: #{qnetwork_forward.1} parent=5 // pred_fallthru
      _
    %p329 = scmp.lt.s32.totalorder %s18, 2
    // Predicated region
    $region45: #{qnetwork_forward.1} parent=5 // pred_check
      %p330 = pneg %p329
    $region46: #{qnetwork_forward.1} parent=5 // pred_check_branch
      %332 = sbr.rel (%p330) target = $region48
    $region47: #{qnetwork_forward.1} parent=5 // pred_region
      // Predicated region
      $region49: #{qnetwork_forward.1} parent=47 // pred_check
        %p333 = pneg %p38
      $region50: #{qnetwork_forward.1} parent=47 // pred_check_branch
        %335 = sbr.rel (%p333) target = $region52
      $region51: #{qnetwork_forward.1} parent=47 // pred_region
        %s336 = smul.u32 16, %s18
        %p337 = scmp.lt.s32.totalorder %s336, 31
        %s338 = scalar_select %p337, %s336, 31
        %s339 = smul.addr %s338, 8
        %s340 = scalar_lea.vmem %s0, %s339
        %s341 = smul.u32 16, %s18
      $region52: #{qnetwork_forward.1} parent=47 // pred_fallthru
        _
      // Predicated region
      $region53: #{qnetwork_forward.1} parent=47 // pred_check
        %p342 = pneg %p64
      $region54: #{qnetwork_forward.1} parent=47 // pred_check_branch
        %344 = sbr.rel (%p342) target = $region56
      $region55: #{qnetwork_forward.1} parent=47 // pred_region
        %s345 = smul.u32 16, %s18
        %p346 = scmp.lt.s32.totalorder %s345, 31
        %s347 = scalar_select %p346, %s345, 31
        %s348 = smul.addr %s347, 8
        %s349 = scalar_lea.vmem %s1, %s348
        %s350 = smul.u32 16, %s18
      $region56: #{qnetwork_forward.1} parent=47 // pred_fallthru
        _
      // Predicated region
      $region57: #{qnetwork_forward.1} parent=47 // pred_check
        %p351 = pneg %p90
      $region58: #{qnetwork_forward.1} parent=47 // pred_check_branch
        %353 = sbr.rel (%p351) target = $region60
      $region59: #{qnetwork_forward.1} parent=47 // pred_region
        %s354 = smul.u32 16, %s18
        %p355 = scmp.lt.s32.totalorder %s354, 31
        %s356 = scalar_select %p355, %s354, 31
        %s357 = smul.addr %s356, 8
        %s358 = scalar_lea.vmem %s2, %s357
        %s359 = smul.u32 16, %s18
      $region60: #{qnetwork_forward.1} parent=47 // pred_fallthru
        _
    $region48: #{qnetwork_forward.1} parent=5 // pred_fallthru
      _
    %p360 = scmp.le.s32.totalorder 1, %s18
    %p361 = scmp.lt.s32.totalorder %s18, 3
    %p362 = pnand %p360, %p361
    %p363 = pneg %p362
    // Predicated region
    $region61: #{qnetwork_forward.1} parent=5 // pred_check
      _
    $region62: #{qnetwork_forward.1} parent=5 // pred_check_branch
      %365 = sbr.rel (%p362) target = $region64
    $region63: #{qnetwork_forward.1} parent=5 // pred_region
      %s366 = ssub.s32 %s18, 1
      %s367 = smul.u32 16, %s23
      %p368 = scmp.lt.s32.totalorder %s367, 31
      %s369 = scalar_select %p368, %s367, 31
      %s370 = smul.addr %s369, 8
      %s371 = scalar_lea.vmem %s0, %s370
      %p372 = pneg %p44
      %p373 = pneg %p41
      %s374 = smul.u32 16, %s23
      %p375 = scmp.lt.s32.totalorder %s374, 31
      %s376 = scalar_select %p375, %s374, 31
      %s377 = smul.addr %s376, 8
      %s378 = scalar_lea.vmem %s1, %s377
      %p379 = pneg %p70
      %p380 = pneg %p67
      %s381 = smul.u32 16, %s23
      %p382 = scmp.lt.s32.totalorder %s381, 31
      %s383 = scalar_select %p382, %s381, 31
      %s384 = smul.addr %s383, 8
      %s385 = scalar_lea.vmem %s2, %s384
      %p386 = pneg %p96
      %p387 = pneg %p93
      %p388 = pneg %p117
      %p389 = pneg %p114
      %p390 = pneg %p138
      %p391 = pneg %p135
      %p392 = pneg %p159
      %p393 = pneg %p156
      %p394 = pneg %p180
      %p395 = pneg %p177
      %p396 = pneg %p201
      %p397 = pneg %p198
      %p398 = pneg %p222
      %p399 = pneg %p219
      %p400 = pneg %p243
      %p401 = pneg %p240
      %p402 = pneg %p264
      %p403 = pneg %p261
      %p404 = pneg %p290
      %p405 = pneg %p287
      %s406 = smul.u32 16, %s23
      %p407 = scmp.lt.s32.totalorder %s406, 31
      %s408 = scalar_select %p407, %s406, 31
      %s409 = smul.addr %s408, 8
      %s410 = scalar_lea.vmem %s11, %s409
      %s411 = smul.u32 16, %s23
      %p412 = scmp.lt.s32.totalorder %s411, 31
      %s413 = scalar_select %p412, %s411, 31
      %s414 = smul.addr %s413, 8
      %s415 = scalar_lea.vmem %s0, %s414
      %s416 = smul.u32 16, %s23
      %s417 = smul.u32 16, %s23
      %p418 = scmp.lt.s32.totalorder %s417, 31
      %s419 = scalar_select %p418, %s417, 31
      %s420 = smul.addr %s419, 8
      %s421 = scalar_lea.vmem %s1, %s420
      %s422 = smul.u32 16, %s23
      %s423 = smul.u32 16, %s23
      %p424 = scmp.lt.s32.totalorder %s423, 31
      %s425 = scalar_select %p424, %s423, 31
      %s426 = smul.addr %s425, 8
      %s427 = scalar_lea.vmem %s2, %s426
      %s428 = smul.u32 16, %s23
      %s429 = smul.u32 16, %s23
      %p430 = scmp.lt.s32.totalorder %s429, 31
      %s431 = scalar_select %p430, %s429, 31
      %s432 = smul.addr %s431, 8
      %s433 = scalar_lea.vmem %s11, %s432
      %s434 = smul.u32 16, %s23
      %v436 = vld [vmem:[%s415] sm:$0xff]
      %v437 = vld [vmem:[%s415 + $0x8] sm:$0xff]
      %v438 = vld [vmem:[%s415 + $0x10] sm:$0xff]
      %v439 = vld [vmem:[%s415 + $0x18] sm:$0xff]
      %v440 = vld [vmem:[%s415 + $0x20] sm:$0xff]
      %v441 = vld [vmem:[%s415 + $0x28] sm:$0xff]
      %v442 = vld [vmem:[%s415 + $0x30] sm:$0xff]
      %v443 = vld [vmem:[%s415 + $0x38] sm:$0xff]
      %v444 = vld [vmem:[%s415 + $0x40] sm:$0xff]
      %v445 = vld [vmem:[%s415 + $0x48] sm:$0xff]
      %v446 = vld [vmem:[%s415 + $0x50] sm:$0xff]
      %v447 = vld [vmem:[%s415 + $0x58] sm:$0xff]
      %v448 = vld [vmem:[%s415 + $0x60] sm:$0xff]
      %v449 = vld [vmem:[%s415 + $0x68] sm:$0xff]
      %v450 = vld [vmem:[%s415 + $0x70] sm:$0xff]
      %v451 = vld [vmem:[%s415 + $0x78] sm:$0xff]
      %v452 = vld [vmem:[%s421] sm:$0xff]
      %v453 = vld [vmem:[%s421 + $0x8] sm:$0xff]
      %v454 = vld [vmem:[%s421 + $0x10] sm:$0xff]
      %v455 = vld [vmem:[%s421 + $0x18] sm:$0xff]
      %v456 = vld [vmem:[%s421 + $0x20] sm:$0xff]
      %v457 = vld [vmem:[%s421 + $0x28] sm:$0xff]
      %v458 = vld [vmem:[%s421 + $0x30] sm:$0xff]
      %v459 = vld [vmem:[%s421 + $0x38] sm:$0xff]
      %v460 = vld [vmem:[%s421 + $0x40] sm:$0xff]
      %v461 = vld [vmem:[%s421 + $0x48] sm:$0xff]
      %v462 = vld [vmem:[%s421 + $0x50] sm:$0xff]
      %v463 = vld [vmem:[%s421 + $0x58] sm:$0xff]
      %v464 = vld [vmem:[%s421 + $0x60] sm:$0xff]
      %v465 = vld [vmem:[%s421 + $0x68] sm:$0xff]
      %v466 = vld [vmem:[%s421 + $0x70] sm:$0xff]
      %v467 = vld [vmem:[%s421 + $0x78] sm:$0xff]
      %v468 = vld [vmem:[%s427] sm:$0xff]
      %v469 = vld [vmem:[%s427 + $0x8] sm:$0xff]
      %v470 = vld [vmem:[%s427 + $0x10] sm:$0xff]
      %v471 = vld [vmem:[%s427 + $0x18] sm:$0xff]
      %v472 = vld [vmem:[%s427 + $0x20] sm:$0xff]
      %v473 = vld [vmem:[%s427 + $0x28] sm:$0xff]
      %v474 = vld [vmem:[%s427 + $0x30] sm:$0xff]
      %v475 = vld [vmem:[%s427 + $0x38] sm:$0xff]
      %v476 = vld [vmem:[%s427 + $0x40] sm:$0xff]
      %v477 = vld [vmem:[%s427 + $0x48] sm:$0xff]
      %v478 = vld [vmem:[%s427 + $0x50] sm:$0xff]
      %v479 = vld [vmem:[%s427 + $0x58] sm:$0xff]
      %v480 = vld [vmem:[%s427 + $0x60] sm:$0xff]
      %v481 = vld [vmem:[%s427 + $0x68] sm:$0xff]
      %v482 = vld [vmem:[%s427 + $0x70] sm:$0xff]
      %v483 = vld [vmem:[%s427 + $0x78] sm:$0xff]
      %v484 = vpack.c.bf16 %v437, %v436
      %v485 = vpack.c.bf16 %v439, %v438
      %v486 = vpack.c.bf16 %v441, %v440
      %v487 = vpack.c.bf16 %v443, %v442
      %v488 = vpack.c.bf16 %v445, %v444
      %v489 = vpack.c.bf16 %v447, %v446
      %v490 = vpack.c.bf16 %v449, %v448
      %v491 = vpack.c.bf16 %v451, %v450
      %v492 = vld [vmem:[%s3] sm:$0xff]
      %v493 = vld [vmem:[%s3 + $0x8] sm:$0xff]
      %v494 = vld [vmem:[%s3 + $0x10] sm:$0xff]
      %v495 = vld [vmem:[%s3 + $0x18] sm:$0xff]
      %v496 = vld [vmem:[%s3 + $0x20] sm:$0x11]
      %v497 = vld [vmem:[%s3 + $0x28] sm:$0x11]
      %v498 = vpack.c.bf16 %v453, %v452
      %v499 = vpack.c.bf16 %v455, %v454
      %v500 = vpack.c.bf16 %v457, %v456
      %v501 = vpack.c.bf16 %v459, %v458
      %v502 = vpack.c.bf16 %v461, %v460
      %v503 = vpack.c.bf16 %v463, %v462
      %v504 = vpack.c.bf16 %v465, %v464
      %v505 = vpack.c.bf16 %v467, %v466
      %v506 = vld [vmem:[%s4] sm:$0x77]
      %v507 = vld [vmem:[%s4 + $0x8] sm:$0x77]
      %v510 = vunpack.c.l.b16 %v506
      %v511 = vunpack.c.h.b16 %v506
      %v512 = vunpack.c.l.b16 %v507
      %v513 = vunpack.c.h.b16 %v507
      %v514 = vpack.c.b16 %v510, %v510
      %v515 = vpack.c.b16 %v511, %v511
      %v516 = vpack.c.b16 %v512, %v512
      %v517 = vpack.c.b16 %v513, %v513
      %vm518 = vcmask 48128
      %v520 = vsel %vm518, %v498, 0
      %v523 = vsel %vm518, %v499, 0
      %v526 = vsel %vm518, %v500, 0
      %v529 = vsel %vm518, %v501, 0
      %v532 = vsel %vm518, %v502, 0
      %v535 = vsel %vm518, %v503, 0
      %v538 = vsel %vm518, %v504, 0
      %v541 = vsel %vm518, %v505, 0
      %vm543 = vcmask 1042432
      %v545 = vsel %vm543, %v514, 0
      %v548 = vsel %vm543, %v515, 0
      %v551 = vsel %vm543, %v516, 0
      %v554 = vsel %vm543, %v517, 0
      %556 = vmatprep.subr.bf16.mxu0 %v548
      %557 = vmatpush1.bf16.msra.mxu0 %v545
      %558 = vmatprep.subr.bf16.mxu0 0
      %559 = vmatpush1.bf16.msra.mxu0 0
      %560 = vmatprep.subr.bf16.mxu0 0
      %561 = vmatpush1.bf16.msra.mxu0 0
      %562 = vmatprep.subr.bf16.mxu0 0
      %563 = vmatpush1.bf16.msra.mxu0 0
      %564 = vmatprep.subr.bf16.mxu0 0
      %565 = vmatpush1.bf16.msra.mxu0 0
      %566 = vmatprep.subr.bf16.mxu0 0
      %567 = vmatpush1.bf16.msra.mxu0 0
      %568 = vmatprep.subr.bf16.mxu0 0
      %569 = vmatpush1.bf16.msra.mxu0 0
      %570 = vmatprep.subr.bf16.mxu0 0
      %571 = vmatpush1.bf16.msra.mxu0 0
      %572 = vmatprep.subr.bf16.mxu0 0
      %573 = vmatpush1.bf16.msra.mxu0 0
      %574 = vmatprep.subr.bf16.mxu0 0
      %575 = vmatpush1.bf16.msra.mxu0 0
      %576 = vmatprep.subr.bf16.mxu0 0
      %577 = vmatpush1.bf16.msra.mxu0 0
      %578 = vmatprep.subr.bf16.mxu0 0
      %579 = vmatpush1.bf16.msra.mxu0 0
      %580 = vmatprep.subr.bf16.mxu0 0
      %581 = vmatpush1.bf16.msra.mxu0 0
      %582 = vmatprep.subr.bf16.mxu0 0
      %583 = vmatpush1.bf16.msra.mxu0 0
      %584 = vmatprep.subr.bf16.mxu0 0
      %585 = vmatpush1.bf16.msra.mxu0 0
      %586 = vmatprep.subr.bf16.mxu0 0
      %587 = vmatpush1.bf16.msra.mxu0 0
      %588 = vmatprep.mubr.bf16.mxu0 0
      %589 = vmatmul.mubr.bf16.gmra.mrb[0].mxu0 %v520
      %v590 = vpop.f32.mrb[0].mxu0
      %v591 = vadd.f32 0.0, %v590
      %v592 = vpop.f32.mrb[0].mxu0
      %v593 = vadd.f32 0.0, %v592
      %v594 = vpop.f32.mrb[0].mxu0
      %v595 = vadd.f32 0.0, %v594
      %v596 = vpop.f32.mrb[0].mxu0
      %v597 = vadd.f32 0.0, %v596
      %598 = vmatprep.mubr.bf16.mxu0 0
      %599 = vmatmul.mubr.bf16.gmra.mrb[0].mxu0 %v523
      %v600 = vpop.f32.mrb[0].mxu0
      %v601 = vadd.f32 0.0, %v600
      %v602 = vpop.f32.mrb[0].mxu0
      %v603 = vadd.f32 0.0, %v602
      %v604 = vpop.f32.mrb[0].mxu0
      %v605 = vadd.f32 0.0, %v604
      %v606 = vpop.f32.mrb[0].mxu0
      %v607 = vadd.f32 0.0, %v606
      %608 = vmatprep.mubr.bf16.mxu0 0
      %609 = vmatmul.mubr.bf16.gmra.mrb[0].mxu0 %v526
      %v610 = vpop.f32.mrb[0].mxu0
      %v611 = vadd.f32 0.0, %v610
      %v612 = vpop.f32.mrb[0].mxu0
      %v613 = vadd.f32 0.0, %v612
      %v614 = vpop.f32.mrb[0].mxu0
      %v615 = vadd.f32 0.0, %v614
      %v616 = vpop.f32.mrb[0].mxu0
      %v617 = vadd.f32 0.0, %v616
      %618 = vmatprep.mubr.bf16.mxu0 0
      %619 = vmatmul.mubr.bf16.gmra.mrb[0].mxu0 %v529
      %v620 = vpop.f32.mrb[0].mxu0
      %v621 = vadd.f32 0.0, %v620
      %v622 = vpop.f32.mrb[0].mxu0
      %v623 = vadd.f32 0.0, %v622
      %v624 = vpop.f32.mrb[0].mxu0
      %v625 = vadd.f32 0.0, %v624
      %v626 = vpop.f32.mrb[0].mxu0
      %v627 = vadd.f32 0.0, %v626
      %628 = vmatprep.mubr.bf16.mxu0 0
      %629 = vmatmul.mubr.bf16.gmra.mrb[0].mxu0 %v532
      %v630 = vpop.f32.mrb[0].mxu0
      %v631 = vadd.f32 0.0, %v630
      %v632 = vpop.f32.mrb[0].mxu0
      %v633 = vadd.f32 0.0, %v632
      %v634 = vpop.f32.mrb[0].mxu0
      %v635 = vadd.f32 0.0, %v634
      %v636 = vpop.f32.mrb[0].mxu0
      %v637 = vadd.f32 0.0, %v636
      %638 = vmatprep.mubr.bf16.mxu0 0
      %639 = vmatmul.mubr.bf16.gmra.mrb[0].mxu0 %v535
      %v640 = vpop.f32.mrb[0].mxu0
      %v641 = vadd.f32 0.0, %v640
      %v642 = vpop.f32.mrb[0].mxu0
      %v643 = vadd.f32 0.0, %v642
      %v644 = vpop.f32.mrb[0].mxu0
      %v645 = vadd.f32 0.0, %v644
      %v646 = vpop.f32.mrb[0].mxu0
      %v647 = vadd.f32 0.0, %v646
      %648 = vmatprep.mubr.bf16.mxu0 0
      %649 = vmatmul.mubr.bf16.gmra.mrb[0].mxu0 %v538
      %v650 = vpop.f32.mrb[0].mxu0
      %v651 = vadd.f32 0.0, %v650
      %v652 = vpop.f32.mrb[0].mxu0
      %v653 = vadd.f32 0.0, %v652
      %v654 = vpop.f32.mrb[0].mxu0
      %v655 = vadd.f32 0.0, %v654
      %v656 = vpop.f32.mrb[0].mxu0
      %v657 = vadd.f32 0.0, %v656
      %658 = vmatprep.mubr.bf16.mxu0 0
      %659 = vmatmul.mubr.bf16.gmra.mrb[0].mxu0 %v541
      %v660 = vpop.f32.mrb[0].mxu0
      %v661 = vadd.f32 0.0, %v660
      %v662 = vpop.f32.mrb[0].mxu0
      %v663 = vadd.f32 0.0, %v662
      %v664 = vpop.f32.mrb[0].mxu0
      %v665 = vadd.f32 0.0, %v664
      %v666 = vpop.f32.mrb[0].mxu0
      %v667 = vadd.f32 0.0, %v666
      %668 = vdwg.mxu0
      %669 = vmatprep.subr.bf16.mxu0 %v554
      %670 = vmatpush1.bf16.msra.mxu0 %v551
      %671 = vmatprep.subr.bf16.mxu0 0
      %672 = vmatpush1.bf16.msra.mxu0 0
      %673 = vmatprep.subr.bf16.mxu0 0
      %674 = vmatpush1.bf16.msra.mxu0 0
      %675 = vmatprep.subr.bf16.mxu0 0
      %676 = vmatpush1.bf16.msra.mxu0 0
      %677 = vmatprep.subr.bf16.mxu0 0
      %678 = vmatpush1.bf16.msra.mxu0 0
      %679 = vmatprep.subr.bf16.mxu0 0
      %680 = vmatpush1.bf16.msra.mxu0 0
      %681 = vmatprep.subr.bf16.mxu0 0
      %682 = vmatpush1.bf16.msra.mxu0 0
      %683 = vmatprep.subr.bf16.mxu0 0
      %684 = vmatpush1.bf16.msra.mxu0 0
      %685 = vmatprep.subr.bf16.mxu0 0
      %686 = vmatpush1.bf16.msra.mxu0 0
      %687 = vmatprep.subr.bf16.mxu0 0
      %688 = vmatpush1.bf16.msra.mxu0 0
      %689 = vmatprep.subr.bf16.mxu0 0
      %690 = vmatpush1.bf16.msra.mxu0 0
      %691 = vmatprep.subr.bf16.mxu0 0
      %692 = vmatpush1.bf16.msra.mxu0 0
      %693 = vmatprep.subr.bf16.mxu0 0
      %694 = vmatpush1.bf16.msra.mxu0 0
      %695 = vmatprep.subr.bf16.mxu0 0
      %696 = vmatpush1.bf16.msra.mxu0 0
      %697 = vmatprep.subr.bf16.mxu0 0
      %698 = vmatpush1.bf16.msra.mxu0 0
      %699 = vmatprep.subr.bf16.mxu0 0
      %700 = vmatpush1.bf16.msra.mxu0 0
      %701 = vmatprep.mubr.bf16.mxu0 0
      %702 = vmatmul.mubr.bf16.gmra.mrb[0].mxu0 %v520
      %v703 = vpop.f32.mrb[0].mxu0
      %v704 = vadd.f32 0.0, %v703
      %v705 = vpop.f32.mrb[0].mxu0
      %v706 = vadd.f32 0.0, %v705
      %v707 = vpop.f32.mrb[0].mxu0
      %v708 = vadd.f32 0.0, %v707
      %v709 = vpop.f32.mrb[0].mxu0
      %v710 = vadd.f32 0.0, %v709
      %711 = vmatprep.mubr.bf16.mxu0 0
      %712 = vmatmul.mubr.bf16.gmra.mrb[0].mxu0 %v523
      %v713 = vpop.f32.mrb[0].mxu0
      %v714 = vadd.f32 0.0, %v713
      %v715 = vpop.f32.mrb[0].mxu0
      %v716 = vadd.f32 0.0, %v715
      %v717 = vpop.f32.mrb[0].mxu0
      %v718 = vadd.f32 0.0, %v717
      %v719 = vpop.f32.mrb[0].mxu0
      %v720 = vadd.f32 0.0, %v719
      %721 = vmatprep.mubr.bf16.mxu0 0
      %722 = vmatmul.mubr.bf16.gmra.mrb[0].mxu0 %v526
      %v723 = vpop.f32.mrb[0].mxu0
      %v724 = vadd.f32 0.0, %v723
      %v725 = vpop.f32.mrb[0].mxu0
      %v726 = vadd.f32 0.0, %v725
      %v727 = vpop.f32.mrb[0].mxu0
      %v728 = vadd.f32 0.0, %v727
      %v729 = vpop.f32.mrb[0].mxu0
      %v730 = vadd.f32 0.0, %v729
      %731 = vmatprep.mubr.bf16.mxu0 0
      %732 = vmatmul.mubr.bf16.gmra.mrb[0].mxu0 %v529
      %v733 = vpop.f32.mrb[0].mxu0
      %v734 = vadd.f32 0.0, %v733
      %v735 = vpop.f32.mrb[0].mxu0
      %v736 = vadd.f32 0.0, %v735
      %v737 = vpop.f32.mrb[0].mxu0
      %v738 = vadd.f32 0.0, %v737
      %v739 = vpop.f32.mrb[0].mxu0
      %v740 = vadd.f32 0.0, %v739
      %741 = vmatprep.mubr.bf16.mxu0 0
      %742 = vmatmul.mubr.bf16.gmra.mrb[0].mxu0 %v532
      %v743 = vpop.f32.mrb[0].mxu0
      %v744 = vadd.f32 0.0, %v743
      %v745 = vpop.f32.mrb[0].mxu0
      %v746 = vadd.f32 0.0, %v745
      %v747 = vpop.f32.mrb[0].mxu0
      %v748 = vadd.f32 0.0, %v747
      %v749 = vpop.f32.mrb[0].mxu0
      %v750 = vadd.f32 0.0, %v749
      %751 = vmatprep.mubr.bf16.mxu0 0
      %752 = vmatmul.mubr.bf16.gmra.mrb[0].mxu0 %v535
      %v753 = vpop.f32.mrb[0].mxu0
      %v754 = vadd.f32 0.0, %v753
      %v755 = vpop.f32.mrb[0].mxu0
      %v756 = vadd.f32 0.0, %v755
      %v757 = vpop.f32.mrb[0].mxu0
      %v758 = vadd.f32 0.0, %v757
      %v759 = vpop.f32.mrb[0].mxu0
      %v760 = vadd.f32 0.0, %v759
      %761 = vmatprep.mubr.bf16.mxu0 0
      %762 = vmatmul.mubr.bf16.gmra.mrb[0].mxu0 %v538
      %v763 = vpop.f32.mrb[0].mxu0
      %v764 = vadd.f32 0.0, %v763
      %v765 = vpop.f32.mrb[0].mxu0
      %v766 = vadd.f32 0.0, %v765
      %v767 = vpop.f32.mrb[0].mxu0
      %v768 = vadd.f32 0.0, %v767
      %v769 = vpop.f32.mrb[0].mxu0
      %v770 = vadd.f32 0.0, %v769
      %771 = vmatprep.mubr.bf16.mxu0 0
      %772 = vmatmul.mubr.bf16.gmra.mrb[0].mxu0 %v541
      %v773 = vpop.f32.mrb[0].mxu0
      %v774 = vadd.f32 0.0, %v773
      %v775 = vpop.f32.mrb[0].mxu0
      %v776 = vadd.f32 0.0, %v775
      %v777 = vpop.f32.mrb[0].mxu0
      %v778 = vadd.f32 0.0, %v777
      %v779 = vpop.f32.mrb[0].mxu0
      %v780 = vadd.f32 0.0, %v779
      %781 = vdwg.mxu0
      %v788 = vunpack.c.l.b16 %v492
      %v789 = vunpack.c.h.b16 %v492
      %v790 = vunpack.c.l.b16 %v493
      %v791 = vunpack.c.h.b16 %v493
      %v792 = vunpack.c.l.b16 %v494
      %v793 = vunpack.c.h.b16 %v494
      %v794 = vunpack.c.l.b16 %v495
      %v795 = vunpack.c.h.b16 %v495
      %v796 = vunpack.c.l.b16 %v496
      %v797 = vunpack.c.h.b16 %v496
      %v798 = vunpack.c.l.b16 %v497
      %v799 = vunpack.c.h.b16 %v497
      %v800 = vpack.c.b16 %v792, %v788
      %v801 = vpack.c.b16 %v793, %v789
      %v802 = vpack.c.b16 %v794, %v790
      %v803 = vpack.c.b16 %v795, %v791
      %v804 = vpack.c.b16 %v796, %v796
      %v805 = vpack.c.b16 %v797, %v797
      %v806 = vpack.c.b16 %v798, %v798
      %v807 = vpack.c.b16 %v799, %v799
      %vm812 = vcmask 138240
      %v814 = vsel %vm812, %v484, 0
      %v817 = vsel %vm812, %v485, 0
      %v820 = vsel %vm812, %v486, 0
      %v823 = vsel %vm812, %v487, 0
      %v826 = vsel %vm812, %v488, 0
      %v829 = vsel %vm812, %v489, 0
      %v832 = vsel %vm812, %v490, 0
      %v835 = vsel %vm812, %v491, 0
      %vm837 = vcmask 1040384
      %v838 = vsel 0, 4294967295, 65535
      %v839 = vsel %vm837, %v838, 0
      %v841 = vand.u32 %v804, %v839
      %v844 = vand.u32 %v805, %v839
      %v847 = vand.u32 %v806, %v839
      %v850 = vand.u32 %v807, %v839
      %852 = vmatprep.subr.bf16.mxu0 %v801
      %853 = vmatpush1.bf16.msra.mxu0 %v800
      %854 = vmatprep.subr.bf16.mxu0 %v844
      %855 = vmatpush1.bf16.msra.mxu0 %v841
      %856 = vmatprep.subr.bf16.mxu0 0
      %857 = vmatpush1.bf16.msra.mxu0 0
      %858 = vmatprep.subr.bf16.mxu0 0
      %859 = vmatpush1.bf16.msra.mxu0 0
      %860 = vmatprep.subr.bf16.mxu0 0
      %861 = vmatpush1.bf16.msra.mxu0 0
      %862 = vmatprep.subr.bf16.mxu0 0
      %863 = vmatpush1.bf16.msra.mxu0 0
      %864 = vmatprep.subr.bf16.mxu0 0
      %865 = vmatpush1.bf16.msra.mxu0 0
      %866 = vmatprep.subr.bf16.mxu0 0
      %867 = vmatpush1.bf16.msra.mxu0 0
      %868 = vmatprep.subr.bf16.mxu0 0
      %869 = vmatpush1.bf16.msra.mxu0 0
      %870 = vmatprep.subr.bf16.mxu0 0
      %871 = vmatpush1.bf16.msra.mxu0 0
      %872 = vmatprep.subr.bf16.mxu0 0
      %873 = vmatpush1.bf16.msra.mxu0 0
      %874 = vmatprep.subr.bf16.mxu0 0
      %875 = vmatpush1.bf16.msra.mxu0 0
      %876 = vmatprep.subr.bf16.mxu0 0
      %877 = vmatpush1.bf16.msra.mxu0 0
      %878 = vmatprep.subr.bf16.mxu0 0
      %879 = vmatpush1.bf16.msra.mxu0 0
      %880 = vmatprep.subr.bf16.mxu0 0
      %881 = vmatpush1.bf16.msra.mxu0 0
      %882 = vmatprep.subr.bf16.mxu0 0
      %883 = vmatpush1.bf16.msra.mxu0 0
      %884 = vmatprep.mubr.bf16.mxu0 0
      %885 = vmatmul.mubr.bf16.gmra.mrb[0].mxu0 %v814
      %v886 = vpop.f32.mrb[0].mxu0
      %v887 = vadd.f32 %v591, %v886
      %v888 = vpop.f32.mrb[0].mxu0
      %v889 = vadd.f32 %v593, %v888
      %v890 = vpop.f32.mrb[0].mxu0
      %v891 = vadd.f32 %v595, %v890
      %v892 = vpop.f32.mrb[0].mxu0
      %v893 = vadd.f32 %v597, %v892
      %894 = vmatprep.mubr.bf16.mxu0 0
      %895 = vmatmul.mubr.bf16.gmra.mrb[0].mxu0 %v817
      %v896 = vpop.f32.mrb[0].mxu0
      %v897 = vadd.f32 %v601, %v896
      %v898 = vpop.f32.mrb[0].mxu0
      %v899 = vadd.f32 %v603, %v898
      %v900 = vpop.f32.mrb[0].mxu0
      %v901 = vadd.f32 %v605, %v900
      %v902 = vpop.f32.mrb[0].mxu0
      %v903 = vadd.f32 %v607, %v902
      %904 = vmatprep.mubr.bf16.mxu0 0
      %905 = vmatmul.mubr.bf16.gmra.mrb[0].mxu0 %v820
      %v906 = vpop.f32.mrb[0].mxu0
      %v907 = vadd.f32 %v611, %v906
      %v908 = vpop.f32.mrb[0].mxu0
      %v909 = vadd.f32 %v613, %v908
      %v910 = vpop.f32.mrb[0].mxu0
      %v911 = vadd.f32 %v615, %v910
      %v912 = vpop.f32.mrb[0].mxu0
      %v913 = vadd.f32 %v617, %v912
      %914 = vmatprep.mubr.bf16.mxu0 0
      %915 = vmatmul.mubr.bf16.gmra.mrb[0].mxu0 %v823
      %v916 = vpop.f32.mrb[0].mxu0
      %v917 = vadd.f32 %v621, %v916
      %v918 = vpop.f32.mrb[0].mxu0
      %v919 = vadd.f32 %v623, %v918
      %v920 = vpop.f32.mrb[0].mxu0
      %v921 = vadd.f32 %v625, %v920
      %v922 = vpop.f32.mrb[0].mxu0
      %v923 = vadd.f32 %v627, %v922
      %924 = vmatprep.mubr.bf16.mxu0 0
      %925 = vmatmul.mubr.bf16.gmra.mrb[0].mxu0 %v826
      %v926 = vpop.f32.mrb[0].mxu0
      %v927 = vadd.f32 %v631, %v926
      %v928 = vpop.f32.mrb[0].mxu0
      %v929 = vadd.f32 %v633, %v928
      %v930 = vpop.f32.mrb[0].mxu0
      %v931 = vadd.f32 %v635, %v930
      %v932 = vpop.f32.mrb[0].mxu0
      %v933 = vadd.f32 %v637, %v932
      %934 = vmatprep.mubr.bf16.mxu0 0
      %935 = vmatmul.mubr.bf16.gmra.mrb[0].mxu0 %v829
      %v936 = vpop.f32.mrb[0].mxu0
      %v937 = vadd.f32 %v641, %v936
      %v938 = vpop.f32.mrb[0].mxu0
      %v939 = vadd.f32 %v643, %v938
      %v940 = vpop.f32.mrb[0].mxu0
      %v941 = vadd.f32 %v645, %v940
      %v942 = vpop.f32.mrb[0].mxu0
      %v943 = vadd.f32 %v647, %v942
      %944 = vmatprep.mubr.bf16.mxu0 0
      %945 = vmatmul.mubr.bf16.gmra.mrb[0].mxu0 %v832
      %v946 = vpop.f32.mrb[0].mxu0
      %v947 = vadd.f32 %v651, %v946
      %v948 = vpop.f32.mrb[0].mxu0
      %v949 = vadd.f32 %v653, %v948
      %v950 = vpop.f32.mrb[0].mxu0
      %v951 = vadd.f32 %v655, %v950
      %v952 = vpop.f32.mrb[0].mxu0
      %v953 = vadd.f32 %v657, %v952
      %954 = vmatprep.mubr.bf16.mxu0 0
      %955 = vmatmul.mubr.bf16.gmra.mrb[0].mxu0 %v835
      %v956 = vpop.f32.mrb[0].mxu0
      %v957 = vadd.f32 %v661, %v956
      %v958 = vpop.f32.mrb[0].mxu0
      %v959 = vadd.f32 %v663, %v958
      %v960 = vpop.f32.mrb[0].mxu0
      %v961 = vadd.f32 %v665, %v960
      %v962 = vpop.f32.mrb[0].mxu0
      %v963 = vadd.f32 %v667, %v962
      %964 = vdwg.mxu0
      %965 = vmatprep.subr.bf16.mxu0 %v803
      %966 = vmatpush1.bf16.msra.mxu0 %v802
      %967 = vmatprep.subr.bf16.mxu0 %v850
      %968 = vmatpush1.bf16.msra.mxu0 %v847
      %969 = vmatprep.subr.bf16.mxu0 0
      %970 = vmatpush1.bf16.msra.mxu0 0
      %971 = vmatprep.subr.bf16.mxu0 0
      %972 = vmatpush1.bf16.msra.mxu0 0
      %973 = vmatprep.subr.bf16.mxu0 0
      %974 = vmatpush1.bf16.msra.mxu0 0
      %975 = vmatprep.subr.bf16.mxu0 0
      %976 = vmatpush1.bf16.msra.mxu0 0
      %977 = vmatprep.subr.bf16.mxu0 0
      %978 = vmatpush1.bf16.msra.mxu0 0
      %979 = vmatprep.subr.bf16.mxu0 0
      %980 = vmatpush1.bf16.msra.mxu0 0
      %981 = vmatprep.subr.bf16.mxu0 0
      %982 = vmatpush1.bf16.msra.mxu0 0
      %983 = vmatprep.subr.bf16.mxu0 0
      %984 = vmatpush1.bf16.msra.mxu0 0
      %985 = vmatprep.subr.bf16.mxu0 0
      %986 = vmatpush1.bf16.msra.mxu0 0
      %987 = vmatprep.subr.bf16.mxu0 0
      %988 = vmatpush1.bf16.msra.mxu0 0
      %989 = vmatprep.subr.bf16.mxu0 0
      %990 = vmatpush1.bf16.msra.mxu0 0
      %991 = vmatprep.subr.bf16.mxu0 0
      %992 = vmatpush1.bf16.msra.mxu0 0
      %993 = vmatprep.subr.bf16.mxu0 0
      %994 = vmatpush1.bf16.msra.mxu0 0
      %995 = vmatprep.subr.bf16.mxu0 0
      %996 = vmatpush1.bf16.msra.mxu0 0
      %997 = vmatprep.mubr.bf16.mxu0 0
      %998 = vmatmul.mubr.bf16.gmra.mrb[0].mxu0 %v814
      %v999 = vpop.f32.mrb[0].mxu0
      %v1000 = vadd.f32 %v704, %v999
      %v1001 = vpop.f32.mrb[0].mxu0
      %v1002 = vadd.f32 %v706, %v1001
      %v1003 = vpop.f32.mrb[0].mxu0
      %v1004 = vadd.f32 %v708, %v1003
      %v1005 = vpop.f32.mrb[0].mxu0
      %v1006 = vadd.f32 %v710, %v1005
      %1007 = vmatprep.mubr.bf16.mxu0 0
      %1008 = vmatmul.mubr.bf16.gmra.mrb[0].mxu0 %v817
      %v1009 = vpop.f32.mrb[0].mxu0
      %v1010 = vadd.f32 %v714, %v1009
      %v1011 = vpop.f32.mrb[0].mxu0
      %v1012 = vadd.f32 %v716, %v1011
      %v1013 = vpop.f32.mrb[0].mxu0
      %v1014 = vadd.f32 %v718, %v1013
      %v1015 = vpop.f32.mrb[0].mxu0
      %v1016 = vadd.f32 %v720, %v1015
      %1017 = vmatprep.mubr.bf16.mxu0 0
      %1018 = vmatmul.mubr.bf16.gmra.mrb[0].mxu0 %v820
      %v1019 = vpop.f32.mrb[0].mxu0
      %v1020 = vadd.f32 %v724, %v1019
      %v1021 = vpop.f32.mrb[0].mxu0
      %v1022 = vadd.f32 %v726, %v1021
      %v1023 = vpop.f32.mrb[0].mxu0
      %v1024 = vadd.f32 %v728, %v1023
      %v1025 = vpop.f32.mrb[0].mxu0
      %v1026 = vadd.f32 %v730, %v1025
      %1027 = vmatprep.mubr.bf16.mxu0 0
      %1028 = vmatmul.mubr.bf16.gmra.mrb[0].mxu0 %v823
      %v1029 = vpop.f32.mrb[0].mxu0
      %v1030 = vadd.f32 %v734, %v1029
      %v1031 = vpop.f32.mrb[0].mxu0
      %v1032 = vadd.f32 %v736, %v1031
      %v1033 = vpop.f32.mrb[0].mxu0
      %v1034 = vadd.f32 %v738, %v1033
      %v1035 = vpop.f32.mrb[0].mxu0
      %v1036 = vadd.f32 %v740, %v1035
      %1037 = vmatprep.mubr.bf16.mxu0 0
      %1038 = vmatmul.mubr.bf16.gmra.mrb[0].mxu0 %v826
      %v1039 = vpop.f32.mrb[0].mxu0
      %v1040 = vadd.f32 %v744, %v1039
      %v1041 = vpop.f32.mrb[0].mxu0
      %v1042 = vadd.f32 %v746, %v1041
      %v1043 = vpop.f32.mrb[0].mxu0
      %v1044 = vadd.f32 %v748, %v1043
      %v1045 = vpop.f32.mrb[0].mxu0
      %v1046 = vadd.f32 %v750, %v1045
      %1047 = vmatprep.mubr.bf16.mxu0 0
      %1048 = vmatmul.mubr.bf16.gmra.mrb[0].mxu0 %v829
      %v1049 = vpop.f32.mrb[0].mxu0
      %v1050 = vadd.f32 %v754, %v1049
      %v1051 = vpop.f32.mrb[0].mxu0
      %v1052 = vadd.f32 %v756, %v1051
      %v1053 = vpop.f32.mrb[0].mxu0
      %v1054 = vadd.f32 %v758, %v1053
      %v1055 = vpop.f32.mrb[0].mxu0
      %v1056 = vadd.f32 %v760, %v1055
      %1057 = vmatprep.mubr.bf16.mxu0 0
      %1058 = vmatmul.mubr.bf16.gmra.mrb[0].mxu0 %v832
      %v1059 = vpop.f32.mrb[0].mxu0
      %v1060 = vadd.f32 %v764, %v1059
      %v1061 = vpop.f32.mrb[0].mxu0
      %v1062 = vadd.f32 %v766, %v1061
      %v1063 = vpop.f32.mrb[0].mxu0
      %v1064 = vadd.f32 %v768, %v1063
      %v1065 = vpop.f32.mrb[0].mxu0
      %v1066 = vadd.f32 %v770, %v1065
      %1067 = vmatprep.mubr.bf16.mxu0 0
      %1068 = vmatmul.mubr.bf16.gmra.mrb[0].mxu0 %v835
      %v1069 = vpop.f32.mrb[0].mxu0
      %v1070 = vadd.f32 %v774, %v1069
      %v1071 = vpop.f32.mrb[0].mxu0
      %v1072 = vadd.f32 %v776, %v1071
      %v1073 = vpop.f32.mrb[0].mxu0
      %v1074 = vadd.f32 %v778, %v1073
      %v1075 = vpop.f32.mrb[0].mxu0
      %v1076 = vadd.f32 %v780, %v1075
      %1077 = vdwg.mxu0
      %v1078 = vpack.c.bf16 %v469, %v468
      %v1079 = vpack.c.bf16 %v471, %v470
      %v1080 = vpack.c.bf16 %v473, %v472
      %v1081 = vpack.c.bf16 %v475, %v474
      %v1082 = vpack.c.bf16 %v477, %v476
      %v1083 = vpack.c.bf16 %v479, %v478
      %v1084 = vpack.c.bf16 %v481, %v480
      %v1085 = vpack.c.bf16 %v483, %v482
      %v1086 = vld [vmem:[%s5] sm:$0xff]
      %v1087 = vld [vmem:[%s5 + $0x8] sm:$0xff]
      %v1088 = vld [vmem:[%s5 + $0x10] sm:$0xff]
      %v1089 = vld [vmem:[%s5 + $0x18] sm:$0xff]
      %v1090 = vld [vmem:[%s5 + $0x20] sm:$0x11]
      %v1091 = vld [vmem:[%s5 + $0x28] sm:$0x11]
      %v1098 = vunpack.c.l.b16 %v1086
      %v1099 = vunpack.c.h.b16 %v1086
      %v1100 = vunpack.c.l.b16 %v1087
      %v1101 = vunpack.c.h.b16 %v1087
      %v1102 = vunpack.c.l.b16 %v1088
      %v1103 = vunpack.c.h.b16 %v1088
      %v1104 = vunpack.c.l.b16 %v1089
      %v1105 = vunpack.c.h.b16 %v1089
      %v1106 = vunpack.c.l.b16 %v1090
      %v1107 = vunpack.c.h.b16 %v1090
      %v1108 = vunpack.c.l.b16 %v1091
      %v1109 = vunpack.c.h.b16 %v1091
      %v1110 = vpack.c.b16 %v1102, %v1098
      %v1111 = vpack.c.b16 %v1103, %v1099
      %v1112 = vpack.c.b16 %v1104, %v1100
      %v1113 = vpack.c.b16 %v1105, %v1101
      %v1114 = vpack.c.b16 %v1106, %v1106
      %v1115 = vpack.c.b16 %v1107, %v1107
      %v1116 = vpack.c.b16 %v1108, %v1108
      %v1117 = vpack.c.b16 %v1109, %v1109
      %v1123 = vsel %vm812, %v1078, 0
      %v1126 = vsel %vm812, %v1079, 0
      %v1129 = vsel %vm812, %v1080, 0
      %v1132 = vsel %vm812, %v1081, 0
      %v1135 = vsel %vm812, %v1082, 0
      %v1138 = vsel %vm812, %v1083, 0
      %v1141 = vsel %vm812, %v1084, 0
      %v1144 = vsel %vm812, %v1085, 0
      %v1147 = vand.u32 %v1114, %v839
      %v1150 = vand.u32 %v1115, %v839
      %v1153 = vand.u32 %v1116, %v839
      %v1156 = vand.u32 %v1117, %v839
      %1158 = vmatprep.subr.bf16.mxu0 %v1111
      %1159 = vmatpush1.bf16.msra.mxu0 %v1110
      %1160 = vmatprep.subr.bf16.mxu0 %v1150
      %1161 = vmatpush1.bf16.msra.mxu0 %v1147
      %1162 = vmatprep.subr.bf16.mxu0 0
      %1163 = vmatpush1.bf16.msra.mxu0 0
      %1164 = vmatprep.subr.bf16.mxu0 0
      %1165 = vmatpush1.bf16.msra.mxu0 0
      %1166 = vmatprep.subr.bf16.mxu0 0
      %1167 = vmatpush1.bf16.msra.mxu0 0
      %1168 = vmatprep.subr.bf16.mxu0 0
      %1169 = vmatpush1.bf16.msra.mxu0 0
      %1170 = vmatprep.subr.bf16.mxu0 0
      %1171 = vmatpush1.bf16.msra.mxu0 0
      %1172 = vmatprep.subr.bf16.mxu0 0
      %1173 = vmatpush1.bf16.msra.mxu0 0
      %1174 = vmatprep.subr.bf16.mxu0 0
      %1175 = vmatpush1.bf16.msra.mxu0 0
      %1176 = vmatprep.subr.bf16.mxu0 0
      %1177 = vmatpush1.bf16.msra.mxu0 0
      %1178 = vmatprep.subr.bf16.mxu0 0
      %1179 = vmatpush1.bf16.msra.mxu0 0
      %1180 = vmatprep.subr.bf16.mxu0 0
      %1181 = vmatpush1.bf16.msra.mxu0 0
      %1182 = vmatprep.subr.bf16.mxu0 0
      %1183 = vmatpush1.bf16.msra.mxu0 0
      %1184 = vmatprep.subr.bf16.mxu0 0
      %1185 = vmatpush1.bf16.msra.mxu0 0
      %1186 = vmatprep.subr.bf16.mxu0 0
      %1187 = vmatpush1.bf16.msra.mxu0 0
      %1188 = vmatprep.subr.bf16.mxu0 0
      %1189 = vmatpush1.bf16.msra.mxu0 0
      %1190 = vmatprep.mubr.bf16.mxu0 0
      %1191 = vmatmul.mubr.bf16.gmra.mrb[0].mxu0 %v1123
      %v1192 = vpop.f32.mrb[0].mxu0
      %v1193 = vadd.f32 0.0, %v1192
      %v1194 = vpop.f32.mrb[0].mxu0
      %v1195 = vadd.f32 0.0, %v1194
      %v1196 = vpop.f32.mrb[0].mxu0
      %v1197 = vadd.f32 0.0, %v1196
      %v1198 = vpop.f32.mrb[0].mxu0
      %v1199 = vadd.f32 0.0, %v1198
      %1200 = vmatprep.mubr.bf16.mxu0 0
      %1201 = vmatmul.mubr.bf16.gmra.mrb[0].mxu0 %v1126
      %v1202 = vpop.f32.mrb[0].mxu0
      %v1203 = vadd.f32 0.0, %v1202
      %v1204 = vpop.f32.mrb[0].mxu0
      %v1205 = vadd.f32 0.0, %v1204
      %v1206 = vpop.f32.mrb[0].mxu0
      %v1207 = vadd.f32 0.0, %v1206
      %v1208 = vpop.f32.mrb[0].mxu0
      %v1209 = vadd.f32 0.0, %v1208
      %1210 = vmatprep.mubr.bf16.mxu0 0
      %1211 = vmatmul.mubr.bf16.gmra.mrb[0].mxu0 %v1129
      %v1212 = vpop.f32.mrb[0].mxu0
      %v1213 = vadd.f32 0.0, %v1212
      %v1214 = vpop.f32.mrb[0].mxu0
      %v1215 = vadd.f32 0.0, %v1214
      %v1216 = vpop.f32.mrb[0].mxu0
      %v1217 = vadd.f32 0.0, %v1216
      %v1218 = vpop.f32.mrb[0].mxu0
      %v1219 = vadd.f32 0.0, %v1218
      %1220 = vmatprep.mubr.bf16.mxu0 0
      %1221 = vmatmul.mubr.bf16.gmra.mrb[0].mxu0 %v1132
      %v1222 = vpop.f32.mrb[0].mxu0
      %v1223 = vadd.f32 0.0, %v1222
      %v1224 = vpop.f32.mrb[0].mxu0
      %v1225 = vadd.f32 0.0, %v1224
      %v1226 = vpop.f32.mrb[0].mxu0
      %v1227 = vadd.f32 0.0, %v1226
      %v1228 = vpop.f32.mrb[0].mxu0
      %v1229 = vadd.f32 0.0, %v1228
      %1230 = vmatprep.mubr.bf16.mxu0 0
      %1231 = vmatmul.mubr.bf16.gmra.mrb[0].mxu0 %v1135
      %v1232 = vpop.f32.mrb[0].mxu0
      %v1233 = vadd.f32 0.0, %v1232
      %v1234 = vpop.f32.mrb[0].mxu0
      %v1235 = vadd.f32 0.0, %v1234
      %v1236 = vpop.f32.mrb[0].mxu0
      %v1237 = vadd.f32 0.0, %v1236
      %v1238 = vpop.f32.mrb[0].mxu0
      %v1239 = vadd.f32 0.0, %v1238
      %1240 = vmatprep.mubr.bf16.mxu0 0
      %1241 = vmatmul.mubr.bf16.gmra.mrb[0].mxu0 %v1138
      %v1242 = vpop.f32.mrb[0].mxu0
      %v1243 = vadd.f32 0.0, %v1242
      %v1244 = vpop.f32.mrb[0].mxu0
      %v1245 = vadd.f32 0.0, %v1244
      %v1246 = vpop.f32.mrb[0].mxu0
      %v1247 = vadd.f32 0.0, %v1246
      %v1248 = vpop.f32.mrb[0].mxu0
      %v1249 = vadd.f32 0.0, %v1248
      %1250 = vmatprep.mubr.bf16.mxu0 0
      %1251 = vmatmul.mubr.bf16.gmra.mrb[0].mxu0 %v1141
      %v1252 = vpop.f32.mrb[0].mxu0
      %v1253 = vadd.f32 0.0, %v1252
      %v1254 = vpop.f32.mrb[0].mxu0
      %v1255 = vadd.f32 0.0, %v1254
      %v1256 = vpop.f32.mrb[0].mxu0
      %v1257 = vadd.f32 0.0, %v1256
      %v1258 = vpop.f32.mrb[0].mxu0
      %v1259 = vadd.f32 0.0, %v1258
      %1260 = vmatprep.mubr.bf16.mxu0 0
      %1261 = vmatmul.mubr.bf16.gmra.mrb[0].mxu0 %v1144
      %v1262 = vpop.f32.mrb[0].mxu0
      %v1263 = vadd.f32 0.0, %v1262
      %v1264 = vpop.f32.mrb[0].mxu0
      %v1265 = vadd.f32 0.0, %v1264
      %v1266 = vpop.f32.mrb[0].mxu0
      %v1267 = vadd.f32 0.0, %v1266
      %v1268 = vpop.f32.mrb[0].mxu0
      %v1269 = vadd.f32 0.0, %v1268
      %1270 = vdwg.mxu0
      %1271 = vmatprep.subr.bf16.mxu0 %v1113
      %1272 = vmatpush1.bf16.msra.mxu0 %v1112
      %1273 = vmatprep.subr.bf16.mxu0 %v1156
      %1274 = vmatpush1.bf16.msra.mxu0 %v1153
      %1275 = vmatprep.subr.bf16.mxu0 0
      %1276 = vmatpush1.bf16.msra.mxu0 0
      %1277 = vmatprep.subr.bf16.mxu0 0
      %1278 = vmatpush1.bf16.msra.mxu0 0
      %1279 = vmatprep.subr.bf16.mxu0 0
      %1280 = vmatpush1.bf16.msra.mxu0 0
      %1281 = vmatprep.subr.bf16.mxu0 0
      %1282 = vmatpush1.bf16.msra.mxu0 0
      %1283 = vmatprep.subr.bf16.mxu0 0
      %1284 = vmatpush1.bf16.msra.mxu0 0
      %1285 = vmatprep.subr.bf16.mxu0 0
      %1286 = vmatpush1.bf16.msra.mxu0 0
      %1287 = vmatprep.subr.bf16.mxu0 0
      %1288 = vmatpush1.bf16.msra.mxu0 0
      %1289 = vmatprep.subr.bf16.mxu0 0
      %1290 = vmatpush1.bf16.msra.mxu0 0
      %1291 = vmatprep.subr.bf16.mxu0 0
      %1292 = vmatpush1.bf16.msra.mxu0 0
      %1293 = vmatprep.subr.bf16.mxu0 0
      %1294 = vmatpush1.bf16.msra.mxu0 0
      %1295 = vmatprep.subr.bf16.mxu0 0
      %1296 = vmatpush1.bf16.msra.mxu0 0
      %1297 = vmatprep.subr.bf16.mxu0 0
      %1298 = vmatpush1.bf16.msra.mxu0 0
      %1299 = vmatprep.subr.bf16.mxu0 0
      %1300 = vmatpush1.bf16.msra.mxu0 0
      %1301 = vmatprep.subr.bf16.mxu0 0
      %1302 = vmatpush1.bf16.msra.mxu0 0
      %1303 = vmatprep.mubr.bf16.mxu0 0
      %1304 = vmatmul.mubr.bf16.gmra.mrb[0].mxu0 %v1123
      %v1305 = vpop.f32.mrb[0].mxu0
      %v1306 = vadd.f32 0.0, %v1305
      %v1307 = vpop.f32.mrb[0].mxu0
      %v1308 = vadd.f32 0.0, %v1307
      %v1309 = vpop.f32.mrb[0].mxu0
      %v1310 = vadd.f32 0.0, %v1309
      %v1311 = vpop.f32.mrb[0].mxu0
      %v1312 = vadd.f32 0.0, %v1311
      %1313 = vmatprep.mubr.bf16.mxu0 0
      %1314 = vmatmul.mubr.bf16.gmra.mrb[0].mxu0 %v1126
      %v1315 = vpop.f32.mrb[0].mxu0
      %v1316 = vadd.f32 0.0, %v1315
      %v1317 = vpop.f32.mrb[0].mxu0
      %v1318 = vadd.f32 0.0, %v1317
      %v1319 = vpop.f32.mrb[0].mxu0
      %v1320 = vadd.f32 0.0, %v1319
      %v1321 = vpop.f32.mrb[0].mxu0
      %v1322 = vadd.f32 0.0, %v1321
      %1323 = vmatprep.mubr.bf16.mxu0 0
      %1324 = vmatmul.mubr.bf16.gmra.mrb[0].mxu0 %v1129
      %v1325 = vpop.f32.mrb[0].mxu0
      %v1326 = vadd.f32 0.0, %v1325
      %v1327 = vpop.f32.mrb[0].mxu0
      %v1328 = vadd.f32 0.0, %v1327
      %v1329 = vpop.f32.mrb[0].mxu0
      %v1330 = vadd.f32 0.0, %v1329
      %v1331 = vpop.f32.mrb[0].mxu0
      %v1332 = vadd.f32 0.0, %v1331
      %1333 = vmatprep.mubr.bf16.mxu0 0
      %1334 = vmatmul.mubr.bf16.gmra.mrb[0].mxu0 %v1132
      %v1335 = vpop.f32.mrb[0].mxu0
      %v1336 = vadd.f32 0.0, %v1335
      %v1337 = vpop.f32.mrb[0].mxu0
      %v1338 = vadd.f32 0.0, %v1337
      %v1339 = vpop.f32.mrb[0].mxu0
      %v1340 = vadd.f32 0.0, %v1339
      %v1341 = vpop.f32.mrb[0].mxu0
      %v1342 = vadd.f32 0.0, %v1341
      %1343 = vmatprep.mubr.bf16.mxu0 0
      %1344 = vmatmul.mubr.bf16.gmra.mrb[0].mxu0 %v1135
      %v1345 = vpop.f32.mrb[0].mxu0
      %v1346 = vadd.f32 0.0, %v1345
      %v1347 = vpop.f32.mrb[0].mxu0
      %v1348 = vadd.f32 0.0, %v1347
      %v1349 = vpop.f32.mrb[0].mxu0
      %v1350 = vadd.f32 0.0, %v1349
      %v1351 = vpop.f32.mrb[0].mxu0
      %v1352 = vadd.f32 0.0, %v1351
      %1353 = vmatprep.mubr.bf16.mxu0 0
      %1354 = vmatmul.mubr.bf16.gmra.mrb[0].mxu0 %v1138
      %v1355 = vpop.f32.mrb[0].mxu0
      %v1356 = vadd.f32 0.0, %v1355
      %v1357 = vpop.f32.mrb[0].mxu0
      %v1358 = vadd.f32 0.0, %v1357
      %v1359 = vpop.f32.mrb[0].mxu0
      %v1360 = vadd.f32 0.0, %v1359
      %v1361 = vpop.f32.mrb[0].mxu0
      %v1362 = vadd.f32 0.0, %v1361
      %1363 = vmatprep.mubr.bf16.mxu0 0
      %1364 = vmatmul.mubr.bf16.gmra.mrb[0].mxu0 %v1141
      %v1365 = vpop.f32.mrb[0].mxu0
      %v1366 = vadd.f32 0.0, %v1365
      %v1367 = vpop.f32.mrb[0].mxu0
      %v1368 = vadd.f32 0.0, %v1367
      %v1369 = vpop.f32.mrb[0].mxu0
      %v1370 = vadd.f32 0.0, %v1369
      %v1371 = vpop.f32.mrb[0].mxu0
      %v1372 = vadd.f32 0.0, %v1371
      %1373 = vmatprep.mubr.bf16.mxu0 0
      %1374 = vmatmul.mubr.bf16.gmra.mrb[0].mxu0 %v1144
      %v1375 = vpop.f32.mrb[0].mxu0
      %v1376 = vadd.f32 0.0, %v1375
      %v1377 = vpop.f32.mrb[0].mxu0
      %v1378 = vadd.f32 0.0, %v1377
      %v1379 = vpop.f32.mrb[0].mxu0
      %v1380 = vadd.f32 0.0, %v1379
      %v1381 = vpop.f32.mrb[0].mxu0
      %v1382 = vadd.f32 0.0, %v1381
      %1383 = vdwg.mxu0
      %v1384 = vadd.f32 %v887, %v1193
      %v1385 = vadd.f32 %v889, %v1195
      %v1386 = vadd.f32 %v1000, %v1306
      %v1387 = vadd.f32 %v1002, %v1308
      %v1388 = vadd.f32 %v891, %v1197
      %v1389 = vadd.f32 %v893, %v1199
      %v1390 = vadd.f32 %v1004, %v1310
      %v1391 = vadd.f32 %v1006, %v1312
      %v1392 = vadd.f32 %v897, %v1203
      %v1393 = vadd.f32 %v899, %v1205
      %v1394 = vadd.f32 %v1010, %v1316
      %v1395 = vadd.f32 %v1012, %v1318
      %v1396 = vadd.f32 %v901, %v1207
      %v1397 = vadd.f32 %v903, %v1209
      %v1398 = vadd.f32 %v1014, %v1320
      %v1399 = vadd.f32 %v1016, %v1322
      %v1400 = vadd.f32 %v907, %v1213
      %v1401 = vadd.f32 %v909, %v1215
      %v1402 = vadd.f32 %v1020, %v1326
      %v1403 = vadd.f32 %v1022, %v1328
      %v1404 = vadd.f32 %v911, %v1217
      %v1405 = vadd.f32 %v913, %v1219
      %v1406 = vadd.f32 %v1024, %v1330
      %v1407 = vadd.f32 %v1026, %v1332
      %v1408 = vadd.f32 %v917, %v1223
      %v1409 = vadd.f32 %v919, %v1225
      %v1410 = vadd.f32 %v1030, %v1336
      %v1411 = vadd.f32 %v1032, %v1338
      %v1412 = vadd.f32 %v921, %v1227
      %v1413 = vadd.f32 %v923, %v1229
      %v1414 = vadd.f32 %v1034, %v1340
      %v1415 = vadd.f32 %v1036, %v1342
      %v1416 = vadd.f32 %v927, %v1233
      %v1417 = vadd.f32 %v929, %v1235
      %v1418 = vadd.f32 %v1040, %v1346
      %v1419 = vadd.f32 %v1042, %v1348
      %v1420 = vadd.f32 %v931, %v1237
      %v1421 = vadd.f32 %v933, %v1239
      %v1422 = vadd.f32 %v1044, %v1350
      %v1423 = vadd.f32 %v1046, %v1352
      %v1424 = vadd.f32 %v937, %v1243
      %v1425 = vadd.f32 %v939, %v1245
      %v1426 = vadd.f32 %v1050, %v1356
      %v1427 = vadd.f32 %v1052, %v1358
      %v1428 = vadd.f32 %v941, %v1247
      %v1429 = vadd.f32 %v943, %v1249
      %v1430 = vadd.f32 %v1054, %v1360
      %v1431 = vadd.f32 %v1056, %v1362
      %v1432 = vadd.f32 %v947, %v1253
      %v1433 = vadd.f32 %v949, %v1255
      %v1434 = vadd.f32 %v1060, %v1366
      %v1435 = vadd.f32 %v1062, %v1368
      %v1436 = vadd.f32 %v951, %v1257
      %v1437 = vadd.f32 %v953, %v1259
      %v1438 = vadd.f32 %v1064, %v1370
      %v1439 = vadd.f32 %v1066, %v1372
      %v1440 = vadd.f32 %v957, %v1263
      %v1441 = vadd.f32 %v959, %v1265
      %v1442 = vadd.f32 %v1070, %v1376
      %v1443 = vadd.f32 %v1072, %v1378
      %v1444 = vadd.f32 %v961, %v1267
      %v1445 = vadd.f32 %v963, %v1269
      %v1446 = vadd.f32 %v1074, %v1380
      %v1447 = vadd.f32 %v1076, %v1382
      %v1448 = vld [vmem:[%s6] sm:$0xf]
      %v1450 = vlaneseq
      %v1451 = vshrl.u32 %v1450, 7
      %v1452 = vsub.s32 0, %v1451
      %v1453 = vrot.slane %v1448, %v1452
      %v1454 = vlaneseq
      %v1455 = vshrl.u32 %v1454, 7
      %v1456 = vsub.s32 1, %v1455
      %v1457 = vrot.slane %v1448, %v1456
      %v1458 = vlaneseq
      %v1459 = vshrl.u32 %v1458, 7
      %v1460 = vsub.s32 2, %v1459
      %v1461 = vrot.slane %v1448, %v1460
      %v1462 = vlaneseq
      %v1463 = vshrl.u32 %v1462, 7
      %v1464 = vsub.s32 3, %v1463
      %v1465 = vrot.slane %v1448, %v1464
      %v1470 = vadd.f32 %v1384, %v1453
      %v1471 = vadd.f32 %v1385, %v1457
      %v1472 = vadd.f32 %v1386, %v1461
      %v1473 = vadd.f32 %v1387, %v1465
      %v1474 = vadd.f32 %v1388, %v1453
      %v1475 = vadd.f32 %v1389, %v1457
      %v1476 = vadd.f32 %v1390, %v1461
      %v1477 = vadd.f32 %v1391, %v1465
      %v1478 = vadd.f32 %v1392, %v1453
      %v1479 = vadd.f32 %v1393, %v1457
      %v1480 = vadd.f32 %v1394, %v1461
      %v1481 = vadd.f32 %v1395, %v1465
      %v1482 = vadd.f32 %v1396, %v1453
      %v1483 = vadd.f32 %v1397, %v1457
      %v1484 = vadd.f32 %v1398, %v1461
      %v1485 = vadd.f32 %v1399, %v1465
      %v1486 = vadd.f32 %v1400, %v1453
      %v1487 = vadd.f32 %v1401, %v1457
      %v1488 = vadd.f32 %v1402, %v1461
      %v1489 = vadd.f32 %v1403, %v1465
      %v1490 = vadd.f32 %v1404, %v1453
      %v1491 = vadd.f32 %v1405, %v1457
      %v1492 = vadd.f32 %v1406, %v1461
      %v1493 = vadd.f32 %v1407, %v1465
      %v1494 = vadd.f32 %v1408, %v1453
      %v1495 = vadd.f32 %v1409, %v1457
      %v1496 = vadd.f32 %v1410, %v1461
      %v1497 = vadd.f32 %v1411, %v1465
      %v1498 = vadd.f32 %v1412, %v1453
      %v1499 = vadd.f32 %v1413, %v1457
      %v1500 = vadd.f32 %v1414, %v1461
      %v1501 = vadd.f32 %v1415, %v1465
      %v1502 = vadd.f32 %v1416, %v1453
      %v1503 = vadd.f32 %v1417, %v1457
      %v1504 = vadd.f32 %v1418, %v1461
      %v1505 = vadd.f32 %v1419, %v1465
      %v1506 = vadd.f32 %v1420, %v1453
      %v1507 = vadd.f32 %v1421, %v1457
      %v1508 = vadd.f32 %v1422, %v1461
      %v1509 = vadd.f32 %v1423, %v1465
      %v1510 = vadd.f32 %v1424, %v1453
      %v1511 = vadd.f32 %v1425, %v1457
      %v1512 = vadd.f32 %v1426, %v1461
      %v1513 = vadd.f32 %v1427, %v1465
      %v1514 = vadd.f32 %v1428, %v1453
      %v1515 = vadd.f32 %v1429, %v1457
      %v1516 = vadd.f32 %v1430, %v1461
      %v1517 = vadd.f32 %v1431, %v1465
      %v1518 = vadd.f32 %v1432, %v1453
      %v1519 = vadd.f32 %v1433, %v1457
      %v1520 = vadd.f32 %v1434, %v1461
      %v1521 = vadd.f32 %v1435, %v1465
      %v1522 = vadd.f32 %v1436, %v1453
      %v1523 = vadd.f32 %v1437, %v1457
      %v1524 = vadd.f32 %v1438, %v1461
      %v1525 = vadd.f32 %v1439, %v1465
      %v1526 = vadd.f32 %v1440, %v1453
      %v1527 = vadd.f32 %v1441, %v1457
      %v1528 = vadd.f32 %v1442, %v1461
      %v1529 = vadd.f32 %v1443, %v1465
      %v1530 = vadd.f32 %v1444, %v1453
      %v1531 = vadd.f32 %v1445, %v1457
      %v1532 = vadd.f32 %v1446, %v1461
      %v1533 = vadd.f32 %v1447, %v1465
      %v1534 = vmul.f32 %v1470, 0.01
      %v1535 = vmul.f32 %v1471, 0.01
      %v1536 = vmul.f32 %v1472, 0.01
      %v1537 = vmul.f32 %v1473, 0.01
      %v1538 = vmul.f32 %v1474, 0.01
      %v1539 = vmul.f32 %v1475, 0.01
      %v1540 = vmul.f32 %v1476, 0.01
      %v1541 = vmul.f32 %v1477, 0.01
      %v1542 = vmul.f32 %v1478, 0.01
      %v1543 = vmul.f32 %v1479, 0.01
      %v1544 = vmul.f32 %v1480, 0.01
      %v1545 = vmul.f32 %v1481, 0.01
      %v1546 = vmul.f32 %v1482, 0.01
      %v1547 = vmul.f32 %v1483, 0.01
      %v1548 = vmul.f32 %v1484, 0.01
      %v1549 = vmul.f32 %v1485, 0.01
      %v1550 = vmul.f32 %v1486, 0.01
      %v1551 = vmul.f32 %v1487, 0.01
      %v1552 = vmul.f32 %v1488, 0.01
      %v1553 = vmul.f32 %v1489, 0.01
      %v1554 = vmul.f32 %v1490, 0.01
      %v1555 = vmul.f32 %v1491, 0.01
      %v1556 = vmul.f32 %v1492, 0.01
      %v1557 = vmul.f32 %v1493, 0.01
      %v1558 = vmul.f32 %v1494, 0.01
      %v1559 = vmul.f32 %v1495, 0.01
      %v1560 = vmul.f32 %v1496, 0.01
      %v1561 = vmul.f32 %v1497, 0.01
      %v1562 = vmul.f32 %v1498, 0.01
      %v1563 = vmul.f32 %v1499, 0.01
      %v1564 = vmul.f32 %v1500, 0.01
      %v1565 = vmul.f32 %v1501, 0.01
      %v1566 = vmul.f32 %v1502, 0.01
      %v1567 = vmul.f32 %v1503, 0.01
      %v1568 = vmul.f32 %v1504, 0.01
      %v1569 = vmul.f32 %v1505, 0.01
      %v1570 = vmul.f32 %v1506, 0.01
      %v1571 = vmul.f32 %v1507, 0.01
      %v1572 = vmul.f32 %v1508, 0.01
      %v1573 = vmul.f32 %v1509, 0.01
      %v1574 = vmul.f32 %v1510, 0.01
      %v1575 = vmul.f32 %v1511, 0.01
      %v1576 = vmul.f32 %v1512, 0.01
      %v1577 = vmul.f32 %v1513, 0.01
      %v1578 = vmul.f32 %v1514, 0.01
      %v1579 = vmul.f32 %v1515, 0.01
      %v1580 = vmul.f32 %v1516, 0.01
      %v1581 = vmul.f32 %v1517, 0.01
      %v1582 = vmul.f32 %v1518, 0.01
      %v1583 = vmul.f32 %v1519, 0.01
      %v1584 = vmul.f32 %v1520, 0.01
      %v1585 = vmul.f32 %v1521, 0.01
      %v1586 = vmul.f32 %v1522, 0.01
      %v1587 = vmul.f32 %v1523, 0.01
      %v1588 = vmul.f32 %v1524, 0.01
      %v1589 = vmul.f32 %v1525, 0.01
      %v1590 = vmul.f32 %v1526, 0.01
      %v1591 = vmul.f32 %v1527, 0.01
      %v1592 = vmul.f32 %v1528, 0.01
      %v1593 = vmul.f32 %v1529, 0.01
      %v1594 = vmul.f32 %v1530, 0.01
      %v1595 = vmul.f32 %v1531, 0.01
      %v1596 = vmul.f32 %v1532, 0.01
      %v1597 = vmul.f32 %v1533, 0.01
      %v1598 = vmax.f32 %v1470, %v1534
      %v1599 = vmax.f32 %v1471, %v1535
      %v1600 = vmax.f32 %v1472, %v1536
      %v1601 = vmax.f32 %v1473, %v1537
      %v1602 = vmax.f32 %v1474, %v1538
      %v1603 = vmax.f32 %v1475, %v1539
      %v1604 = vmax.f32 %v1476, %v1540
      %v1605 = vmax.f32 %v1477, %v1541
      %v1606 = vmax.f32 %v1478, %v1542
      %v1607 = vmax.f32 %v1479, %v1543
      %v1608 = vmax.f32 %v1480, %v1544
      %v1609 = vmax.f32 %v1481, %v1545
      %v1610 = vmax.f32 %v1482, %v1546
      %v1611 = vmax.f32 %v1483, %v1547
      %v1612 = vmax.f32 %v1484, %v1548
      %v1613 = vmax.f32 %v1485, %v1549
      %v1614 = vmax.f32 %v1486, %v1550
      %v1615 = vmax.f32 %v1487, %v1551
      %v1616 = vmax.f32 %v1488, %v1552
      %v1617 = vmax.f32 %v1489, %v1553
      %v1618 = vmax.f32 %v1490, %v1554
      %v1619 = vmax.f32 %v1491, %v1555
      %v1620 = vmax.f32 %v1492, %v1556
      %v1621 = vmax.f32 %v1493, %v1557
      %v1622 = vmax.f32 %v1494, %v1558
      %v1623 = vmax.f32 %v1495, %v1559
      %v1624 = vmax.f32 %v1496, %v1560
      %v1625 = vmax.f32 %v1497, %v1561
      %v1626 = vmax.f32 %v1498, %v1562
      %v1627 = vmax.f32 %v1499, %v1563
      %v1628 = vmax.f32 %v1500, %v1564
      %v1629 = vmax.f32 %v1501, %v1565
      %v1630 = vmax.f32 %v1502, %v1566
      %v1631 = vmax.f32 %v1503, %v1567
      %v1632 = vmax.f32 %v1504, %v1568
      %v1633 = vmax.f32 %v1505, %v1569
      %v1634 = vmax.f32 %v1506, %v1570
      %v1635 = vmax.f32 %v1507, %v1571
      %v1636 = vmax.f32 %v1508, %v1572
      %v1637 = vmax.f32 %v1509, %v1573
      %v1638 = vmax.f32 %v1510, %v1574
      %v1639 = vmax.f32 %v1511, %v1575
      %v1640 = vmax.f32 %v1512, %v1576
      %v1641 = vmax.f32 %v1513, %v1577
      %v1642 = vmax.f32 %v1514, %v1578
      %v1643 = vmax.f32 %v1515, %v1579
      %v1644 = vmax.f32 %v1516, %v1580
      %v1645 = vmax.f32 %v1517, %v1581
      %v1646 = vmax.f32 %v1518, %v1582
      %v1647 = vmax.f32 %v1519, %v1583
      %v1648 = vmax.f32 %v1520, %v1584
      %v1649 = vmax.f32 %v1521, %v1585
      %v1650 = vmax.f32 %v1522, %v1586
      %v1651 = vmax.f32 %v1523, %v1587
      %v1652 = vmax.f32 %v1524, %v1588
      %v1653 = vmax.f32 %v1525, %v1589
      %v1654 = vmax.f32 %v1526, %v1590
      %v1655 = vmax.f32 %v1527, %v1591
      %v1656 = vmax.f32 %v1528, %v1592
      %v1657 = vmax.f32 %v1529, %v1593
      %v1658 = vmax.f32 %v1530, %v1594
      %v1659 = vmax.f32 %v1531, %v1595
      %v1660 = vmax.f32 %v1532, %v1596
      %v1661 = vmax.f32 %v1533, %v1597
      %v1662 = vpack.c.bf16 %v1602, %v1598
      %v1663 = vpack.c.bf16 %v1603, %v1599
      %v1664 = vpack.c.bf16 %v1604, %v1600
      %v1665 = vpack.c.bf16 %v1605, %v1601
      %v1666 = vpack.c.bf16 %v1610, %v1606
      %v1667 = vpack.c.bf16 %v1611, %v1607
      %v1668 = vpack.c.bf16 %v1612, %v1608
      %v1669 = vpack.c.bf16 %v1613, %v1609
      %v1670 = vpack.c.bf16 %v1618, %v1614
      %v1671 = vpack.c.bf16 %v1619, %v1615
      %v1672 = vpack.c.bf16 %v1620, %v1616
      %v1673 = vpack.c.bf16 %v1621, %v1617
      %v1674 = vpack.c.bf16 %v1626, %v1622
      %v1675 = vpack.c.bf16 %v1627, %v1623
      %v1676 = vpack.c.bf16 %v1628, %v1624
      %v1677 = vpack.c.bf16 %v1629, %v1625
      %v1678 = vpack.c.bf16 %v1634, %v1630
      %v1679 = vpack.c.bf16 %v1635, %v1631
      %v1680 = vpack.c.bf16 %v1636, %v1632
      %v1681 = vpack.c.bf16 %v1637, %v1633
      %v1682 = vpack.c.bf16 %v1642, %v1638
      %v1683 = vpack.c.bf16 %v1643, %v1639
      %v1684 = vpack.c.bf16 %v1644, %v1640
      %v1685 = vpack.c.bf16 %v1645, %v1641
      %v1686 = vpack.c.bf16 %v1650, %v1646
      %v1687 = vpack.c.bf16 %v1651, %v1647
      %v1688 = vpack.c.bf16 %v1652, %v1648
      %v1689 = vpack.c.bf16 %v1653, %v1649
      %v1690 = vpack.c.bf16 %v1658, %v1654
      %v1691 = vpack.c.bf16 %v1659, %v1655
      %v1692 = vpack.c.bf16 %v1660, %v1656
      %v1693 = vpack.c.bf16 %v1661, %v1657
      %v1694 = vld [vmem:[%s7] sm:$0xff]
      %v1695 = vld [vmem:[%s7 + $0x8] sm:$0xff]
      %v1696 = vld [vmem:[%s7 + $0x10] sm:$0xff]
      %v1697 = vld [vmem:[%s7 + $0x18] sm:$0xff]
      %v1698 = vld [vmem:[%s7 + $0x20] sm:$0xff]
      %v1699 = vld [vmem:[%s7 + $0x28] sm:$0xff]
      %v1700 = vld [vmem:[%s7 + $0x30] sm:$0xff]
      %v1701 = vld [vmem:[%s7 + $0x38] sm:$0xff]
      %v1702 = vld [vmem:[%s7 + $0x40] sm:$0xff]
      %v1703 = vld [vmem:[%s7 + $0x48] sm:$0xff]
      %v1704 = vld [vmem:[%s7 + $0x50] sm:$0xff]
      %v1705 = vld [vmem:[%s7 + $0x58] sm:$0xff]
      %v1706 = vld [vmem:[%s7 + $0x60] sm:$0xff]
      %v1707 = vld [vmem:[%s7 + $0x68] sm:$0xff]
      %v1708 = vld [vmem:[%s7 + $0x70] sm:$0xff]
      %v1709 = vld [vmem:[%s7 + $0x78] sm:$0xff]
      %v1710 = vld [vmem:[%s7 + $0x80] sm:$0xff]
      %v1711 = vld [vmem:[%s7 + $0x88] sm:$0xff]
      %v1712 = vld [vmem:[%s7 + $0x90] sm:$0xff]
      %v1713 = vld [vmem:[%s7 + $0x98] sm:$0xff]
      %v1714 = vld [vmem:[%s7 + $0xa0] sm:$0xff]
      %v1715 = vld [vmem:[%s7 + $0xa8] sm:$0xff]
      %v1716 = vld [vmem:[%s7 + $0xb0] sm:$0xff]
      %v1717 = vld [vmem:[%s7 + $0xb8] sm:$0xff]
      %v1718 = vld [vmem:[%s7 + $0xc0] sm:$0xff]
      %v1719 = vld [vmem:[%s7 + $0xc8] sm:$0xff]
      %v1720 = vld [vmem:[%s7 + $0xd0] sm:$0xff]
      %v1721 = vld [vmem:[%s7 + $0xd8] sm:$0xff]
      %v1722 = vld [vmem:[%s7 + $0xe0] sm:$0xff]
      %v1723 = vld [vmem:[%s7 + $0xe8] sm:$0xff]
      %v1724 = vld [vmem:[%s7 + $0xf0] sm:$0xff]
      %v1725 = vld [vmem:[%s7 + $0xf8] sm:$0xff]
      %v1726 = vld [vmem:[%s7 + $0x100] sm:$0xff]
      %v1727 = vld [vmem:[%s7 + $0x108] sm:$0xff]
      %v1728 = vld [vmem:[%s7 + $0x110] sm:$0xff]
      %v1729 = vld [vmem:[%s7 + $0x118] sm:$0xff]
      %v1730 = vld [vmem:[%s7 + $0x120] sm:$0xff]
      %v1731 = vld [vmem:[%s7 + $0x128] sm:$0xff]
      %v1732 = vld [vmem:[%s7 + $0x130] sm:$0xff]
      %v1733 = vld [vmem:[%s7 + $0x138] sm:$0xff]
      %v1734 = vld [vmem:[%s7 + $0x140] sm:$0xff]
      %v1735 = vld [vmem:[%s7 + $0x148] sm:$0xff]
      %v1736 = vld [vmem:[%s7 + $0x150] sm:$0xff]
      %v1737 = vld [vmem:[%s7 + $0x158] sm:$0xff]
      %v1738 = vld [vmem:[%s7 + $0x160] sm:$0xff]
      %v1739 = vld [vmem:[%s7 + $0x168] sm:$0xff]
      %v1740 = vld [vmem:[%s7 + $0x170] sm:$0xff]
      %v1741 = vld [vmem:[%s7 + $0x178] sm:$0xff]
      %v1742 = vld [vmem:[%s7 + $0x180] sm:$0xff]
      %v1743 = vld [vmem:[%s7 + $0x188] sm:$0xff]
      %v1744 = vld [vmem:[%s7 + $0x190] sm:$0xff]
      %v1745 = vld [vmem:[%s7 + $0x198] sm:$0xff]
      %v1746 = vld [vmem:[%s7 + $0x1a0] sm:$0xff]
      %v1747 = vld [vmem:[%s7 + $0x1a8] sm:$0xff]
      %v1748 = vld [vmem:[%s7 + $0x1b0] sm:$0xff]
      %v1749 = vld [vmem:[%s7 + $0x1b8] sm:$0xff]
      %v1750 = vld [vmem:[%s7 + $0x1c0] sm:$0xff]
      %v1751 = vld [vmem:[%s7 + $0x1c8] sm:$0xff]
      %v1752 = vld [vmem:[%s7 + $0x1d0] sm:$0xff]
      %v1753 = vld [vmem:[%s7 + $0x1d8] sm:$0xff]
      %v1754 = vld [vmem:[%s7 + $0x1e0] sm:$0xff]
      %v1755 = vld [vmem:[%s7 + $0x1e8] sm:$0xff]
      %v1756 = vld [vmem:[%s7 + $0x1f0] sm:$0xff]
      %v1757 = vld [vmem:[%s7 + $0x1f8] sm:$0xff]
      %v1758 = vld [vmem:[%s7 + $0x200] sm:$0xff]
      %v1759 = vld [vmem:[%s7 + $0x208] sm:$0xff]
      %v1760 = vld [vmem:[%s7 + $0x210] sm:$0xff]
      %v1761 = vld [vmem:[%s7 + $0x218] sm:$0xff]
      %v1762 = vld [vmem:[%s7 + $0x220] sm:$0xff]
      %v1763 = vld [vmem:[%s7 + $0x228] sm:$0xff]
      %v1764 = vld [vmem:[%s7 + $0x230] sm:$0xff]
      %v1765 = vld [vmem:[%s7 + $0x238] sm:$0xff]
      %v1766 = vld [vmem:[%s7 + $0x240] sm:$0xff]
      %v1767 = vld [vmem:[%s7 + $0x248] sm:$0xff]
      %v1768 = vld [vmem:[%s7 + $0x250] sm:$0xff]
      %v1769 = vld [vmem:[%s7 + $0x258] sm:$0xff]
      %v1770 = vld [vmem:[%s7 + $0x260] sm:$0xff]
      %v1771 = vld [vmem:[%s7 + $0x268] sm:$0xff]
      %v1772 = vld [vmem:[%s7 + $0x270] sm:$0xff]
      %v1773 = vld [vmem:[%s7 + $0x278] sm:$0xff]
      %v1774 = vld [vmem:[%s7 + $0x280] sm:$0xff]
      %v1775 = vld [vmem:[%s7 + $0x288] sm:$0xff]
      %v1776 = vld [vmem:[%s7 + $0x290] sm:$0xff]
      %v1777 = vld [vmem:[%s7 + $0x298] sm:$0xff]
      %v1778 = vld [vmem:[%s7 + $0x2a0] sm:$0xff]
      %v1779 = vld [vmem:[%s7 + $0x2a8] sm:$0xff]
      %v1780 = vld [vmem:[%s7 + $0x2b0] sm:$0xff]
      %v1781 = vld [vmem:[%s7 + $0x2b8] sm:$0xff]
      %v1782 = vld [vmem:[%s7 + $0x2c0] sm:$0xff]
      %v1783 = vld [vmem:[%s7 + $0x2c8] sm:$0xff]
      %v1784 = vld [vmem:[%s7 + $0x2d0] sm:$0xff]
      %v1785 = vld [vmem:[%s7 + $0x2d8] sm:$0xff]
      %v1786 = vld [vmem:[%s7 + $0x2e0] sm:$0xff]
      %v1787 = vld [vmem:[%s7 + $0x2e8] sm:$0xff]
      %v1788 = vld [vmem:[%s7 + $0x2f0] sm:$0xff]
      %v1789 = vld [vmem:[%s7 + $0x2f8] sm:$0xff]
      %v1790 = vld [vmem:[%s7 + $0x300] sm:$0xff]
      %v1791 = vld [vmem:[%s7 + $0x308] sm:$0xff]
      %v1792 = vld [vmem:[%s7 + $0x310] sm:$0xff]
      %v1793 = vld [vmem:[%s7 + $0x318] sm:$0xff]
      %v1794 = vld [vmem:[%s7 + $0x320] sm:$0xff]
      %v1795 = vld [vmem:[%s7 + $0x328] sm:$0xff]
      %v1796 = vld [vmem:[%s7 + $0x330] sm:$0xff]
      %v1797 = vld [vmem:[%s7 + $0x338] sm:$0xff]
      %v1798 = vld [vmem:[%s7 + $0x340] sm:$0xff]
      %v1799 = vld [vmem:[%s7 + $0x348] sm:$0xff]
      %v1800 = vld [vmem:[%s7 + $0x350] sm:$0xff]
      %v1801 = vld [vmem:[%s7 + $0x358] sm:$0xff]
      %v1802 = vld [vmem:[%s7 + $0x360] sm:$0xff]
      %v1803 = vld [vmem:[%s7 + $0x368] sm:$0xff]
      %v1804 = vld [vmem:[%s7 + $0x370] sm:$0xff]
      %v1805 = vld [vmem:[%s7 + $0x378] sm:$0xff]
      %v1806 = vld [vmem:[%s7 + $0x380] sm:$0xff]
      %v1807 = vld [vmem:[%s7 + $0x388] sm:$0xff]
      %v1808 = vld [vmem:[%s7 + $0x390] sm:$0xff]
      %v1809 = vld [vmem:[%s7 + $0x398] sm:$0xff]
      %v1810 = vld [vmem:[%s7 + $0x3a0] sm:$0xff]
      %v1811 = vld [vmem:[%s7 + $0x3a8] sm:$0xff]
      %v1812 = vld [vmem:[%s7 + $0x3b0] sm:$0xff]
      %v1813 = vld [vmem:[%s7 + $0x3b8] sm:$0xff]
      %v1814 = vld [vmem:[%s7 + $0x3c0] sm:$0xff]
      %v1815 = vld [vmem:[%s7 + $0x3c8] sm:$0xff]
      %v1816 = vld [vmem:[%s7 + $0x3d0] sm:$0xff]
      %v1817 = vld [vmem:[%s7 + $0x3d8] sm:$0xff]
      %v1818 = vld [vmem:[%s7 + $0x3e0] sm:$0xff]
      %v1819 = vld [vmem:[%s7 + $0x3e8] sm:$0xff]
      %v1820 = vld [vmem:[%s7 + $0x3f0] sm:$0xff]
      %v1821 = vld [vmem:[%s7 + $0x3f8] sm:$0xff]
      %v1822 = vld [vmem:[%s8] sm:$0xf]
      %v1824 = vlaneseq
      %v1825 = vshrl.u32 %v1824, 7
      %v1826 = vsub.s32 0, %v1825
      %v1827 = vrot.slane %v1822, %v1826
      %v1828 = vlaneseq
      %v1829 = vshrl.u32 %v1828, 7
      %v1830 = vsub.s32 1, %v1829
      %v1831 = vrot.slane %v1822, %v1830
      %v1832 = vlaneseq
      %v1833 = vshrl.u32 %v1832, 7
      %v1834 = vsub.s32 2, %v1833
      %v1835 = vrot.slane %v1822, %v1834
      %v1836 = vlaneseq
      %v1837 = vshrl.u32 %v1836, 7
      %v1838 = vsub.s32 3, %v1837
      %v1839 = vrot.slane %v1822, %v1838
      %v1972 = vunpack.c.l.b16 %v1694
      %v1973 = vunpack.c.h.b16 %v1694
      %v1974 = vunpack.c.l.b16 %v1695
      %v1975 = vunpack.c.h.b16 %v1695
      %v1976 = vunpack.c.l.b16 %v1696
      %v1977 = vunpack.c.h.b16 %v1696
      %v1978 = vunpack.c.l.b16 %v1697
      %v1979 = vunpack.c.h.b16 %v1697
      %v1980 = vunpack.c.l.b16 %v1698
      %v1981 = vunpack.c.h.b16 %v1698
      %v1982 = vunpack.c.l.b16 %v1699
      %v1983 = vunpack.c.h.b16 %v1699
      %v1984 = vunpack.c.l.b16 %v1700
      %v1985 = vunpack.c.h.b16 %v1700
      %v1986 = vunpack.c.l.b16 %v1701
      %v1987 = vunpack.c.h.b16 %v1701
      %v1988 = vunpack.c.l.b16 %v1702
      %v1989 = vunpack.c.h.b16 %v1702
      %v1990 = vunpack.c.l.b16 %v1703
      %v1991 = vunpack.c.h.b16 %v1703
      %v1992 = vunpack.c.l.b16 %v1704
      %v1993 = vunpack.c.h.b16 %v1704
      %v1994 = vunpack.c.l.b16 %v1705
      %v1995 = vunpack.c.h.b16 %v1705
      %v1996 = vunpack.c.l.b16 %v1706
      %v1997 = vunpack.c.h.b16 %v1706
      %v1998 = vunpack.c.l.b16 %v1707
      %v1999 = vunpack.c.h.b16 %v1707
      %v2000 = vunpack.c.l.b16 %v1708
      %v2001 = vunpack.c.h.b16 %v1708
      %v2002 = vunpack.c.l.b16 %v1709
      %v2003 = vunpack.c.h.b16 %v1709
      %v2004 = vunpack.c.l.b16 %v1710
      %v2005 = vunpack.c.h.b16 %v1710
      %v2006 = vunpack.c.l.b16 %v1711
      %v2007 = vunpack.c.h.b16 %v1711
      %v2008 = vunpack.c.l.b16 %v1712
      %v2009 = vunpack.c.h.b16 %v1712
      %v2010 = vunpack.c.l.b16 %v1713
      %v2011 = vunpack.c.h.b16 %v1713
      %v2012 = vunpack.c.l.b16 %v1714
      %v2013 = vunpack.c.h.b16 %v1714
      %v2014 = vunpack.c.l.b16 %v1715
      %v2015 = vunpack.c.h.b16 %v1715
      %v2016 = vunpack.c.l.b16 %v1716
      %v2017 = vunpack.c.h.b16 %v1716
      %v2018 = vunpack.c.l.b16 %v1717
      %v2019 = vunpack.c.h.b16 %v1717
      %v2020 = vunpack.c.l.b16 %v1718
      %v2021 = vunpack.c.h.b16 %v1718
      %v2022 = vunpack.c.l.b16 %v1719
      %v2023 = vunpack.c.h.b16 %v1719
      %v2024 = vunpack.c.l.b16 %v1720
      %v2025 = vunpack.c.h.b16 %v1720
      %v2026 = vunpack.c.l.b16 %v1721
      %v2027 = vunpack.c.h.b16 %v1721
      %v2028 = vunpack.c.l.b16 %v1722
      %v2029 = vunpack.c.h.b16 %v1722
      %v2030 = vunpack.c.l.b16 %v1723
      %v2031 = vunpack.c.h.b16 %v1723
      %v2032 = vunpack.c.l.b16 %v1724
      %v2033 = vunpack.c.h.b16 %v1724
      %v2034 = vunpack.c.l.b16 %v1725
      %v2035 = vunpack.c.h.b16 %v1725
      %v2036 = vunpack.c.l.b16 %v1726
      %v2037 = vunpack.c.h.b16 %v1726
      %v2038 = vunpack.c.l.b16 %v1727
      %v2039 = vunpack.c.h.b16 %v1727
      %v2040 = vunpack.c.l.b16 %v1728
      %v2041 = vunpack.c.h.b16 %v1728
      %v2042 = vunpack.c.l.b16 %v1729
      %v2043 = vunpack.c.h.b16 %v1729
      %v2044 = vunpack.c.l.b16 %v1730
      %v2045 = vunpack.c.h.b16 %v1730
      %v2046 = vunpack.c.l.b16 %v1731
      %v2047 = vunpack.c.h.b16 %v1731
      %v2048 = vunpack.c.l.b16 %v1732
      %v2049 = vunpack.c.h.b16 %v1732
      %v2050 = vunpack.c.l.b16 %v1733
      %v2051 = vunpack.c.h.b16 %v1733
      %v2052 = vunpack.c.l.b16 %v1734
      %v2053 = vunpack.c.h.b16 %v1734
      %v2054 = vunpack.c.l.b16 %v1735
      %v2055 = vunpack.c.h.b16 %v1735
      %v2056 = vunpack.c.l.b16 %v1736
      %v2057 = vunpack.c.h.b16 %v1736
      %v2058 = vunpack.c.l.b16 %v1737
      %v2059 = vunpack.c.h.b16 %v1737
      %v2060 = vunpack.c.l.b16 %v1738
      %v2061 = vunpack.c.h.b16 %v1738
      %v2062 = vunpack.c.l.b16 %v1739
      %v2063 = vunpack.c.h.b16 %v1739
      %v2064 = vunpack.c.l.b16 %v1740
      %v2065 = vunpack.c.h.b16 %v1740
      %v2066 = vunpack.c.l.b16 %v1741
      %v2067 = vunpack.c.h.b16 %v1741
      %v2068 = vunpack.c.l.b16 %v1742
      %v2069 = vunpack.c.h.b16 %v1742
      %v2070 = vunpack.c.l.b16 %v1743
      %v2071 = vunpack.c.h.b16 %v1743
      %v2072 = vunpack.c.l.b16 %v1744
      %v2073 = vunpack.c.h.b16 %v1744
      %v2074 = vunpack.c.l.b16 %v1745
      %v2075 = vunpack.c.h.b16 %v1745
      %v2076 = vunpack.c.l.b16 %v1746
      %v2077 = vunpack.c.h.b16 %v1746
      %v2078 = vunpack.c.l.b16 %v1747
      %v2079 = vunpack.c.h.b16 %v1747
      %v2080 = vunpack.c.l.b16 %v1748
      %v2081 = vunpack.c.h.b16 %v1748
      %v2082 = vunpack.c.l.b16 %v1749
      %v2083 = vunpack.c.h.b16 %v1749
      %v2084 = vunpack.c.l.b16 %v1750
      %v2085 = vunpack.c.h.b16 %v1750
      %v2086 = vunpack.c.l.b16 %v1751
      %v2087 = vunpack.c.h.b16 %v1751
      %v2088 = vunpack.c.l.b16 %v1752
      %v2089 = vunpack.c.h.b16 %v1752
      %v2090 = vunpack.c.l.b16 %v1753
      %v2091 = vunpack.c.h.b16 %v1753
      %v2092 = vunpack.c.l.b16 %v1754
      %v2093 = vunpack.c.h.b16 %v1754
      %v2094 = vunpack.c.l.b16 %v1755
      %v2095 = vunpack.c.h.b16 %v1755
      %v2096 = vunpack.c.l.b16 %v1756
      %v2097 = vunpack.c.h.b16 %v1756
      %v2098 = vunpack.c.l.b16 %v1757
      %v2099 = vunpack.c.h.b16 %v1757
      %v2100 = vunpack.c.l.b16 %v1758
      %v2101 = vunpack.c.h.b16 %v1758
      %v2102 = vunpack.c.l.b16 %v1759
      %v2103 = vunpack.c.h.b16 %v1759
      %v2104 = vunpack.c.l.b16 %v1760
      %v2105 = vunpack.c.h.b16 %v1760
      %v2106 = vunpack.c.l.b16 %v1761
      %v2107 = vunpack.c.h.b16 %v1761
      %v2108 = vunpack.c.l.b16 %v1762
      %v2109 = vunpack.c.h.b16 %v1762
      %v2110 = vunpack.c.l.b16 %v1763
      %v2111 = vunpack.c.h.b16 %v1763
      %v2112 = vunpack.c.l.b16 %v1764
      %v2113 = vunpack.c.h.b16 %v1764
      %v2114 = vunpack.c.l.b16 %v1765
      %v2115 = vunpack.c.h.b16 %v1765
      %v2116 = vunpack.c.l.b16 %v1766
      %v2117 = vunpack.c.h.b16 %v1766
      %v2118 = vunpack.c.l.b16 %v1767
      %v2119 = vunpack.c.h.b16 %v1767
      %v2120 = vunpack.c.l.b16 %v1768
      %v2121 = vunpack.c.h.b16 %v1768
      %v2122 = vunpack.c.l.b16 %v1769
      %v2123 = vunpack.c.h.b16 %v1769
      %v2124 = vunpack.c.l.b16 %v1770
      %v2125 = vunpack.c.h.b16 %v1770
      %v2126 = vunpack.c.l.b16 %v1771
      %v2127 = vunpack.c.h.b16 %v1771
      %v2128 = vunpack.c.l.b16 %v1772
      %v2129 = vunpack.c.h.b16 %v1772
      %v2130 = vunpack.c.l.b16 %v1773
      %v2131 = vunpack.c.h.b16 %v1773
      %v2132 = vunpack.c.l.b16 %v1774
      %v2133 = vunpack.c.h.b16 %v1774
      %v2134 = vunpack.c.l.b16 %v1775
      %v2135 = vunpack.c.h.b16 %v1775
      %v2136 = vunpack.c.l.b16 %v1776
      %v2137 = vunpack.c.h.b16 %v1776
      %v2138 = vunpack.c.l.b16 %v1777
      %v2139 = vunpack.c.h.b16 %v1777
      %v2140 = vunpack.c.l.b16 %v1778
      %v2141 = vunpack.c.h.b16 %v1778
      %v2142 = vunpack.c.l.b16 %v1779
      %v2143 = vunpack.c.h.b16 %v1779
      %v2144 = vunpack.c.l.b16 %v1780
      %v2145 = vunpack.c.h.b16 %v1780
      %v2146 = vunpack.c.l.b16 %v1781
      %v2147 = vunpack.c.h.b16 %v1781
      %v2148 = vunpack.c.l.b16 %v1782
      %v2149 = vunpack.c.h.b16 %v1782
      %v2150 = vunpack.c.l.b16 %v1783
      %v2151 = vunpack.c.h.b16 %v1783
      %v2152 = vunpack.c.l.b16 %v1784
      %v2153 = vunpack.c.h.b16 %v1784
      %v2154 = vunpack.c.l.b16 %v1785
      %v2155 = vunpack.c.h.b16 %v1785
      %v2156 = vunpack.c.l.b16 %v1786
      %v2157 = vunpack.c.h.b16 %v1786
      %v2158 = vunpack.c.l.b16 %v1787
      %v2159 = vunpack.c.h.b16 %v1787
      %v2160 = vunpack.c.l.b16 %v1788
      %v2161 = vunpack.c.h.b16 %v1788
      %v2162 = vunpack.c.l.b16 %v1789
      %v2163 = vunpack.c.h.b16 %v1789
      %v2164 = vunpack.c.l.b16 %v1790
      %v2165 = vunpack.c.h.b16 %v1790
      %v2166 = vunpack.c.l.b16 %v1791
      %v2167 = vunpack.c.h.b16 %v1791
      %v2168 = vunpack.c.l.b16 %v1792
      %v2169 = vunpack.c.h.b16 %v1792
      %v2170 = vunpack.c.l.b16 %v1793
      %v2171 = vunpack.c.h.b16 %v1793
      %v2172 = vunpack.c.l.b16 %v1794
      %v2173 = vunpack.c.h.b16 %v1794
      %v2174 = vunpack.c.l.b16 %v1795
      %v2175 = vunpack.c.h.b16 %v1795
      %v2176 = vunpack.c.l.b16 %v1796
      %v2177 = vunpack.c.h.b16 %v1796
      %v2178 = vunpack.c.l.b16 %v1797
      %v2179 = vunpack.c.h.b16 %v1797
      %v2180 = vunpack.c.l.b16 %v1798
      %v2181 = vunpack.c.h.b16 %v1798
      %v2182 = vunpack.c.l.b16 %v1799
      %v2183 = vunpack.c.h.b16 %v1799
      %v2184 = vunpack.c.l.b16 %v1800
      %v2185 = vunpack.c.h.b16 %v1800
      %v2186 = vunpack.c.l.b16 %v1801
      %v2187 = vunpack.c.h.b16 %v1801
      %v2188 = vunpack.c.l.b16 %v1802
      %v2189 = vunpack.c.h.b16 %v1802
      %v2190 = vunpack.c.l.b16 %v1803
      %v2191 = vunpack.c.h.b16 %v1803
      %v2192 = vunpack.c.l.b16 %v1804
      %v2193 = vunpack.c.h.b16 %v1804
      %v2194 = vunpack.c.l.b16 %v1805
      %v2195 = vunpack.c.h.b16 %v1805
      %v2196 = vunpack.c.l.b16 %v1806
      %v2197 = vunpack.c.h.b16 %v1806
      %v2198 = vunpack.c.l.b16 %v1807
      %v2199 = vunpack.c.h.b16 %v1807
      %v2200 = vunpack.c.l.b16 %v1808
      %v2201 = vunpack.c.h.b16 %v1808
      %v2202 = vunpack.c.l.b16 %v1809
      %v2203 = vunpack.c.h.b16 %v1809
      %v2204 = vunpack.c.l.b16 %v1810
      %v2205 = vunpack.c.h.b16 %v1810
      %v2206 = vunpack.c.l.b16 %v1811
      %v2207 = vunpack.c.h.b16 %v1811
      %v2208 = vunpack.c.l.b16 %v1812
      %v2209 = vunpack.c.h.b16 %v1812
      %v2210 = vunpack.c.l.b16 %v1813
      %v2211 = vunpack.c.h.b16 %v1813
      %v2212 = vunpack.c.l.b16 %v1814
      %v2213 = vunpack.c.h.b16 %v1814
      %v2214 = vunpack.c.l.b16 %v1815
      %v2215 = vunpack.c.h.b16 %v1815
      %v2216 = vunpack.c.l.b16 %v1816
      %v2217 = vunpack.c.h.b16 %v1816
      %v2218 = vunpack.c.l.b16 %v1817
      %v2219 = vunpack.c.h.b16 %v1817
      %v2220 = vunpack.c.l.b16 %v1818
      %v2221 = vunpack.c.h.b16 %v1818
      %v2222 = vunpack.c.l.b16 %v1819
      %v2223 = vunpack.c.h.b16 %v1819
      %v2224 = vunpack.c.l.b16 %v1820
      %v2225 = vunpack.c.h.b16 %v1820
      %v2226 = vunpack.c.l.b16 %v1821
      %v2227 = vunpack.c.h.b16 %v1821
      %v2228 = vpack.c.b16 %v1976, %v1972
      %v2229 = vpack.c.b16 %v1977, %v1973
      %v2230 = vpack.c.b16 %v1978, %v1974
      %v2231 = vpack.c.b16 %v1979, %v1975
      %v2232 = vpack.c.b16 %v1984, %v1980
      %v2233 = vpack.c.b16 %v1985, %v1981
      %v2234 = vpack.c.b16 %v1986, %v1982
      %v2235 = vpack.c.b16 %v1987, %v1983
      %v2236 = vpack.c.b16 %v1992, %v1988
      %v2237 = vpack.c.b16 %v1993, %v1989
      %v2238 = vpack.c.b16 %v1994, %v1990
      %v2239 = vpack.c.b16 %v1995, %v1991
      %v2240 = vpack.c.b16 %v2000, %v1996
      %v2241 = vpack.c.b16 %v2001, %v1997
      %v2242 = vpack.c.b16 %v2002, %v1998
      %v2243 = vpack.c.b16 %v2003, %v1999
      %v2244 = vpack.c.b16 %v2008, %v2004
      %v2245 = vpack.c.b16 %v2009, %v2005
      %v2246 = vpack.c.b16 %v2010, %v2006
      %v2247 = vpack.c.b16 %v2011, %v2007
      %v2248 = vpack.c.b16 %v2016, %v2012
      %v2249 = vpack.c.b16 %v2017, %v2013
      %v2250 = vpack.c.b16 %v2018, %v2014
      %v2251 = vpack.c.b16 %v2019, %v2015
      %v2252 = vpack.c.b16 %v2024, %v2020
      %v2253 = vpack.c.b16 %v2025, %v2021
      %v2254 = vpack.c.b16 %v2026, %v2022
      %v2255 = vpack.c.b16 %v2027, %v2023
      %v2256 = vpack.c.b16 %v2032, %v2028
      %v2257 = vpack.c.b16 %v2033, %v2029
      %v2258 = vpack.c.b16 %v2034, %v2030
      %v2259 = vpack.c.b16 %v2035, %v2031
      %v2260 = vpack.c.b16 %v2040, %v2036
      %v2261 = vpack.c.b16 %v2041, %v2037
      %v2262 = vpack.c.b16 %v2042, %v2038
      %v2263 = vpack.c.b16 %v2043, %v2039
      %v2264 = vpack.c.b16 %v2048, %v2044
      %v2265 = vpack.c.b16 %v2049, %v2045
      %v2266 = vpack.c.b16 %v2050, %v2046
      %v2267 = vpack.c.b16 %v2051, %v2047
      %v2268 = vpack.c.b16 %v2056, %v2052
      %v2269 = vpack.c.b16 %v2057, %v2053
      %v2270 = vpack.c.b16 %v2058, %v2054
      %v2271 = vpack.c.b16 %v2059, %v2055
      %v2272 = vpack.c.b16 %v2064, %v2060
      %v2273 = vpack.c.b16 %v2065, %v2061
      %v2274 = vpack.c.b16 %v2066, %v2062
      %v2275 = vpack.c.b16 %v2067, %v2063
      %v2276 = vpack.c.b16 %v2072, %v2068
      %v2277 = vpack.c.b16 %v2073, %v2069
      %v2278 = vpack.c.b16 %v2074, %v2070
      %v2279 = vpack.c.b16 %v2075, %v2071
      %v2280 = vpack.c.b16 %v2080, %v2076
      %v2281 = vpack.c.b16 %v2081, %v2077
      %v2282 = vpack.c.b16 %v2082, %v2078
      %v2283 = vpack.c.b16 %v2083, %v2079
      %v2284 = vpack.c.b16 %v2088, %v2084
      %v2285 = vpack.c.b16 %v2089, %v2085
      %v2286 = vpack.c.b16 %v2090, %v2086
      %v2287 = vpack.c.b16 %v2091, %v2087
      %v2288 = vpack.c.b16 %v2096, %v2092
      %v2289 = vpack.c.b16 %v2097, %v2093
      %v2290 = vpack.c.b16 %v2098, %v2094
      %v2291 = vpack.c.b16 %v2099, %v2095
      %v2292 = vpack.c.b16 %v2104, %v2100
      %v2293 = vpack.c.b16 %v2105, %v2101
      %v2294 = vpack.c.b16 %v2106, %v2102
      %v2295 = vpack.c.b16 %v2107, %v2103
      %v2296 = vpack.c.b16 %v2112, %v2108
      %v2297 = vpack.c.b16 %v2113, %v2109
      %v2298 = vpack.c.b16 %v2114, %v2110
      %v2299 = vpack.c.b16 %v2115, %v2111
      %v2300 = vpack.c.b16 %v2120, %v2116
      %v2301 = vpack.c.b16 %v2121, %v2117
      %v2302 = vpack.c.b16 %v2122, %v2118
      %v2303 = vpack.c.b16 %v2123, %v2119
      %v2304 = vpack.c.b16 %v2128, %v2124
      %v2305 = vpack.c.b16 %v2129, %v2125
      %v2306 = vpack.c.b16 %v2130, %v2126
      %v2307 = vpack.c.b16 %v2131, %v2127
      %v2308 = vpack.c.b16 %v2136, %v2132
      %v2309 = vpack.c.b16 %v2137, %v2133
      %v2310 = vpack.c.b16 %v2138, %v2134
      %v2311 = vpack.c.b16 %v2139, %v2135
      %v2312 = vpack.c.b16 %v2144, %v2140
      %v2313 = vpack.c.b16 %v2145, %v2141
      %v2314 = vpack.c.b16 %v2146, %v2142
      %v2315 = vpack.c.b16 %v2147, %v2143
      %v2316 = vpack.c.b16 %v2152, %v2148
      %v2317 = vpack.c.b16 %v2153, %v2149
      %v2318 = vpack.c.b16 %v2154, %v2150
      %v2319 = vpack.c.b16 %v2155, %v2151
      %v2320 = vpack.c.b16 %v2160, %v2156
      %v2321 = vpack.c.b16 %v2161, %v2157
      %v2322 = vpack.c.b16 %v2162, %v2158
      %v2323 = vpack.c.b16 %v2163, %v2159
      %v2324 = vpack.c.b16 %v2168, %v2164
      %v2325 = vpack.c.b16 %v2169, %v2165
      %v2326 = vpack.c.b16 %v2170, %v2166
      %v2327 = vpack.c.b16 %v2171, %v2167
      %v2328 = vpack.c.b16 %v2176, %v2172
      %v2329 = vpack.c.b16 %v2177, %v2173
      %v2330 = vpack.c.b16 %v2178, %v2174
      %v2331 = vpack.c.b16 %v2179, %v2175
      %v2332 = vpack.c.b16 %v2184, %v2180
      %v2333 = vpack.c.b16 %v2185, %v2181
      %v2334 = vpack.c.b16 %v2186, %v2182
      %v2335 = vpack.c.b16 %v2187, %v2183
      %v2336 = vpack.c.b16 %v2192, %v2188
      %v2337 = vpack.c.b16 %v2193, %v2189
      %v2338 = vpack.c.b16 %v2194, %v2190
      %v2339 = vpack.c.b16 %v2195, %v2191
      %v2340 = vpack.c.b16 %v2200, %v2196
      %v2341 = vpack.c.b16 %v2201, %v2197
      %v2342 = vpack.c.b16 %v2202, %v2198
      %v2343 = vpack.c.b16 %v2203, %v2199
      %v2344 = vpack.c.b16 %v2208, %v2204
      %v2345 = vpack.c.b16 %v2209, %v2205
      %v2346 = vpack.c.b16 %v2210, %v2206
      %v2347 = vpack.c.b16 %v2211, %v2207
      %v2348 = vpack.c.b16 %v2216, %v2212
      %v2349 = vpack.c.b16 %v2217, %v2213
      %v2350 = vpack.c.b16 %v2218, %v2214
      %v2351 = vpack.c.b16 %v2219, %v2215
      %v2352 = vpack.c.b16 %v2224, %v2220
      %v2353 = vpack.c.b16 %v2225, %v2221
      %v2354 = vpack.c.b16 %v2226, %v2222
      %v2355 = vpack.c.b16 %v2227, %v2223
      %2484 = vmatprep.subr.bf16.mxu0 %v2229
      %2485 = vmatpush1.bf16.msra.mxu0 %v2228
      %2486 = vmatprep.subr.bf16.mxu0 %v2233
      %2487 = vmatpush1.bf16.msra.mxu0 %v2232
      %2488 = vmatprep.subr.bf16.mxu0 %v2237
      %2489 = vmatpush1.bf16.msra.mxu0 %v2236
      %2490 = vmatprep.subr.bf16.mxu0 %v2241
      %2491 = vmatpush1.bf16.msra.mxu0 %v2240
      %2492 = vmatprep.subr.bf16.mxu0 %v2245
      %2493 = vmatpush1.bf16.msra.mxu0 %v2244
      %2494 = vmatprep.subr.bf16.mxu0 %v2249
      %2495 = vmatpush1.bf16.msra.mxu0 %v2248
      %2496 = vmatprep.subr.bf16.mxu0 %v2253
      %2497 = vmatpush1.bf16.msra.mxu0 %v2252
      %2498 = vmatprep.subr.bf16.mxu0 %v2257
      %2499 = vmatpush1.bf16.msra.mxu0 %v2256
      %2500 = vmatprep.subr.bf16.mxu0 %v2261
      %2501 = vmatpush1.bf16.msra.mxu0 %v2260
      %2502 = vmatprep.subr.bf16.mxu0 %v2265
      %2503 = vmatpush1.bf16.msra.mxu0 %v2264
      %2504 = vmatprep.subr.bf16.mxu0 %v2269
      %2505 = vmatpush1.bf16.msra.mxu0 %v2268
      %2506 = vmatprep.subr.bf16.mxu0 %v2273
      %2507 = vmatpush1.bf16.msra.mxu0 %v2272
      %2508 = vmatprep.subr.bf16.mxu0 %v2277
      %2509 = vmatpush1.bf16.msra.mxu0 %v2276
      %2510 = vmatprep.subr.bf16.mxu0 %v2281
      %2511 = vmatpush1.bf16.msra.mxu0 %v2280
      %2512 = vmatprep.subr.bf16.mxu0 %v2285
      %2513 = vmatpush1.bf16.msra.mxu0 %v2284
      %2514 = vmatprep.subr.bf16.mxu0 %v2289
      %2515 = vmatpush1.bf16.msra.mxu0 %v2288
      %2516 = vmatprep.mubr.bf16.mxu0 %v1663
      %2517 = vmatmul.mubr.bf16.gmra.mrb[0].mxu0 %v1662
      %v2518 = vpop.f32.mrb[0].mxu0
      %v2519 = vadd.f32 %v1827, %v2518
      %v2520 = vpop.f32.mrb[0].mxu0
      %v2521 = vadd.f32 %v1831, %v2520
      %v2522 = vpop.f32.mrb[0].mxu0
      %v2523 = vadd.f32 %v1827, %v2522
      %v2524 = vpop.f32.mrb[0].mxu0
      %v2525 = vadd.f32 %v1831, %v2524
      %2526 = vmatprep.mubr.bf16.mxu0 %v1667
      %2527 = vmatmul.mubr.bf16.gmra.mrb[0].mxu0 %v1666
      %v2528 = vpop.f32.mrb[0].mxu0
      %v2529 = vadd.f32 %v1827, %v2528
      %v2530 = vpop.f32.mrb[0].mxu0
      %v2531 = vadd.f32 %v1831, %v2530
      %v2532 = vpop.f32.mrb[0].mxu0
      %v2533 = vadd.f32 %v1827, %v2532
      %v2534 = vpop.f32.mrb[0].mxu0
      %v2535 = vadd.f32 %v1831, %v2534
      %2536 = vmatprep.mubr.bf16.mxu0 %v1671
      %2537 = vmatmul.mubr.bf16.gmra.mrb[0].mxu0 %v1670
      %v2538 = vpop.f32.mrb[0].mxu0
      %v2539 = vadd.f32 %v1827, %v2538
      %v2540 = vpop.f32.mrb[0].mxu0
      %v2541 = vadd.f32 %v1831, %v2540
      %v2542 = vpop.f32.mrb[0].mxu0
      %v2543 = vadd.f32 %v1827, %v2542
      %v2544 = vpop.f32.mrb[0].mxu0
      %v2545 = vadd.f32 %v1831, %v2544
      %2546 = vmatprep.mubr.bf16.mxu0 %v1675
      %2547 = vmatmul.mubr.bf16.gmra.mrb[0].mxu0 %v1674
      %v2548 = vpop.f32.mrb[0].mxu0
      %v2549 = vadd.f32 %v1827, %v2548
      %v2550 = vpop.f32.mrb[0].mxu0
      %v2551 = vadd.f32 %v1831, %v2550
      %v2552 = vpop.f32.mrb[0].mxu0
      %v2553 = vadd.f32 %v1827, %v2552
      %v2554 = vpop.f32.mrb[0].mxu0
      %v2555 = vadd.f32 %v1831, %v2554
      %2556 = vmatprep.mubr.bf16.mxu0 %v1679
      %2557 = vmatmul.mubr.bf16.gmra.mrb[0].mxu0 %v1678
      %v2558 = vpop.f32.mrb[0].mxu0
      %v2559 = vadd.f32 %v1827, %v2558
      %v2560 = vpop.f32.mrb[0].mxu0
      %v2561 = vadd.f32 %v1831, %v2560
      %v2562 = vpop.f32.mrb[0].mxu0
      %v2563 = vadd.f32 %v1827, %v2562
      %v2564 = vpop.f32.mrb[0].mxu0
      %v2565 = vadd.f32 %v1831, %v2564
      %2566 = vmatprep.mubr.bf16.mxu0 %v1683
      %2567 = vmatmul.mubr.bf16.gmra.mrb[0].mxu0 %v1682
      %v2568 = vpop.f32.mrb[0].mxu0
      %v2569 = vadd.f32 %v1827, %v2568
      %v2570 = vpop.f32.mrb[0].mxu0
      %v2571 = vadd.f32 %v1831, %v2570
      %v2572 = vpop.f32.mrb[0].mxu0
      %v2573 = vadd.f32 %v1827, %v2572
      %v2574 = vpop.f32.mrb[0].mxu0
      %v2575 = vadd.f32 %v1831, %v2574
      %2576 = vmatprep.mubr.bf16.mxu0 %v1687
      %2577 = vmatmul.mubr.bf16.gmra.mrb[0].mxu0 %v1686
      %v2578 = vpop.f32.mrb[0].mxu0
      %v2579 = vadd.f32 %v1827, %v2578
      %v2580 = vpop.f32.mrb[0].mxu0
      %v2581 = vadd.f32 %v1831, %v2580
      %v2582 = vpop.f32.mrb[0].mxu0
      %v2583 = vadd.f32 %v1827, %v2582
      %v2584 = vpop.f32.mrb[0].mxu0
      %v2585 = vadd.f32 %v1831, %v2584
      %2586 = vmatprep.mubr.bf16.mxu0 %v1691
      %2587 = vmatmul.mubr.bf16.gmra.mrb[0].mxu0 %v1690
      %v2588 = vpop.f32.mrb[0].mxu0
      %v2589 = vadd.f32 %v1827, %v2588
      %v2590 = vpop.f32.mrb[0].mxu0
      %v2591 = vadd.f32 %v1831, %v2590
      %v2592 = vpop.f32.mrb[0].mxu0
      %v2593 = vadd.f32 %v1827, %v2592
      %v2594 = vpop.f32.mrb[0].mxu0
      %v2595 = vadd.f32 %v1831, %v2594
      %2596 = vdwg.mxu0
      %2597 = vmatprep.subr.bf16.mxu0 %v2293
      %2598 = vmatpush1.bf16.msra.mxu0 %v2292
      %2599 = vmatprep.subr.bf16.mxu0 %v2297
      %2600 = vmatpush1.bf16.msra.mxu0 %v2296
      %2601 = vmatprep.subr.bf16.mxu0 %v2301
      %2602 = vmatpush1.bf16.msra.mxu0 %v2300
      %2603 = vmatprep.subr.bf16.mxu0 %v2305
      %2604 = vmatpush1.bf16.msra.mxu0 %v2304
      %2605 = vmatprep.subr.bf16.mxu0 %v2309
      %2606 = vmatpush1.bf16.msra.mxu0 %v2308
      %2607 = vmatprep.subr.bf16.mxu0 %v2313
      %2608 = vmatpush1.bf16.msra.mxu0 %v2312
      %2609 = vmatprep.subr.bf16.mxu0 %v2317
      %2610 = vmatpush1.bf16.msra.mxu0 %v2316
      %2611 = vmatprep.subr.bf16.mxu0 %v2321
      %2612 = vmatpush1.bf16.msra.mxu0 %v2320
      %2613 = vmatprep.subr.bf16.mxu0 %v2325
      %2614 = vmatpush1.bf16.msra.mxu0 %v2324
      %2615 = vmatprep.subr.bf16.mxu0 %v2329
      %2616 = vmatpush1.bf16.msra.mxu0 %v2328
      %2617 = vmatprep.subr.bf16.mxu0 %v2333
      %2618 = vmatpush1.bf16.msra.mxu0 %v2332
      %2619 = vmatprep.subr.bf16.mxu0 %v2337
      %2620 = vmatpush1.bf16.msra.mxu0 %v2336
      %2621 = vmatprep.subr.bf16.mxu0 %v2341
      %2622 = vmatpush1.bf16.msra.mxu0 %v2340
      %2623 = vmatprep.subr.bf16.mxu0 %v2345
      %2624 = vmatpush1.bf16.msra.mxu0 %v2344
      %2625 = vmatprep.subr.bf16.mxu0 %v2349
      %2626 = vmatpush1.bf16.msra.mxu0 %v2348
      %2627 = vmatprep.subr.bf16.mxu0 %v2353
      %2628 = vmatpush1.bf16.msra.mxu0 %v2352
      %2629 = vmatprep.mubr.bf16.mxu0 %v1665
      %2630 = vmatmul.mubr.bf16.gmra.mrb[0].mxu0 %v1664
      %v2631 = vpop.f32.mrb[0].mxu0
      %v2632 = vadd.f32 %v2519, %v2631
      %v2633 = vpop.f32.mrb[0].mxu0
      %v2634 = vadd.f32 %v2521, %v2633
      %v2635 = vpop.f32.mrb[0].mxu0
      %v2636 = vadd.f32 %v2523, %v2635
      %v2637 = vpop.f32.mrb[0].mxu0
      %v2638 = vadd.f32 %v2525, %v2637
      %2639 = vmatprep.mubr.bf16.mxu0 %v1669
      %2640 = vmatmul.mubr.bf16.gmra.mrb[0].mxu0 %v1668
      %v2641 = vpop.f32.mrb[0].mxu0
      %v2642 = vadd.f32 %v2529, %v2641
      %v2643 = vpop.f32.mrb[0].mxu0
      %v2644 = vadd.f32 %v2531, %v2643
      %v2645 = vpop.f32.mrb[0].mxu0
      %v2646 = vadd.f32 %v2533, %v2645
      %v2647 = vpop.f32.mrb[0].mxu0
      %v2648 = vadd.f32 %v2535, %v2647
      %2649 = vmatprep.mubr.bf16.mxu0 %v1673
      %2650 = vmatmul.mubr.bf16.gmra.mrb[0].mxu0 %v1672
      %v2651 = vpop.f32.mrb[0].mxu0
      %v2652 = vadd.f32 %v2539, %v2651
      %v2653 = vpop.f32.mrb[0].mxu0
      %v2654 = vadd.f32 %v2541, %v2653
      %v2655 = vpop.f32.mrb[0].mxu0
      %v2656 = vadd.f32 %v2543, %v2655
      %v2657 = vpop.f32.mrb[0].mxu0
      %v2658 = vadd.f32 %v2545, %v2657
      %2659 = vmatprep.mubr.bf16.mxu0 %v1677
      %2660 = vmatmul.mubr.bf16.gmra.mrb[0].mxu0 %v1676
      %v2661 = vpop.f32.mrb[0].mxu0
      %v2662 = vadd.f32 %v2549, %v2661
      %v2663 = vpop.f32.mrb[0].mxu0
      %v2664 = vadd.f32 %v2551, %v2663
      %v2665 = vpop.f32.mrb[0].mxu0
      %v2666 = vadd.f32 %v2553, %v2665
      %v2667 = vpop.f32.mrb[0].mxu0
      %v2668 = vadd.f32 %v2555, %v2667
      %2669 = vmatprep.mubr.bf16.mxu0 %v1681
      %2670 = vmatmul.mubr.bf16.gmra.mrb[0].mxu0 %v1680
      %v2671 = vpop.f32.mrb[0].mxu0
      %v2672 = vadd.f32 %v2559, %v2671
      %v2673 = vpop.f32.mrb[0].mxu0
      %v2674 = vadd.f32 %v2561, %v2673
      %v2675 = vpop.f32.mrb[0].mxu0
      %v2676 = vadd.f32 %v2563, %v2675
      %v2677 = vpop.f32.mrb[0].mxu0
      %v2678 = vadd.f32 %v2565, %v2677
      %2679 = vmatprep.mubr.bf16.mxu0 %v1685
      %2680 = vmatmul.mubr.bf16.gmra.mrb[0].mxu0 %v1684
      %v2681 = vpop.f32.mrb[0].mxu0
      %v2682 = vadd.f32 %v2569, %v2681
      %v2683 = vpop.f32.mrb[0].mxu0
      %v2684 = vadd.f32 %v2571, %v2683
      %v2685 = vpop.f32.mrb[0].mxu0
      %v2686 = vadd.f32 %v2573, %v2685
      %v2687 = vpop.f32.mrb[0].mxu0
      %v2688 = vadd.f32 %v2575, %v2687
      %2689 = vmatprep.mubr.bf16.mxu0 %v1689
      %2690 = vmatmul.mubr.bf16.gmra.mrb[0].mxu0 %v1688
      %v2691 = vpop.f32.mrb[0].mxu0
      %v2692 = vadd.f32 %v2579, %v2691
      %v2693 = vpop.f32.mrb[0].mxu0
      %v2694 = vadd.f32 %v2581, %v2693
      %v2695 = vpop.f32.mrb[0].mxu0
      %v2696 = vadd.f32 %v2583, %v2695
      %v2697 = vpop.f32.mrb[0].mxu0
      %v2698 = vadd.f32 %v2585, %v2697
      %2699 = vmatprep.mubr.bf16.mxu0 %v1693
      %2700 = vmatmul.mubr.bf16.gmra.mrb[0].mxu0 %v1692
      %v2701 = vpop.f32.mrb[0].mxu0
      %v2702 = vadd.f32 %v2589, %v2701
      %v2703 = vpop.f32.mrb[0].mxu0
      %v2704 = vadd.f32 %v2591, %v2703
      %v2705 = vpop.f32.mrb[0].mxu0
      %v2706 = vadd.f32 %v2593, %v2705
      %v2707 = vpop.f32.mrb[0].mxu0
      %v2708 = vadd.f32 %v2595, %v2707
      %2709 = vdwg.mxu0
      %2710 = vmatprep.subr.bf16.mxu0 %v2231
      %2711 = vmatpush1.bf16.msra.mxu0 %v2230
      %2712 = vmatprep.subr.bf16.mxu0 %v2235
      %2713 = vmatpush1.bf16.msra.mxu0 %v2234
      %2714 = vmatprep.subr.bf16.mxu0 %v2239
      %2715 = vmatpush1.bf16.msra.mxu0 %v2238
      %2716 = vmatprep.subr.bf16.mxu0 %v2243
      %2717 = vmatpush1.bf16.msra.mxu0 %v2242
      %2718 = vmatprep.subr.bf16.mxu0 %v2247
      %2719 = vmatpush1.bf16.msra.mxu0 %v2246
      %2720 = vmatprep.subr.bf16.mxu0 %v2251
      %2721 = vmatpush1.bf16.msra.mxu0 %v2250
      %2722 = vmatprep.subr.bf16.mxu0 %v2255
      %2723 = vmatpush1.bf16.msra.mxu0 %v2254
      %2724 = vmatprep.subr.bf16.mxu0 %v2259
      %2725 = vmatpush1.bf16.msra.mxu0 %v2258
      %2726 = vmatprep.subr.bf16.mxu0 %v2263
      %2727 = vmatpush1.bf16.msra.mxu0 %v2262
      %2728 = vmatprep.subr.bf16.mxu0 %v2267
      %2729 = vmatpush1.bf16.msra.mxu0 %v2266
      %2730 = vmatprep.subr.bf16.mxu0 %v2271
      %2731 = vmatpush1.bf16.msra.mxu0 %v2270
      %2732 = vmatprep.subr.bf16.mxu0 %v2275
      %2733 = vmatpush1.bf16.msra.mxu0 %v2274
      %2734 = vmatprep.subr.bf16.mxu0 %v2279
      %2735 = vmatpush1.bf16.msra.mxu0 %v2278
      %2736 = vmatprep.subr.bf16.mxu0 %v2283
      %2737 = vmatpush1.bf16.msra.mxu0 %v2282
      %2738 = vmatprep.subr.bf16.mxu0 %v2287
      %2739 = vmatpush1.bf16.msra.mxu0 %v2286
      %2740 = vmatprep.subr.bf16.mxu0 %v2291
      %2741 = vmatpush1.bf16.msra.mxu0 %v2290
      %2742 = vmatprep.mubr.bf16.mxu0 %v1663
      %2743 = vmatmul.mubr.bf16.gmra.mrb[0].mxu0 %v1662
      %v2744 = vpop.f32.mrb[0].mxu0
      %v2745 = vadd.f32 %v1835, %v2744
      %v2746 = vpop.f32.mrb[0].mxu0
      %v2747 = vadd.f32 %v1839, %v2746
      %v2748 = vpop.f32.mrb[0].mxu0
      %v2749 = vadd.f32 %v1835, %v2748
      %v2750 = vpop.f32.mrb[0].mxu0
      %v2751 = vadd.f32 %v1839, %v2750
      %2752 = vmatprep.mubr.bf16.mxu0 %v1667
      %2753 = vmatmul.mubr.bf16.gmra.mrb[0].mxu0 %v1666
      %v2754 = vpop.f32.mrb[0].mxu0
      %v2755 = vadd.f32 %v1835, %v2754
      %v2756 = vpop.f32.mrb[0].mxu0
      %v2757 = vadd.f32 %v1839, %v2756
      %v2758 = vpop.f32.mrb[0].mxu0
      %v2759 = vadd.f32 %v1835, %v2758
      %v2760 = vpop.f32.mrb[0].mxu0
      %v2761 = vadd.f32 %v1839, %v2760
      %2762 = vmatprep.mubr.bf16.mxu0 %v1671
      %2763 = vmatmul.mubr.bf16.gmra.mrb[0].mxu0 %v1670
      %v2764 = vpop.f32.mrb[0].mxu0
      %v2765 = vadd.f32 %v1835, %v2764
      %v2766 = vpop.f32.mrb[0].mxu0
      %v2767 = vadd.f32 %v1839, %v2766
      %v2768 = vpop.f32.mrb[0].mxu0
      %v2769 = vadd.f32 %v1835, %v2768
      %v2770 = vpop.f32.mrb[0].mxu0
      %v2771 = vadd.f32 %v1839, %v2770
      %2772 = vmatprep.mubr.bf16.mxu0 %v1675
      %2773 = vmatmul.mubr.bf16.gmra.mrb[0].mxu0 %v1674
      %v2774 = vpop.f32.mrb[0].mxu0
      %v2775 = vadd.f32 %v1835, %v2774
      %v2776 = vpop.f32.mrb[0].mxu0
      %v2777 = vadd.f32 %v1839, %v2776
      %v2778 = vpop.f32.mrb[0].mxu0
      %v2779 = vadd.f32 %v1835, %v2778
      %v2780 = vpop.f32.mrb[0].mxu0
      %v2781 = vadd.f32 %v1839, %v2780
      %2782 = vmatprep.mubr.bf16.mxu0 %v1679
      %2783 = vmatmul.mubr.bf16.gmra.mrb[0].mxu0 %v1678
      %v2784 = vpop.f32.mrb[0].mxu0
      %v2785 = vadd.f32 %v1835, %v2784
      %v2786 = vpop.f32.mrb[0].mxu0
      %v2787 = vadd.f32 %v1839, %v2786
      %v2788 = vpop.f32.mrb[0].mxu0
      %v2789 = vadd.f32 %v1835, %v2788
      %v2790 = vpop.f32.mrb[0].mxu0
      %v2791 = vadd.f32 %v1839, %v2790
      %2792 = vmatprep.mubr.bf16.mxu0 %v1683
      %2793 = vmatmul.mubr.bf16.gmra.mrb[0].mxu0 %v1682
      %v2794 = vpop.f32.mrb[0].mxu0
      %v2795 = vadd.f32 %v1835, %v2794
      %v2796 = vpop.f32.mrb[0].mxu0
      %v2797 = vadd.f32 %v1839, %v2796
      %v2798 = vpop.f32.mrb[0].mxu0
      %v2799 = vadd.f32 %v1835, %v2798
      %v2800 = vpop.f32.mrb[0].mxu0
      %v2801 = vadd.f32 %v1839, %v2800
      %2802 = vmatprep.mubr.bf16.mxu0 %v1687
      %2803 = vmatmul.mubr.bf16.gmra.mrb[0].mxu0 %v1686
      %v2804 = vpop.f32.mrb[0].mxu0
      %v2805 = vadd.f32 %v1835, %v2804
      %v2806 = vpop.f32.mrb[0].mxu0
      %v2807 = vadd.f32 %v1839, %v2806
      %v2808 = vpop.f32.mrb[0].mxu0
      %v2809 = vadd.f32 %v1835, %v2808
      %v2810 = vpop.f32.mrb[0].mxu0
      %v2811 = vadd.f32 %v1839, %v2810
      %2812 = vmatprep.mubr.bf16.mxu0 %v1691
      %2813 = vmatmul.mubr.bf16.gmra.mrb[0].mxu0 %v1690
      %v2814 = vpop.f32.mrb[0].mxu0
      %v2815 = vadd.f32 %v1835, %v2814
      %v2816 = vpop.f32.mrb[0].mxu0
      %v2817 = vadd.f32 %v1839, %v2816
      %v2818 = vpop.f32.mrb[0].mxu0
      %v2819 = vadd.f32 %v1835, %v2818
      %v2820 = vpop.f32.mrb[0].mxu0
      %v2821 = vadd.f32 %v1839, %v2820
      %2822 = vdwg.mxu0
      %2823 = vmatprep.subr.bf16.mxu0 %v2295
      %2824 = vmatpush1.bf16.msra.mxu0 %v2294
      %2825 = vmatprep.subr.bf16.mxu0 %v2299
      %2826 = vmatpush1.bf16.msra.mxu0 %v2298
      %2827 = vmatprep.subr.bf16.mxu0 %v2303
      %2828 = vmatpush1.bf16.msra.mxu0 %v2302
      %2829 = vmatprep.subr.bf16.mxu0 %v2307
      %2830 = vmatpush1.bf16.msra.mxu0 %v2306
      %2831 = vmatprep.subr.bf16.mxu0 %v2311
      %2832 = vmatpush1.bf16.msra.mxu0 %v2310
      %2833 = vmatprep.subr.bf16.mxu0 %v2315
      %2834 = vmatpush1.bf16.msra.mxu0 %v2314
      %2835 = vmatprep.subr.bf16.mxu0 %v2319
      %2836 = vmatpush1.bf16.msra.mxu0 %v2318
      %2837 = vmatprep.subr.bf16.mxu0 %v2323
      %2838 = vmatpush1.bf16.msra.mxu0 %v2322
      %2839 = vmatprep.subr.bf16.mxu0 %v2327
      %2840 = vmatpush1.bf16.msra.mxu0 %v2326
      %2841 = vmatprep.subr.bf16.mxu0 %v2331
      %2842 = vmatpush1.bf16.msra.mxu0 %v2330
      %2843 = vmatprep.subr.bf16.mxu0 %v2335
      %2844 = vmatpush1.bf16.msra.mxu0 %v2334
      %2845 = vmatprep.subr.bf16.mxu0 %v2339
      %2846 = vmatpush1.bf16.msra.mxu0 %v2338
      %2847 = vmatprep.subr.bf16.mxu0 %v2343
      %2848 = vmatpush1.bf16.msra.mxu0 %v2342
      %2849 = vmatprep.subr.bf16.mxu0 %v2347
      %2850 = vmatpush1.bf16.msra.mxu0 %v2346
      %2851 = vmatprep.subr.bf16.mxu0 %v2351
      %2852 = vmatpush1.bf16.msra.mxu0 %v2350
      %2853 = vmatprep.subr.bf16.mxu0 %v2355
      %2854 = vmatpush1.bf16.msra.mxu0 %v2354
      %2855 = vmatprep.mubr.bf16.mxu0 %v1665
      %2856 = vmatmul.mubr.bf16.gmra.mrb[0].mxu0 %v1664
      %v2857 = vpop.f32.mrb[0].mxu0
      %v2858 = vadd.f32 %v2745, %v2857
      %v2859 = vpop.f32.mrb[0].mxu0
      %v2860 = vadd.f32 %v2747, %v2859
      %v2861 = vpop.f32.mrb[0].mxu0
      %v2862 = vadd.f32 %v2749, %v2861
      %v2863 = vpop.f32.mrb[0].mxu0
      %v2864 = vadd.f32 %v2751, %v2863
      %2865 = vmatprep.mubr.bf16.mxu0 %v1669
      %2866 = vmatmul.mubr.bf16.gmra.mrb[0].mxu0 %v1668
      %v2867 = vpop.f32.mrb[0].mxu0
      %v2868 = vadd.f32 %v2755, %v2867
      %v2869 = vpop.f32.mrb[0].mxu0
      %v2870 = vadd.f32 %v2757, %v2869
      %v2871 = vpop.f32.mrb[0].mxu0
      %v2872 = vadd.f32 %v2759, %v2871
      %v2873 = vpop.f32.mrb[0].mxu0
      %v2874 = vadd.f32 %v2761, %v2873
      %2875 = vmatprep.mubr.bf16.mxu0 %v1673
      %2876 = vmatmul.mubr.bf16.gmra.mrb[0].mxu0 %v1672
      %v2877 = vpop.f32.mrb[0].mxu0
      %v2878 = vadd.f32 %v2765, %v2877
      %v2879 = vpop.f32.mrb[0].mxu0
      %v2880 = vadd.f32 %v2767, %v2879
      %v2881 = vpop.f32.mrb[0].mxu0
      %v2882 = vadd.f32 %v2769, %v2881
      %v2883 = vpop.f32.mrb[0].mxu0
      %v2884 = vadd.f32 %v2771, %v2883
      %2885 = vmatprep.mubr.bf16.mxu0 %v1677
      %2886 = vmatmul.mubr.bf16.gmra.mrb[0].mxu0 %v1676
      %v2887 = vpop.f32.mrb[0].mxu0
      %v2888 = vadd.f32 %v2775, %v2887
      %v2889 = vpop.f32.mrb[0].mxu0
      %v2890 = vadd.f32 %v2777, %v2889
      %v2891 = vpop.f32.mrb[0].mxu0
      %v2892 = vadd.f32 %v2779, %v2891
      %v2893 = vpop.f32.mrb[0].mxu0
      %v2894 = vadd.f32 %v2781, %v2893
      %2895 = vmatprep.mubr.bf16.mxu0 %v1681
      %2896 = vmatmul.mubr.bf16.gmra.mrb[0].mxu0 %v1680
      %v2897 = vpop.f32.mrb[0].mxu0
      %v2898 = vadd.f32 %v2785, %v2897
      %v2899 = vpop.f32.mrb[0].mxu0
      %v2900 = vadd.f32 %v2787, %v2899
      %v2901 = vpop.f32.mrb[0].mxu0
      %v2902 = vadd.f32 %v2789, %v2901
      %v2903 = vpop.f32.mrb[0].mxu0
      %v2904 = vadd.f32 %v2791, %v2903
      %2905 = vmatprep.mubr.bf16.mxu0 %v1685
      %2906 = vmatmul.mubr.bf16.gmra.mrb[0].mxu0 %v1684
      %v2907 = vpop.f32.mrb[0].mxu0
      %v2908 = vadd.f32 %v2795, %v2907
      %v2909 = vpop.f32.mrb[0].mxu0
      %v2910 = vadd.f32 %v2797, %v2909
      %v2911 = vpop.f32.mrb[0].mxu0
      %v2912 = vadd.f32 %v2799, %v2911
      %v2913 = vpop.f32.mrb[0].mxu0
      %v2914 = vadd.f32 %v2801, %v2913
      %2915 = vmatprep.mubr.bf16.mxu0 %v1689
      %2916 = vmatmul.mubr.bf16.gmra.mrb[0].mxu0 %v1688
      %v2917 = vpop.f32.mrb[0].mxu0
      %v2918 = vadd.f32 %v2805, %v2917
      %v2919 = vpop.f32.mrb[0].mxu0
      %v2920 = vadd.f32 %v2807, %v2919
      %v2921 = vpop.f32.mrb[0].mxu0
      %v2922 = vadd.f32 %v2809, %v2921
      %v2923 = vpop.f32.mrb[0].mxu0
      %v2924 = vadd.f32 %v2811, %v2923
      %2925 = vmatprep.mubr.bf16.mxu0 %v1693
      %2926 = vmatmul.mubr.bf16.gmra.mrb[0].mxu0 %v1692
      %v2927 = vpop.f32.mrb[0].mxu0
      %v2928 = vadd.f32 %v2815, %v2927
      %v2929 = vpop.f32.mrb[0].mxu0
      %v2930 = vadd.f32 %v2817, %v2929
      %v2931 = vpop.f32.mrb[0].mxu0
      %v2932 = vadd.f32 %v2819, %v2931
      %v2933 = vpop.f32.mrb[0].mxu0
      %v2934 = vadd.f32 %v2821, %v2933
      %2935 = vdwg.mxu0
      %v2936 = vmul.f32 %v2632, 0.01
      %v2937 = vmul.f32 %v2634, 0.01
      %v2938 = vmul.f32 %v2858, 0.01
      %v2939 = vmul.f32 %v2860, 0.01
      %v2940 = vmul.f32 %v2636, 0.01
      %v2941 = vmul.f32 %v2638, 0.01
      %v2942 = vmul.f32 %v2862, 0.01
      %v2943 = vmul.f32 %v2864, 0.01
      %v2944 = vmul.f32 %v2642, 0.01
      %v2945 = vmul.f32 %v2644, 0.01
      %v2946 = vmul.f32 %v2868, 0.01
      %v2947 = vmul.f32 %v2870, 0.01
      %v2948 = vmul.f32 %v2646, 0.01
      %v2949 = vmul.f32 %v2648, 0.01
      %v2950 = vmul.f32 %v2872, 0.01
      %v2951 = vmul.f32 %v2874, 0.01
      %v2952 = vmul.f32 %v2652, 0.01
      %v2953 = vmul.f32 %v2654, 0.01
      %v2954 = vmul.f32 %v2878, 0.01
      %v2955 = vmul.f32 %v2880, 0.01
      %v2956 = vmul.f32 %v2656, 0.01
      %v2957 = vmul.f32 %v2658, 0.01
      %v2958 = vmul.f32 %v2882, 0.01
      %v2959 = vmul.f32 %v2884, 0.01
      %v2960 = vmul.f32 %v2662, 0.01
      %v2961 = vmul.f32 %v2664, 0.01
      %v2962 = vmul.f32 %v2888, 0.01
      %v2963 = vmul.f32 %v2890, 0.01
      %v2964 = vmul.f32 %v2666, 0.01
      %v2965 = vmul.f32 %v2668, 0.01
      %v2966 = vmul.f32 %v2892, 0.01
      %v2967 = vmul.f32 %v2894, 0.01
      %v2968 = vmul.f32 %v2672, 0.01
      %v2969 = vmul.f32 %v2674, 0.01
      %v2970 = vmul.f32 %v2898, 0.01
      %v2971 = vmul.f32 %v2900, 0.01
      %v2972 = vmul.f32 %v2676, 0.01
      %v2973 = vmul.f32 %v2678, 0.01
      %v2974 = vmul.f32 %v2902, 0.01
      %v2975 = vmul.f32 %v2904, 0.01
      %v2976 = vmul.f32 %v2682, 0.01
      %v2977 = vmul.f32 %v2684, 0.01
      %v2978 = vmul.f32 %v2908, 0.01
      %v2979 = vmul.f32 %v2910, 0.01
      %v2980 = vmul.f32 %v2686, 0.01
      %v2981 = vmul.f32 %v2688, 0.01
      %v2982 = vmul.f32 %v2912, 0.01
      %v2983 = vmul.f32 %v2914, 0.01
      %v2984 = vmul.f32 %v2692, 0.01
      %v2985 = vmul.f32 %v2694, 0.01
      %v2986 = vmul.f32 %v2918, 0.01
      %v2987 = vmul.f32 %v2920, 0.01
      %v2988 = vmul.f32 %v2696, 0.01
      %v2989 = vmul.f32 %v2698, 0.01
      %v2990 = vmul.f32 %v2922, 0.01
      %v2991 = vmul.f32 %v2924, 0.01
      %v2992 = vmul.f32 %v2702, 0.01
      %v2993 = vmul.f32 %v2704, 0.01
      %v2994 = vmul.f32 %v2928, 0.01
      %v2995 = vmul.f32 %v2930, 0.01
      %v2996 = vmul.f32 %v2706, 0.01
      %v2997 = vmul.f32 %v2708, 0.01
      %v2998 = vmul.f32 %v2932, 0.01
      %v2999 = vmul.f32 %v2934, 0.01
      %v3000 = vmax.f32 %v2632, %v2936
      %v3001 = vmax.f32 %v2634, %v2937
      %v3002 = vmax.f32 %v2858, %v2938
      %v3003 = vmax.f32 %v2860, %v2939
      %v3004 = vmax.f32 %v2636, %v2940
      %v3005 = vmax.f32 %v2638, %v2941
      %v3006 = vmax.f32 %v2862, %v2942
      %v3007 = vmax.f32 %v2864, %v2943
      %v3008 = vmax.f32 %v2642, %v2944
      %v3009 = vmax.f32 %v2644, %v2945
      %v3010 = vmax.f32 %v2868, %v2946
      %v3011 = vmax.f32 %v2870, %v2947
      %v3012 = vmax.f32 %v2646, %v2948
      %v3013 = vmax.f32 %v2648, %v2949
      %v3014 = vmax.f32 %v2872, %v2950
      %v3015 = vmax.f32 %v2874, %v2951
      %v3016 = vmax.f32 %v2652, %v2952
      %v3017 = vmax.f32 %v2654, %v2953
      %v3018 = vmax.f32 %v2878, %v2954
      %v3019 = vmax.f32 %v2880, %v2955
      %v3020 = vmax.f32 %v2656, %v2956
      %v3021 = vmax.f32 %v2658, %v2957
      %v3022 = vmax.f32 %v2882, %v2958
      %v3023 = vmax.f32 %v2884, %v2959
      %v3024 = vmax.f32 %v2662, %v2960
      %v3025 = vmax.f32 %v2664, %v2961
      %v3026 = vmax.f32 %v2888, %v2962
      %v3027 = vmax.f32 %v2890, %v2963
      %v3028 = vmax.f32 %v2666, %v2964
      %v3029 = vmax.f32 %v2668, %v2965
      %v3030 = vmax.f32 %v2892, %v2966
      %v3031 = vmax.f32 %v2894, %v2967
      %v3032 = vmax.f32 %v2672, %v2968
      %v3033 = vmax.f32 %v2674, %v2969
      %v3034 = vmax.f32 %v2898, %v2970
      %v3035 = vmax.f32 %v2900, %v2971
      %v3036 = vmax.f32 %v2676, %v2972
      %v3037 = vmax.f32 %v2678, %v2973
      %v3038 = vmax.f32 %v2902, %v2974
      %v3039 = vmax.f32 %v2904, %v2975
      %v3040 = vmax.f32 %v2682, %v2976
      %v3041 = vmax.f32 %v2684, %v2977
      %v3042 = vmax.f32 %v2908, %v2978
      %v3043 = vmax.f32 %v2910, %v2979
      %v3044 = vmax.f32 %v2686, %v2980
      %v3045 = vmax.f32 %v2688, %v2981
      %v3046 = vmax.f32 %v2912, %v2982
      %v3047 = vmax.f32 %v2914, %v2983
      %v3048 = vmax.f32 %v2692, %v2984
      %v3049 = vmax.f32 %v2694, %v2985
      %v3050 = vmax.f32 %v2918, %v2986
      %v3051 = vmax.f32 %v2920, %v2987
      %v3052 = vmax.f32 %v2696, %v2988
      %v3053 = vmax.f32 %v2698, %v2989
      %v3054 = vmax.f32 %v2922, %v2990
      %v3055 = vmax.f32 %v2924, %v2991
      %v3056 = vmax.f32 %v2702, %v2992
      %v3057 = vmax.f32 %v2704, %v2993
      %v3058 = vmax.f32 %v2928, %v2994
      %v3059 = vmax.f32 %v2930, %v2995
      %v3060 = vmax.f32 %v2706, %v2996
      %v3061 = vmax.f32 %v2708, %v2997
      %v3062 = vmax.f32 %v2932, %v2998
      %v3063 = vmax.f32 %v2934, %v2999
      %v3064 = vld [vmem:[%s9] sm:$0xf]
      %v3066 = vlaneseq
      %v3067 = vshrl.u32 %v3066, 7
      %v3068 = vsub.s32 0, %v3067
      %v3069 = vrot.slane %v3064, %v3068
      %v3070 = vlaneseq
      %v3071 = vshrl.u32 %v3070, 7
      %v3072 = vsub.s32 1, %v3071
      %v3073 = vrot.slane %v3064, %v3072
      %v3074 = vlaneseq
      %v3075 = vshrl.u32 %v3074, 7
      %v3076 = vsub.s32 2, %v3075
      %v3077 = vrot.slane %v3064, %v3076
      %v3078 = vlaneseq
      %v3079 = vshrl.u32 %v3078, 7
      %v3080 = vsub.s32 3, %v3079
      %v3081 = vrot.slane %v3064, %v3080
      %v3086 = vmul.f32 %v3000, %v3069
      %v3087 = vmul.f32 %v3001, %v3073
      %v3088 = vmul.f32 %v3002, %v3077
      %v3089 = vmul.f32 %v3003, %v3081
      %v3090 = vmul.f32 %v3004, %v3069
      %v3091 = vmul.f32 %v3005, %v3073
      %v3092 = vmul.f32 %v3006, %v3077
      %v3093 = vmul.f32 %v3007, %v3081
      %v3094 = vmul.f32 %v3008, %v3069
      %v3095 = vmul.f32 %v3009, %v3073
      %v3096 = vmul.f32 %v3010, %v3077
      %v3097 = vmul.f32 %v3011, %v3081
      %v3098 = vmul.f32 %v3012, %v3069
      %v3099 = vmul.f32 %v3013, %v3073
      %v3100 = vmul.f32 %v3014, %v3077
      %v3101 = vmul.f32 %v3015, %v3081
      %v3102 = vmul.f32 %v3016, %v3069
      %v3103 = vmul.f32 %v3017, %v3073
      %v3104 = vmul.f32 %v3018, %v3077
      %v3105 = vmul.f32 %v3019, %v3081
      %v3106 = vmul.f32 %v3020, %v3069
      %v3107 = vmul.f32 %v3021, %v3073
      %v3108 = vmul.f32 %v3022, %v3077
      %v3109 = vmul.f32 %v3023, %v3081
      %v3110 = vmul.f32 %v3024, %v3069
      %v3111 = vmul.f32 %v3025, %v3073
      %v3112 = vmul.f32 %v3026, %v3077
      %v3113 = vmul.f32 %v3027, %v3081
      %v3114 = vmul.f32 %v3028, %v3069
      %v3115 = vmul.f32 %v3029, %v3073
      %v3116 = vmul.f32 %v3030, %v3077
      %v3117 = vmul.f32 %v3031, %v3081
      %v3118 = vmul.f32 %v3032, %v3069
      %v3119 = vmul.f32 %v3033, %v3073
      %v3120 = vmul.f32 %v3034, %v3077
      %v3121 = vmul.f32 %v3035, %v3081
      %v3122 = vmul.f32 %v3036, %v3069
      %v3123 = vmul.f32 %v3037, %v3073
      %v3124 = vmul.f32 %v3038, %v3077
      %v3125 = vmul.f32 %v3039, %v3081
      %v3126 = vmul.f32 %v3040, %v3069
      %v3127 = vmul.f32 %v3041, %v3073
      %v3128 = vmul.f32 %v3042, %v3077
      %v3129 = vmul.f32 %v3043, %v3081
      %v3130 = vmul.f32 %v3044, %v3069
      %v3131 = vmul.f32 %v3045, %v3073
      %v3132 = vmul.f32 %v3046, %v3077
      %v3133 = vmul.f32 %v3047, %v3081
      %v3134 = vmul.f32 %v3048, %v3069
      %v3135 = vmul.f32 %v3049, %v3073
      %v3136 = vmul.f32 %v3050, %v3077
      %v3137 = vmul.f32 %v3051, %v3081
      %v3138 = vmul.f32 %v3052, %v3069
      %v3139 = vmul.f32 %v3053, %v3073
      %v3140 = vmul.f32 %v3054, %v3077
      %v3141 = vmul.f32 %v3055, %v3081
      %v3142 = vmul.f32 %v3056, %v3069
      %v3143 = vmul.f32 %v3057, %v3073
      %v3144 = vmul.f32 %v3058, %v3077
      %v3145 = vmul.f32 %v3059, %v3081
      %v3146 = vmul.f32 %v3060, %v3069
      %v3147 = vmul.f32 %v3061, %v3073
      %v3148 = vmul.f32 %v3062, %v3077
      %v3149 = vmul.f32 %v3063, %v3081
      %v3150 = vadd.f32 %v3086, %v3087
      %v3151 = vadd.f32 %v3150, %v3088
      %v3152 = vadd.f32 %v3151, %v3089
      %3153 = vadd.xlane.f32.xlu0 %v3152
      %v3154 = vpop.xlane.xlu0 %3153
      %v3155 = vadd.f32 %v3090, %v3091
      %v3156 = vadd.f32 %v3155, %v3092
      %v3157 = vadd.f32 %v3156, %v3093
      %3158 = vadd.xlane.f32.xlu0 %v3157
      %v3159 = vpop.xlane.xlu0 %3158
      %v3160 = vadd.f32 %v3094, %v3095
      %v3161 = vadd.f32 %v3160, %v3096
      %v3162 = vadd.f32 %v3161, %v3097
      %3163 = vadd.xlane.f32.xlu0 %v3162
      %v3164 = vpop.xlane.xlu0 %3163
      %v3165 = vadd.f32 %v3098, %v3099
      %v3166 = vadd.f32 %v3165, %v3100
      %v3167 = vadd.f32 %v3166, %v3101
      %3168 = vadd.xlane.f32.xlu0 %v3167
      %v3169 = vpop.xlane.xlu0 %3168
      %v3170 = vadd.f32 %v3102, %v3103
      %v3171 = vadd.f32 %v3170, %v3104
      %v3172 = vadd.f32 %v3171, %v3105
      %3173 = vadd.xlane.f32.xlu0 %v3172
      %v3174 = vpop.xlane.xlu0 %3173
      %v3175 = vadd.f32 %v3106, %v3107
      %v3176 = vadd.f32 %v3175, %v3108
      %v3177 = vadd.f32 %v3176, %v3109
      %3178 = vadd.xlane.f32.xlu0 %v3177
      %v3179 = vpop.xlane.xlu0 %3178
      %v3180 = vadd.f32 %v3110, %v3111
      %v3181 = vadd.f32 %v3180, %v3112
      %v3182 = vadd.f32 %v3181, %v3113
      %3183 = vadd.xlane.f32.xlu0 %v3182
      %v3184 = vpop.xlane.xlu0 %3183
      %v3185 = vadd.f32 %v3114, %v3115
      %v3186 = vadd.f32 %v3185, %v3116
      %v3187 = vadd.f32 %v3186, %v3117
      %3188 = vadd.xlane.f32.xlu0 %v3187
      %v3189 = vpop.xlane.xlu0 %3188
      %v3190 = vadd.f32 %v3118, %v3119
      %v3191 = vadd.f32 %v3190, %v3120
      %v3192 = vadd.f32 %v3191, %v3121
      %3193 = vadd.xlane.f32.xlu0 %v3192
      %v3194 = vpop.xlane.xlu0 %3193
      %v3195 = vadd.f32 %v3122, %v3123
      %v3196 = vadd.f32 %v3195, %v3124
      %v3197 = vadd.f32 %v3196, %v3125
      %3198 = vadd.xlane.f32.xlu0 %v3197
      %v3199 = vpop.xlane.xlu0 %3198
      %v3200 = vadd.f32 %v3126, %v3127
      %v3201 = vadd.f32 %v3200, %v3128
      %v3202 = vadd.f32 %v3201, %v3129
      %3203 = vadd.xlane.f32.xlu0 %v3202
      %v3204 = vpop.xlane.xlu0 %3203
      %v3205 = vadd.f32 %v3130, %v3131
      %v3206 = vadd.f32 %v3205, %v3132
      %v3207 = vadd.f32 %v3206, %v3133
      %3208 = vadd.xlane.f32.xlu0 %v3207
      %v3209 = vpop.xlane.xlu0 %3208
      %v3210 = vadd.f32 %v3134, %v3135
      %v3211 = vadd.f32 %v3210, %v3136
      %v3212 = vadd.f32 %v3211, %v3137
      %3213 = vadd.xlane.f32.xlu0 %v3212
      %v3214 = vpop.xlane.xlu0 %3213
      %v3215 = vadd.f32 %v3138, %v3139
      %v3216 = vadd.f32 %v3215, %v3140
      %v3217 = vadd.f32 %v3216, %v3141
      %3218 = vadd.xlane.f32.xlu0 %v3217
      %v3219 = vpop.xlane.xlu0 %3218
      %v3220 = vadd.f32 %v3142, %v3143
      %v3221 = vadd.f32 %v3220, %v3144
      %v3222 = vadd.f32 %v3221, %v3145
      %3223 = vadd.xlane.f32.xlu0 %v3222
      %v3224 = vpop.xlane.xlu0 %3223
      %v3225 = vadd.f32 %v3146, %v3147
      %v3226 = vadd.f32 %v3225, %v3148
      %v3227 = vadd.f32 %v3226, %v3149
      %3228 = vadd.xlane.f32.xlu0 %v3227
      %v3229 = vpop.xlane.xlu0 %3228
      %s3230 = sld [smem:[#allocation2]]
      %v3231 = vstv %s3230
      %v3232 = vadd.f32 %v3154, %v3231
      %v3233 = vadd.f32 %v3159, %v3231
      %v3234 = vadd.f32 %v3164, %v3231
      %v3235 = vadd.f32 %v3169, %v3231
      %v3236 = vadd.f32 %v3174, %v3231
      %v3237 = vadd.f32 %v3179, %v3231
      %v3238 = vadd.f32 %v3184, %v3231
      %v3239 = vadd.f32 %v3189, %v3231
      %v3240 = vadd.f32 %v3194, %v3231
      %v3241 = vadd.f32 %v3199, %v3231
      %v3242 = vadd.f32 %v3204, %v3231
      %v3243 = vadd.f32 %v3209, %v3231
      %v3244 = vadd.f32 %v3214, %v3231
      %v3245 = vadd.f32 %v3219, %v3231
      %v3246 = vadd.f32 %v3224, %v3231
      %v3247 = vadd.f32 %v3229, %v3231
      %vm3248 = vcmask 7168
      %3249 = vst.msk [vmem:[%s433] sm:$0xff] %vm3248, %v3232
      %3250 = vst.msk [vmem:[%s433 + $0x8] sm:$0xff] %vm3248, %v3233
      %3251 = vst.msk [vmem:[%s433 + $0x10] sm:$0xff] %vm3248, %v3234
      %3252 = vst.msk [vmem:[%s433 + $0x18] sm:$0xff] %vm3248, %v3235
      %3253 = vst.msk [vmem:[%s433 + $0x20] sm:$0xff] %vm3248, %v3236
      %3254 = vst.msk [vmem:[%s433 + $0x28] sm:$0xff] %vm3248, %v3237
      %3255 = vst.msk [vmem:[%s433 + $0x30] sm:$0xff] %vm3248, %v3238
      %3256 = vst.msk [vmem:[%s433 + $0x38] sm:$0xff] %vm3248, %v3239
      %3257 = vst.msk [vmem:[%s433 + $0x40] sm:$0xff] %vm3248, %v3240
      %3258 = vst.msk [vmem:[%s433 + $0x48] sm:$0xff] %vm3248, %v3241
      %3259 = vst.msk [vmem:[%s433 + $0x50] sm:$0xff] %vm3248, %v3242
      %3260 = vst.msk [vmem:[%s433 + $0x58] sm:$0xff] %vm3248, %v3243
      %3261 = vst.msk [vmem:[%s433 + $0x60] sm:$0xff] %vm3248, %v3244
      %3262 = vst.msk [vmem:[%s433 + $0x68] sm:$0xff] %vm3248, %v3245
      %3263 = vst.msk [vmem:[%s433 + $0x70] sm:$0xff] %vm3248, %v3246
      %3264 = vst.msk [vmem:[%s433 + $0x78] sm:$0xff] %vm3248, %v3247
      %s3265 = smul.u32 16, %s23
      %p3266 = scmp.lt.s32.totalorder %s3265, 31
      %s3267 = scalar_select %p3266, %s3265, 31
      %s3268 = smul.addr %s3267, 8
      %s3269 = scalar_lea.vmem %s11, %s3268
      // Predicated region
      $region65: #{qnetwork_forward.1} parent=63 // pred_check
        %p3270 = pneg %p287
      $region66: #{qnetwork_forward.1} parent=63 // pred_check_branch
        %3272 = sbr.rel (%p3270) target = $region68
      $region67: #{qnetwork_forward.1} parent=63 // pred_region
        %s3273 = smul.u32 16, %s23
      $region68: #{qnetwork_forward.1} parent=63 // pred_fallthru
        _
    $region64: #{qnetwork_forward.1} parent=5 // pred_fallthru
      _
    %p3274 = scmp.le.s32.totalorder 2, %s18
    // Predicated region
    $region69: #{qnetwork_forward.1} parent=5 // pred_check
      %p3275 = pneg %p3274
    $region70: #{qnetwork_forward.1} parent=5 // pred_check_branch
      %3277 = sbr.rel (%p3275) target = $region72
    $region71: #{qnetwork_forward.1} parent=5 // pred_region
      %s3278 = ssub.s32 %s18, 2
      // Predicated region
      $region73: #{qnetwork_forward.1} parent=71 // pred_check
        %p3279 = pneg %p293
      $region74: #{qnetwork_forward.1} parent=71 // pred_check_branch
        %3281 = sbr.rel (%p3279) target = $region76
      $region75: #{qnetwork_forward.1} parent=71 // pred_region
        %s3282 = smul.u32 16, %s24
        %p3283 = scmp.lt.s32.totalorder %s3282, 31
        %s3284 = scalar_select %p3283, %s3282, 31
        %s3285 = smul.addr %s3284, 8
        %s3286 = scalar_lea.vmem %s11, %s3285
      $region76: #{qnetwork_forward.1} parent=71 // pred_fallthru
        _
    $region72: #{qnetwork_forward.1} parent=5 // pred_fallthru
      _
  $region6: #{qnetwork_forward.1} parent=0 // loop_footer
    %s22 = sadd.s32 1, %s18
  $region7: #{qnetwork_forward.1} parent=0 // loop_footer_branch
    %17 = sbr.rel target = $region3
  $region8: #{qnetwork_forward.1} parent=0 // loop_exit
    _

</llo_original>
